<compile_context>
chip_gen: v7x
topology: tpu7x:2x2x1
jax: 0.10.0
libtpu: 0.0.40
codegen_flags: <defaults>
</compile_context>

<pallas_src>
import jax
import jax.numpy as jnp
from jax.experimental import pallas as pl
from jax.experimental.pallas import tpu as pltpu


def _round_up(v, m):
    return ((v + m - 1) // m) * m


# ----------------------------------------------------------------------------
# Wrapper + kernel (kernel is a closure so trace-time constants n/tn/chunks are baked in)
# ----------------------------------------------------------------------------
def global_sa_module(x, pos, params, *, tn=512, chunk_split=None):
    """GlobalSAModule.forward in dense per-cloud layout.

    x: [B, N, F] f32 features, pos: [B, N, 3] f32 coordinates.
    Returns (pooled [B, Cout] f32, pos_out [B, 3] zeros, batch_out [B] arange).
    """
    (w1, b1), (w2, b2), (w3, b3) = params
    b, n, f = x.shape
    p = pos.shape[-1]
    h1, h2, cout = w1.shape[1], w2.shape[1], w3.shape[1]

    f_pad = _round_up(f, 128)          # 256 stays 256 (lane-aligned)
    p_pad = _round_up(p, 128)          # 3 -> 128 (one lane group)

    # Point-chunk tile along the reduction axis (multiple of 16 for bf16 sublane packing).
    tn = max(16, min(int(tn), _round_up(n, 16)))
    tn = _round_up(tn, 16)

    # Optional 2-way split of the reduction axis (second "parallel" grid axis) so the second
    # TensorCore on v7x has work when B == 1.  No effect on v5e/v6e correctness or layout.
    if chunk_split is None:
        chunk_split = 2 if (b == 1 and n > tn) else 1
    split = max(1, int(chunk_split))

    n_pad = _round_up(n, tn * split)
    chunks_per_split = n_pad // (tn * split)
    needs_mask = n_pad != n

    # ---- operand prep: no cat([x,pos]) materialization, x stays f32 (cast in-kernel) ----
    if n_pad != n or f_pad != f:
        x_in = jnp.pad(x, ((0, 0), (0, n_pad - n), (0, f_pad - f)))
    else:
        x_in = x
    pos_in = jnp.pad(pos, ((0, 0), (0, n_pad - n), (0, p_pad - p))).astype(jnp.bfloat16)

    w1a = w1[:f, :]
    if f_pad != f:
        w1a = jnp.pad(w1a, ((0, f_pad - f), (0, 0)))
    w1a = w1a.astype(jnp.bfloat16)
    w1b = jnp.pad(w1[f:f + p, :], ((0, p_pad - p), (0, 0))).astype(jnp.bfloat16)
    w2b = w2.astype(jnp.bfloat16)
    w3b = w3.astype(jnp.bfloat16)
    b1f = b1.reshape(1, h1).astype(jnp.float32)
    b2f = b2.reshape(1, h2).astype(jnp.float32)
    b3f = b3.reshape(1, cout).astype(jnp.float32)

    def kernel(x_ref, pos_ref, w1a_ref, w1b_ref, b1_ref, w2_ref, b2_ref, w3_ref, b3_ref, o_ref):
        """x_ref:[TN,F_pad] f32  pos_ref:[TN,128] bf16  o_ref:[1,Cout] f32 (resident over chunk axis)."""
        ci = pl.program_id(2)

        @pl.when(ci == 0)
        def _init():
            o_ref[...] = jnp.full(o_ref.shape, -3.0e38, dtype=o_ref.dtype)

        xb = x_ref[...].astype(jnp.bfloat16)                      # [TN, F_pad]
        pb = pos_ref[...]                                          # [TN, 128]

        # cat([x, pos]) @ W1  ==  x @ W1a + pos @ W1b   (f32 MXU accumulation)
        h = jnp.dot(xb, w1a_ref[...], preferred_element_type=jnp.float32)
        h = h + jnp.dot(pb, w1b_ref[...], preferred_element_type=jnp.float32)
        h = h + b1_ref[...]
        h = jnp.maximum(h, 0.0).astype(jnp.bfloat16)
        h = jnp.dot(h, w2_ref[...], preferred_element_type=jnp.float32) + b2_ref[...]
        h = jnp.maximum(h, 0.0).astype(jnp.bfloat16)
        h = jnp.dot(h, w3_ref[...], preferred_element_type=jnp.float32) + b3_ref[...]  # [TN,Cout] f32

        if needs_mask:
            # In-kernel row validity (no lane-width-1 mask input stream); f32-safe sentinel.
            row0 = (pl.program_id(1) * chunks_per_split + ci) * tn
            rows = row0 + jax.lax.broadcasted_iota(jnp.int32, (tn, 1), 0)
            h = jnp.where(rows < n, h, -3.0e38)

        cur = jnp.max(h, axis=0, keepdims=True)                    # [1, Cout]
        o_ref[...] = jnp.maximum(o_ref[...], cur)

    flops = int(2 * b * n_pad * (f_pad * h1 + p_pad * h1 + h1 * h2 + h2 * cout))
    bytes_accessed = int(
        x_in.size * 4 + pos_in.size * 2
        + (w1a.size + w1b.size + w2b.size + w3b.size) * 2
        + (b1f.size + b2f.size + b3f.size) * 4
        + b * split * cout * 4)

    pooled = pl.pallas_call(
        kernel,
        out_shape=jax.ShapeDtypeStruct((b * split, 1, cout), jnp.float32),
        grid_spec=pltpu.PrefetchScalarGridSpec(
            num_scalar_prefetch=0,
            grid=(b, split, chunks_per_split),
            in_specs=[
                pl.BlockSpec((None, tn, f_pad),
                             lambda bi, si, ci: (bi, si * chunks_per_split + ci, 0)),
                pl.BlockSpec((None, tn, p_pad),
                             lambda bi, si, ci: (bi, si * chunks_per_split + ci, 0)),
                pl.BlockSpec(w1a.shape, lambda bi, si, ci: (0, 0)),
                pl.BlockSpec(w1b.shape, lambda bi, si, ci: (0, 0)),
                pl.BlockSpec(b1f.shape, lambda bi, si, ci: (0, 0)),
                pl.BlockSpec(w2b.shape, lambda bi, si, ci: (0, 0)),
                pl.BlockSpec(b2f.shape, lambda bi, si, ci: (0, 0)),
                pl.BlockSpec(w3b.shape, lambda bi, si, ci: (0, 0)),
                pl.BlockSpec(b3f.shape, lambda bi, si, ci: (0, 0)),
            ],
            out_specs=pl.BlockSpec((None, 1, cout),
                                   lambda bi, si, ci: (bi * split + si, 0, 0)),
        ),
        compiler_params=pltpu.CompilerParams(
            dimension_semantics=("parallel", "parallel", "arbitrary"),
            vmem_limit_bytes=32 * 1024 * 1024,
        ),
        cost_estimate=pl.CostEstimate(
            flops=flops, transcendentals=0, bytes_accessed=bytes_accessed),
    )(x_in, pos_in, w1a, w1b, b1f, w2b, b2f, w3b, b3f)

    # Collapse the (optional) 2-way split of the reduction axis; no-op cost when split == 1.
    pooled = jnp.max(pooled.reshape(b, split, cout), axis=1)       # [B, Cout]
    pos_out = jnp.zeros((b, 3), pos.dtype)
    batch_out = jnp.arange(b, dtype=jnp.int32)
    return pooled, pos_out, batch_out


# ----------------------------------------------------------------------------
# Pure-JAX reference (f32) for verification
# ----------------------------------------------------------------------------
def global_sa_reference(x, pos, params):
    (w1, b1), (w2, b2), (w3, b3) = params
    h = jnp.concatenate([x, pos], axis=-1)
    h = jax.nn.relu(jnp.einsum("bnc,cd->bnd", h, w1) + b1)
    h = jax.nn.relu(jnp.einsum("bnc,cd->bnd", h, w2) + b2)
    h = jnp.einsum("bnc,cd->bnd", h, w3) + b3
    return jnp.max(h, axis=1)


# ----------------------------------------------------------------------------
# Deterministic parameter init (PyTorch Linear default: U(-1/sqrt(cin), 1/sqrt(cin)))
# ----------------------------------------------------------------------------
def init_linear(key, cin, cout):
    kw, kb = jax.random.split(key)
    bound = 1.0 / (cin ** 0.5)
    w = jax.random.uniform(kw, (cin, cout), jnp.float32, -bound, bound)
    b = jax.random.uniform(kb, (1, cout), jnp.float32, -bound, bound)
    return w, b


def init_mlp(key, dims):
    keys = jax.random.split(key, len(dims) - 1)
    return tuple(init_linear(k, dims[i], dims[i + 1]) for i, k in enumerate(keys))


# ----------------------------------------------------------------------------
if __name__ == "__main__":
    key = jax.random.PRNGKey(0)
    # GlobalSAModule in pointnet2_classification wraps MLP([256 + 3, 256, 512, 1024]).
    # N=72 (non-multiple of the tile) + tn=32 + chunk_split=2 exercises the multi-chunk
    # running-max, the in-kernel tail masking (incl. an all-padded chunk), and the split axis.
    B, N, F_DIM = 2, 72, 256

    k_x, k_pos, k_p = jax.random.split(key, 3)
    x = jax.random.normal(k_x, (B, N, F_DIM), jnp.float32)
    pos = jax.random.uniform(k_pos, (B, N, 3), jnp.float32)
    params = init_mlp(k_p, [F_DIM + 3, 256, 512, 1024])

    fwd = jax.jit(lambda x_, pos_, params_: global_sa_module(x_, pos_, params_, tn=32, chunk_split=2))
    pooled, pos_out, batch_out = fwd(x, pos, params)
    pooled = jax.block_until_ready(pooled)

    assert pooled.shape == (B, 1024), pooled.shape
    assert pos_out.shape == (B, 3) and batch_out.shape == (B,)
    assert bool(jnp.all(jnp.isfinite(pooled)))
    assert bool(jnp.all(pos_out == 0.0))
    assert bool(jnp.all(batch_out == jnp.arange(B)))

    ref = global_sa_reference(x, pos, params)
    assert bool(jnp.allclose(pooled, ref, rtol=5e-2, atol=5e-2)), \
        float(jnp.max(jnp.abs(pooled - ref)))

    print("KERNEL_OK")
</pallas_src>

<mosaic_0001>
module attributes {stable_mosaic.version = 11 : i64} {
  func.func @kernel(%arg0: i32, %arg1: i32, %arg2: i32, %arg3: memref<1x32x256xf32, #tpu.memory_space<vmem>>, %arg4: memref<1x32x128xbf16, #tpu.memory_space<vmem>>, %arg5: memref<256x256xbf16, #tpu.memory_space<vmem>>, %arg6: memref<128x256xbf16, #tpu.memory_space<vmem>>, %arg7: memref<1x256xf32, #tpu.memory_space<vmem>>, %arg8: memref<256x512xbf16, #tpu.memory_space<vmem>>, %arg9: memref<1x512xf32, #tpu.memory_space<vmem>>, %arg10: memref<512x1024xbf16, #tpu.memory_space<vmem>>, %arg11: memref<1x1024xf32, #tpu.memory_space<vmem>>, %arg12: memref<1x1x1024xf32, #tpu.memory_space<vmem>>) attributes {dimension_semantics = [#tpu.dimension_semantics<parallel>, #tpu.dimension_semantics<parallel>, #tpu.dimension_semantics<arbitrary>], iteration_bounds = array<i64: 2, 2, 2>, scalar_prefetch = 0 : i64, scratch_operands = 0 : i64, tpu.core_type = #tpu.core_type<tc>, window_params = [{transform_indices = @transform_0, window_bounds = array<i64: 1, 32, 256>}, {transform_indices = @transform_1, window_bounds = array<i64: 1, 32, 128>}, {pipeline_mode = #tpu.pipeline_mode<synchronous>, transform_indices = @transform_2, window_bounds = array<i64: 256, 256>}, {pipeline_mode = #tpu.pipeline_mode<synchronous>, transform_indices = @transform_3, window_bounds = array<i64: 128, 256>}, {pipeline_mode = #tpu.pipeline_mode<synchronous>, transform_indices = @transform_4, window_bounds = array<i64: 1, 256>}, {pipeline_mode = #tpu.pipeline_mode<synchronous>, transform_indices = @transform_5, window_bounds = array<i64: 256, 512>}, {pipeline_mode = #tpu.pipeline_mode<synchronous>, transform_indices = @transform_6, window_bounds = array<i64: 1, 512>}, {pipeline_mode = #tpu.pipeline_mode<synchronous>, transform_indices = @transform_7, window_bounds = array<i64: 512, 1024>}, {pipeline_mode = #tpu.pipeline_mode<synchronous>, transform_indices = @transform_8, window_bounds = array<i64: 1, 1024>}, {transform_indices = @transform_9, window_bounds = array<i64: 1, 1, 1024>}]} {
    %c0_i32 = arith.constant 0 : i32
    %0 = arith.cmpi eq, %arg2, %c0_i32 : i32
    %1 = arith.extui %0 : i1 to i32
    %c0_i32_0 = arith.constant 0 : i32
    %2 = arith.cmpi ne, %1, %c0_i32_0 : i32
    scf.if %2 {
      %cst_33 = arith.constant -3.000000e+38 : f32
      %52 = vector.broadcast %cst_33 : f32 to vector<1x1024xf32>
      %c0_34 = arith.constant 0 : index
      %c0_35 = arith.constant 0 : index
      %c0_36 = arith.constant 0 : index
      %53 = vector.load %arg12[%c0_34, %c0_35, %c0_36] : memref<1x1x1024xf32, #tpu.memory_space<vmem>>, vector<1x1x1024xf32>
      %54 = vector.shape_cast %53 : vector<1x1x1024xf32> to vector<1x1024xf32>
      %55 = vector.shape_cast %52 : vector<1x1024xf32> to vector<1x1x1024xf32>
      tpu.vector_store %arg12[%c0_34, %c0_35, %c0_36], %55 {strides = array<i32>} : memref<1x1x1024xf32, #tpu.memory_space<vmem>>, vector<1x1x1024xf32>,
    } else {
    }
    %c0 = arith.constant 0 : index
    %c0_1 = arith.constant 0 : index
    %c0_2 = arith.constant 0 : index
    %3 = vector.load %arg3[%c0, %c0_1, %c0_2] : memref<1x32x256xf32, #tpu.memory_space<vmem>>, vector<1x32x256xf32>
    %4 = vector.shape_cast %3 : vector<1x32x256xf32> to vector<32x256xf32>
    %5 = arith.truncf %4 : vector<32x256xf32> to vector<32x256xbf16>
    %c0_3 = arith.constant 0 : index
    %c0_4 = arith.constant 0 : index
    %c0_5 = arith.constant 0 : index
    %6 = vector.load %arg4[%c0_3, %c0_4, %c0_5] : memref<1x32x128xbf16, #tpu.memory_space<vmem>>, vector<1x32x128xbf16>
    %7 = vector.shape_cast %6 : vector<1x32x128xbf16> to vector<32x128xbf16>
    %c0_6 = arith.constant 0 : index
    %c0_7 = arith.constant 0 : index
    %8 = vector.load %arg5[%c0_6, %c0_7] : memref<256x256xbf16, #tpu.memory_space<vmem>>, vector<256x256xbf16>
    %cst = arith.constant dense<0.000000e+00> : vector<32x256xf32>
    %9 = tpu.matmul %5, %8, %cst {dimension_numbers = #tpu.dot_dimension_numbers<[1], [0], [0], [1], [0, 0, 1, 1], [], []>} : vector<32x256xbf16>, vector<256x256xbf16>, vector<32x256xf32> -> vector<32x256xf32>
    %c0_8 = arith.constant 0 : index
    %c0_9 = arith.constant 0 : index
    %10 = vector.load %arg6[%c0_8, %c0_9] : memref<128x256xbf16, #tpu.memory_space<vmem>>, vector<128x256xbf16>
    %cst_10 = arith.constant dense<0.000000e+00> : vector<32x256xf32>
    %11 = tpu.matmul %7, %10, %cst_10 {dimension_numbers = #tpu.dot_dimension_numbers<[1], [0], [0], [1], [0, 0, 1, 1], [], []>} : vector<32x128xbf16>, vector<128x256xbf16>, vector<32x256xf32> -> vector<32x256xf32>
    %12 = arith.addf %9, %11 : vector<32x256xf32>
    %c0_11 = arith.constant 0 : index
    %c0_12 = arith.constant 0 : index
    %13 = vector.load %arg7[%c0_11, %c0_12] : memref<1x256xf32, #tpu.memory_space<vmem>>, vector<1x256xf32>
    %14 = vector.broadcast %13 : vector<1x256xf32> to vector<32x256xf32>
    %15 = arith.addf %12, %14 : vector<32x256xf32>
    %cst_13 = arith.constant 0.000000e+00 : f32
    %16 = vector.broadcast %cst_13 : f32 to vector<32x256xf32>
    %17 = arith.maximumf %15, %16 : vector<32x256xf32>
    %18 = arith.truncf %17 : vector<32x256xf32> to vector<32x256xbf16>
    %c0_14 = arith.constant 0 : index
    %c0_15 = arith.constant 0 : index
    %19 = vector.load %arg8[%c0_14, %c0_15] : memref<256x512xbf16, #tpu.memory_space<vmem>>, vector<256x512xbf16>
    %cst_16 = arith.constant dense<0.000000e+00> : vector<32x512xf32>
    %20 = tpu.matmul %18, %19, %cst_16 {dimension_numbers = #tpu.dot_dimension_numbers<[1], [0], [0], [1], [0, 0, 1, 1], [], []>} : vector<32x256xbf16>, vector<256x512xbf16>, vector<32x512xf32> -> vector<32x512xf32>
    %c0_17 = arith.constant 0 : index
    %c0_18 = arith.constant 0 : index
    %21 = vector.load %arg9[%c0_17, %c0_18] : memref<1x512xf32, #tpu.memory_space<vmem>>, vector<1x512xf32>
    %22 = vector.broadcast %21 : vector<1x512xf32> to vector<32x512xf32>
    %23 = arith.addf %20, %22 : vector<32x512xf32>
    %cst_19 = arith.constant 0.000000e+00 : f32
    %24 = vector.broadcast %cst_19 : f32 to vector<32x512xf32>
    %25 = arith.maximumf %23, %24 : vector<32x512xf32>
    %26 = arith.truncf %25 : vector<32x512xf32> to vector<32x512xbf16>
    %c0_20 = arith.constant 0 : index
    %c0_21 = arith.constant 0 : index
    %27 = vector.load %arg10[%c0_20, %c0_21] : memref<512x1024xbf16, #tpu.memory_space<vmem>>, vector<512x1024xbf16>
    %cst_22 = arith.constant dense<0.000000e+00> : vector<32x1024xf32>
    %28 = tpu.matmul %26, %27, %cst_22 {dimension_numbers = #tpu.dot_dimension_numbers<[1], [0], [0], [1], [0, 0, 1, 1], [], []>} : vector<32x512xbf16>, vector<512x1024xbf16>, vector<32x1024xf32> -> vector<32x1024xf32>
    %c0_23 = arith.constant 0 : index
    %c0_24 = arith.constant 0 : index
    %29 = vector.load %arg11[%c0_23, %c0_24] : memref<1x1024xf32, #tpu.memory_space<vmem>>, vector<1x1024xf32>
    %30 = vector.broadcast %29 : vector<1x1024xf32> to vector<32x1024xf32>
    %31 = arith.addf %28, %30 : vector<32x1024xf32>
    %c2_i32 = arith.constant 2 : i32
    %32 = arith.muli %arg1, %c2_i32 : i32
    %33 = arith.addi %32, %arg2 : i32
    %c32_i32 = arith.constant 32 : i32
    %34 = arith.muli %33, %c32_i32 : i32
    %35 = tpu.iota {dimensions = array<i32: 0>} : vector<32x1xi32>
    %36 = vector.broadcast %34 : i32 to vector<32x1xi32>
    %37 = arith.addi %36, %35 : vector<32x1xi32>
    %c72_i32 = arith.constant 72 : i32
    %38 = vector.broadcast %c72_i32 : i32 to vector<32x1xi32>
    %39 = arith.cmpi slt, %37, %38 : vector<32x1xi32>
    %cst_25 = arith.constant -3.000000e+38 : f32
    %40 = vector.shape_cast %39 : vector<32x1xi1> to vector<32x1xi1>
    %41 = vector.broadcast %40 : vector<32x1xi1> to vector<32x1024xi1>
    %42 = vector.broadcast %cst_25 : f32 to vector<32x1024xf32>
    %43 = arith.select %41, %31, %42 : vector<32x1024xi1>, vector<32x1024xf32>
    %cst_26 = arith.constant dense<0xFF800000> : vector<1024xf32>
    %44 = vector.multi_reduction <maximumf>, %43, %cst_26 [0] : vector<32x1024xf32> to vector<1024xf32>
    %45 = vector.shape_cast %44 : vector<1024xf32> to vector<1x1024xf32>
    %c0_27 = arith.constant 0 : index
    %c0_28 = arith.constant 0 : index
    %c0_29 = arith.constant 0 : index
    %46 = vector.load %arg12[%c0_27, %c0_28, %c0_29] : memref<1x1x1024xf32, #tpu.memory_space<vmem>>, vector<1x1x1024xf32>
    %47 = vector.shape_cast %46 : vector<1x1x1024xf32> to vector<1x1024xf32>
    %48 = arith.maximumf %47, %45 : vector<1x1024xf32>
    %c0_30 = arith.constant 0 : index
    %c0_31 = arith.constant 0 : index
    %c0_32 = arith.constant 0 : index
    %49 = vector.load %arg12[%c0_30, %c0_31, %c0_32] : memref<1x1x1024xf32, #tpu.memory_space<vmem>>, vector<1x1x1024xf32>
    %50 = vector.shape_cast %49 : vector<1x1x1024xf32> to vector<1x1024xf32>
    %51 = vector.shape_cast %48 : vector<1x1024xf32> to vector<1x1x1024xf32>
    tpu.vector_store %arg12[%c0_30, %c0_31, %c0_32], %51 {strides = array<i32>} : memref<1x1x1024xf32, #tpu.memory_space<vmem>>, vector<1x1x1024xf32>,
    return
  }
  func.func @transform_0(%arg0: i32, %arg1: i32, %arg2: i32) -> (i32, i32, i32) {
    %c2_i32 = arith.constant 2 : i32
    %0 = arith.muli %arg1, %c2_i32 : i32
    %1 = arith.addi %0, %arg2 : i32
    %c0_i32 = arith.constant 0 : i32
    %c0_i32_0 = arith.constant 0 : i32
    return %arg0, %1, %c0_i32 : i32, i32, i32
  }
  func.func @transform_1(%arg0: i32, %arg1: i32, %arg2: i32) -> (i32, i32, i32) {
    %c2_i32 = arith.constant 2 : i32
    %0 = arith.muli %arg1, %c2_i32 : i32
    %1 = arith.addi %0, %arg2 : i32
    %c0_i32 = arith.constant 0 : i32
    %c0_i32_0 = arith.constant 0 : i32
    return %arg0, %1, %c0_i32 : i32, i32, i32
  }
  func.func @transform_2(%arg0: i32, %arg1: i32, %arg2: i32) -> (i32, i32) {
    %c0_i32 = arith.constant 0 : i32
    %c0_i32_0 = arith.constant 0 : i32
    %c0_i32_1 = arith.constant 0 : i32
    return %c0_i32, %c0_i32_0 : i32, i32
  }
  func.func @transform_3(%arg0: i32, %arg1: i32, %arg2: i32) -> (i32, i32) {
    %c0_i32 = arith.constant 0 : i32
    %c0_i32_0 = arith.constant 0 : i32
    %c0_i32_1 = arith.constant 0 : i32
    return %c0_i32, %c0_i32_0 : i32, i32
  }
  func.func @transform_4(%arg0: i32, %arg1: i32, %arg2: i32) -> (i32, i32) {
    %c0_i32 = arith.constant 0 : i32
    %c0_i32_0 = arith.constant 0 : i32
    %c0_i32_1 = arith.constant 0 : i32
    return %c0_i32, %c0_i32_0 : i32, i32
  }
  func.func @transform_5(%arg0: i32, %arg1: i32, %arg2: i32) -> (i32, i32) {
    %c0_i32 = arith.constant 0 : i32
    %c0_i32_0 = arith.constant 0 : i32
    %c0_i32_1 = arith.constant 0 : i32
    return %c0_i32, %c0_i32_0 : i32, i32
  }
  func.func @transform_6(%arg0: i32, %arg1: i32, %arg2: i32) -> (i32, i32) {
    %c0_i32 = arith.constant 0 : i32
    %c0_i32_0 = arith.constant 0 : i32
    %c0_i32_1 = arith.constant 0 : i32
    return %c0_i32, %c0_i32_0 : i32, i32
  }
  func.func @transform_7(%arg0: i32, %arg1: i32, %arg2: i32) -> (i32, i32) {
    %c0_i32 = arith.constant 0 : i32
    %c0_i32_0 = arith.constant 0 : i32
    %c0_i32_1 = arith.constant 0 : i32
    return %c0_i32, %c0_i32_0 : i32, i32
  }
  func.func @transform_8(%arg0: i32, %arg1: i32, %arg2: i32) -> (i32, i32) {
    %c0_i32 = arith.constant 0 : i32
    %c0_i32_0 = arith.constant 0 : i32
    %c0_i32_1 = arith.constant 0 : i32
    return %c0_i32, %c0_i32_0 : i32, i32
  }
  func.func @transform_9(%arg0: i32, %arg1: i32, %arg2: i32) -> (i32, i32, i32) {
    %c2_i32 = arith.constant 2 : i32
    %0 = arith.muli %arg0, %c2_i32 : i32
    %1 = arith.addi %0, %arg1 : i32
    %c0_i32 = arith.constant 0 : i32
    %c0_i32_0 = arith.constant 0 : i32
    %c0_i32_1 = arith.constant 0 : i32
    return %1, %c0_i32, %c0_i32_0 : i32, i32, i32
  }
}

</mosaic_0001>

<llo_original>
// kernel: _lambda_.1
$region0: #{_lambda_.1}
  #allocation0 [shape = 'u32[]', space=smem, size = 0x4, offset = 0x4, fixed_abs, tag = 'smem constant byte address 0x4 - core index']
  #allocation1 [shape = 'u32[144,128]{1,0:T(1,128)}', space=vmem, size = 0x12000, scoped, tag = 'internal scratch']
  %s0 = inlined_call_operand.vmem [shape: f32[2,128,256], index: 0, kind: input, shape index: {}]
  %s1 = inlined_call_operand.vmem [shape: bf16[2,128,128], index: 1, kind: input, shape index: {}]
  %s2 = inlined_call_operand.vmem [shape: bf16[256,256], index: 2, kind: input, shape index: {}]
  %s3 = inlined_call_operand.vmem [shape: bf16[128,256], index: 3, kind: input, shape index: {}]
  %s4 = inlined_call_operand.vmem [shape: f32[1,256], index: 4, kind: input, shape index: {}]
  %s5 = inlined_call_operand.vmem [shape: bf16[256,512], index: 5, kind: input, shape index: {}]
  %s6 = inlined_call_operand.vmem [shape: f32[1,512], index: 6, kind: input, shape index: {}]
  %s7 = inlined_call_operand.vmem [shape: bf16[512,1024], index: 7, kind: input, shape index: {}]
  %s8 = inlined_call_operand.vmem [shape: f32[1,1024], index: 8, kind: input, shape index: {}]
  %s9 = inlined_call_operand.vmem [shape: f32[4,1,1024], index: 9, kind: output, shape index: {}]
  %s10 = sld [smem:[#allocation0]]
  $region73: #{_lambda_.1} parent=0
    _
  %s12 = ssub.s32 1, %s10
  %s13 = scalar_select 0, %s12, %s10
  loop: start=0, step=1, limit=10
  $region2: #{_lambda_.1} parent=0 // loop_pre_header
    _
  $region3: #{_lambda_.1} parent=0 // loop_header
    %s15 = sphi 0, %s19
    %p16 = scmp.ge.s32.totalorder %s15, 10
    %s22 = sphi 0, %s41
    %s23 = sphi 0, %s37
    %s24 = sphi 0, %s33
    %s25 = sphi 0, %s22
    %s26 = sphi 0, %s23
    %s27 = sphi 0, %s24
    %s28 = sphi 0, %s25
    %s29 = sphi 0, %s26
    %s30 = sphi 0, %s27
    %s50 = sphi 0, %s52
    %s53 = sphi 0, %s50
    %s54 = sphi 0, %s53
    %s70 = sphi 0, %s54
    %s82 = sphi 0, %s84
    %s85 = sphi 0, %s82
    %s86 = sphi 0, %s85
    %s102 = sphi 0, %s86
    %s106 = sphi 0, %s106
    %s108 = sphi 0, %s106
    %s109 = sphi 0, %s108
    %s123 = sphi 0, %s109
    %s127 = sphi 0, %s127
    %s129 = sphi 0, %s127
    %s130 = sphi 0, %s129
    %s144 = sphi 0, %s130
    %s148 = sphi 0, %s148
    %s150 = sphi 0, %s148
    %s151 = sphi 0, %s150
    %s165 = sphi 0, %s151
    %s169 = sphi 0, %s169
    %s171 = sphi 0, %s169
    %s172 = sphi 0, %s171
    %s186 = sphi 0, %s172
    %s190 = sphi 0, %s190
    %s192 = sphi 0, %s190
    %s193 = sphi 0, %s192
    %s207 = sphi 0, %s193
    %s211 = sphi 0, %s211
    %s213 = sphi 0, %s211
    %s214 = sphi 0, %s213
    %s228 = sphi 0, %s214
    %s232 = sphi 0, %s232
    %s234 = sphi 0, %s232
    %s235 = sphi 0, %s234
    %s249 = sphi 0, %s235
    %s259 = sphi 0, %s261
    %s262 = sphi 0, %s259
    %s263 = sphi 0, %s262
    %s279 = sphi 0, %s263
  $region4: #{_lambda_.1} parent=0 // loop_header_branch
    %18 = sbr.rel (%p16) target = $region8
  $region5: #{_lambda_.1} parent=0 // loop_body
    %s20 = ssub.s32 %s15, 1
    %s21 = ssub.s32 %s15, 2
    %s31 = sadd.s32 1, %s24
    %p32 = scmp.ge.s32.totalorder %s31, 2
    %s33 = scalar_select %p32, 0, %s31
    %s34 = sadd.s32 1, %s23
    %s35 = scalar_select %p32, %s34, %s23
    %p36 = scmp.ge.s32.totalorder %s35, 2
    %s37 = scalar_select %p36, 0, %s35
    %s38 = sadd.s32 1, %s22
    %s39 = scalar_select %p36, %s38, %s22
    %p40 = scmp.ge.s32.totalorder %s39, 2
    %s41 = scalar_select %p40, 0, %s39
    %s42 = smul.u32 %s23, 2
    %s43 = sadd.s32 %s42, %s24
    %s44 = smul.u32 %s37, 2
    %s45 = sadd.s32 %s44, %s33
    %s46 = ssub.s32 %s22, %s41
    %s47 = ssub.s32 %s43, %s45
    %s48 = sor.u32 %s46, %s47
    %p49 = scmp.eq.s32.totalorder %s48, 0
    %s51 = sadd.s32 %s50, 1
    %s52 = scalar_select %p49, %s50, %s51
    %p55 = pneg %p49
    %p56 = scmp.eq.s32.totalorder %s15, 7
    %p57 = por %p55, %p56
    %p58 = scmp.ne.s32.totalorder %s50, %s53
    %p59 = scmp.eq.s32.totalorder %s15, 0
    %p60 = por %p58, %p59
    %p61 = scmp.ne.s32.totalorder %s50, %s53
    %p62 = scmp.eq.s32.totalorder %s20, 7
    %p63 = por %p61, %p62
    %p64 = scmp.ne.s32.totalorder %s53, %s54
    %p65 = scmp.eq.s32.totalorder %s20, 0
    %p66 = por %p64, %p65
    %p67 = scmp.ne.s32.totalorder %s53, %s54
    %p68 = scmp.eq.s32.totalorder %s21, 7
    %p69 = por %p67, %p68
    %p71 = scmp.ne.s32.totalorder %s54, %s70
    %p72 = scmp.eq.s32.totalorder %s21, 0
    %p73 = por %p71, %p72
    %s74 = smul.u32 %s23, 2
    %s75 = sadd.s32 %s74, %s24
    %s76 = smul.u32 %s37, 2
    %s77 = sadd.s32 %s76, %s33
    %s78 = ssub.s32 %s22, %s41
    %s79 = ssub.s32 %s75, %s77
    %s80 = sor.u32 %s78, %s79
    %p81 = scmp.eq.s32.totalorder %s80, 0
    %s83 = sadd.s32 %s82, 1
    %s84 = scalar_select %p81, %s82, %s83
    %p87 = pneg %p81
    %p88 = scmp.eq.s32.totalorder %s15, 7
    %p89 = por %p87, %p88
    %p90 = scmp.ne.s32.totalorder %s82, %s85
    %p91 = scmp.eq.s32.totalorder %s15, 0
    %p92 = por %p90, %p91
    %p93 = scmp.ne.s32.totalorder %s82, %s85
    %p94 = scmp.eq.s32.totalorder %s20, 7
    %p95 = por %p93, %p94
    %p96 = scmp.ne.s32.totalorder %s85, %s86
    %p97 = scmp.eq.s32.totalorder %s20, 0
    %p98 = por %p96, %p97
    %p99 = scmp.ne.s32.totalorder %s85, %s86
    %p100 = scmp.eq.s32.totalorder %s21, 7
    %p101 = por %p99, %p100
    %p103 = scmp.ne.s32.totalorder %s86, %s102
    %p104 = scmp.eq.s32.totalorder %s21, 0
    %p105 = por %p103, %p104
    %s107 = sadd.s32 %s106, 1
    %p110 = scmp.eq.s32.totalorder %s15, 7
    %p111 = scmp.ne.s32.totalorder %s106, %s108
    %p112 = scmp.eq.s32.totalorder %s15, 0
    %p113 = por %p111, %p112
    %p114 = scmp.ne.s32.totalorder %s106, %s108
    %p115 = scmp.eq.s32.totalorder %s20, 7
    %p116 = por %p114, %p115
    %p117 = scmp.ne.s32.totalorder %s108, %s109
    %p118 = scmp.eq.s32.totalorder %s20, 0
    %p119 = por %p117, %p118
    %p120 = scmp.ne.s32.totalorder %s108, %s109
    %p121 = scmp.eq.s32.totalorder %s21, 7
    %p122 = por %p120, %p121
    %p124 = scmp.ne.s32.totalorder %s109, %s123
    %p125 = scmp.eq.s32.totalorder %s21, 0
    %p126 = por %p124, %p125
    %s128 = sadd.s32 %s127, 1
    %p131 = scmp.eq.s32.totalorder %s15, 7
    %p132 = scmp.ne.s32.totalorder %s127, %s129
    %p133 = scmp.eq.s32.totalorder %s15, 0
    %p134 = por %p132, %p133
    %p135 = scmp.ne.s32.totalorder %s127, %s129
    %p136 = scmp.eq.s32.totalorder %s20, 7
    %p137 = por %p135, %p136
    %p138 = scmp.ne.s32.totalorder %s129, %s130
    %p139 = scmp.eq.s32.totalorder %s20, 0
    %p140 = por %p138, %p139
    %p141 = scmp.ne.s32.totalorder %s129, %s130
    %p142 = scmp.eq.s32.totalorder %s21, 7
    %p143 = por %p141, %p142
    %p145 = scmp.ne.s32.totalorder %s130, %s144
    %p146 = scmp.eq.s32.totalorder %s21, 0
    %p147 = por %p145, %p146
    %s149 = sadd.s32 %s148, 1
    %p152 = scmp.eq.s32.totalorder %s15, 7
    %p153 = scmp.ne.s32.totalorder %s148, %s150
    %p154 = scmp.eq.s32.totalorder %s15, 0
    %p155 = por %p153, %p154
    %p156 = scmp.ne.s32.totalorder %s148, %s150
    %p157 = scmp.eq.s32.totalorder %s20, 7
    %p158 = por %p156, %p157
    %p159 = scmp.ne.s32.totalorder %s150, %s151
    %p160 = scmp.eq.s32.totalorder %s20, 0
    %p161 = por %p159, %p160
    %p162 = scmp.ne.s32.totalorder %s150, %s151
    %p163 = scmp.eq.s32.totalorder %s21, 7
    %p164 = por %p162, %p163
    %p166 = scmp.ne.s32.totalorder %s151, %s165
    %p167 = scmp.eq.s32.totalorder %s21, 0
    %p168 = por %p166, %p167
    %s170 = sadd.s32 %s169, 1
    %p173 = scmp.eq.s32.totalorder %s15, 7
    %p174 = scmp.ne.s32.totalorder %s169, %s171
    %p175 = scmp.eq.s32.totalorder %s15, 0
    %p176 = por %p174, %p175
    %p177 = scmp.ne.s32.totalorder %s169, %s171
    %p178 = scmp.eq.s32.totalorder %s20, 7
    %p179 = por %p177, %p178
    %p180 = scmp.ne.s32.totalorder %s171, %s172
    %p181 = scmp.eq.s32.totalorder %s20, 0
    %p182 = por %p180, %p181
    %p183 = scmp.ne.s32.totalorder %s171, %s172
    %p184 = scmp.eq.s32.totalorder %s21, 7
    %p185 = por %p183, %p184
    %p187 = scmp.ne.s32.totalorder %s172, %s186
    %p188 = scmp.eq.s32.totalorder %s21, 0
    %p189 = por %p187, %p188
    %s191 = sadd.s32 %s190, 1
    %p194 = scmp.eq.s32.totalorder %s15, 7
    %p195 = scmp.ne.s32.totalorder %s190, %s192
    %p196 = scmp.eq.s32.totalorder %s15, 0
    %p197 = por %p195, %p196
    %p198 = scmp.ne.s32.totalorder %s190, %s192
    %p199 = scmp.eq.s32.totalorder %s20, 7
    %p200 = por %p198, %p199
    %p201 = scmp.ne.s32.totalorder %s192, %s193
    %p202 = scmp.eq.s32.totalorder %s20, 0
    %p203 = por %p201, %p202
    %p204 = scmp.ne.s32.totalorder %s192, %s193
    %p205 = scmp.eq.s32.totalorder %s21, 7
    %p206 = por %p204, %p205
    %p208 = scmp.ne.s32.totalorder %s193, %s207
    %p209 = scmp.eq.s32.totalorder %s21, 0
    %p210 = por %p208, %p209
    %s212 = sadd.s32 %s211, 1
    %p215 = scmp.eq.s32.totalorder %s15, 7
    %p216 = scmp.ne.s32.totalorder %s211, %s213
    %p217 = scmp.eq.s32.totalorder %s15, 0
    %p218 = por %p216, %p217
    %p219 = scmp.ne.s32.totalorder %s211, %s213
    %p220 = scmp.eq.s32.totalorder %s20, 7
    %p221 = por %p219, %p220
    %p222 = scmp.ne.s32.totalorder %s213, %s214
    %p223 = scmp.eq.s32.totalorder %s20, 0
    %p224 = por %p222, %p223
    %p225 = scmp.ne.s32.totalorder %s213, %s214
    %p226 = scmp.eq.s32.totalorder %s21, 7
    %p227 = por %p225, %p226
    %p229 = scmp.ne.s32.totalorder %s214, %s228
    %p230 = scmp.eq.s32.totalorder %s21, 0
    %p231 = por %p229, %p230
    %s233 = sadd.s32 %s232, 1
    %p236 = scmp.eq.s32.totalorder %s15, 7
    %p237 = scmp.ne.s32.totalorder %s232, %s234
    %p238 = scmp.eq.s32.totalorder %s15, 0
    %p239 = por %p237, %p238
    %p240 = scmp.ne.s32.totalorder %s232, %s234
    %p241 = scmp.eq.s32.totalorder %s20, 7
    %p242 = por %p240, %p241
    %p243 = scmp.ne.s32.totalorder %s234, %s235
    %p244 = scmp.eq.s32.totalorder %s20, 0
    %p245 = por %p243, %p244
    %p246 = scmp.ne.s32.totalorder %s234, %s235
    %p247 = scmp.eq.s32.totalorder %s21, 7
    %p248 = por %p246, %p247
    %p250 = scmp.ne.s32.totalorder %s235, %s249
    %p251 = scmp.eq.s32.totalorder %s21, 0
    %p252 = por %p250, %p251
    %s253 = smul.u32 %s22, 2
    %s254 = sadd.s32 %s253, %s23
    %s255 = smul.u32 %s41, 2
    %s256 = sadd.s32 %s255, %s37
    %s257 = ssub.s32 %s254, %s256
    %p258 = scmp.eq.s32.totalorder %s257, 0
    %s260 = sadd.s32 %s259, 1
    %s261 = scalar_select %p258, %s259, %s260
    %p264 = pneg %p258
    %p265 = scmp.eq.s32.totalorder %s15, 7
    %p266 = por %p264, %p265
    %p267 = scmp.ne.s32.totalorder %s259, %s262
    %p268 = scmp.eq.s32.totalorder %s15, 0
    %p269 = por %p267, %p268
    %p270 = scmp.ne.s32.totalorder %s259, %s262
    %p271 = scmp.eq.s32.totalorder %s20, 7
    %p272 = por %p270, %p271
    %p273 = scmp.ne.s32.totalorder %s262, %s263
    %p274 = scmp.eq.s32.totalorder %s20, 0
    %p275 = por %p273, %p274
    %p276 = scmp.ne.s32.totalorder %s262, %s263
    %p277 = scmp.eq.s32.totalorder %s21, 7
    %p278 = por %p276, %p277
    %p280 = scmp.ne.s32.totalorder %s263, %s279
    %p281 = scmp.eq.s32.totalorder %s21, 0
    %p282 = por %p280, %p281
    %p283 = scmp.le.s32.totalorder 1, %s15
    %p284 = scmp.lt.s32.totalorder %s15, 9
    %p285 = pnand %p283, %p284
    %p286 = pneg %p285
    // Predicated region
    $region9: #{_lambda_.1} parent=5 // pred_check
      _
    $region10: #{_lambda_.1} parent=5 // pred_check_branch
      %288 = sbr.rel (%p285) target = $region12
    $region11: #{_lambda_.1} parent=5 // pred_region
      %s289 = ssub.s32 %s15, 1
      // Predicated region
      $region13: #{_lambda_.1} parent=11 // pred_check
        %p290 = pneg %p119
      $region14: #{_lambda_.1} parent=11 // pred_check_branch
        %292 = sbr.rel (%p290) target = $region16
      $region15: #{_lambda_.1} parent=11 // pred_region
        _
      $region16: #{_lambda_.1} parent=11 // pred_fallthru
        _
      // Predicated region
      $region17: #{_lambda_.1} parent=11 // pred_check
        %p293 = pneg %p140
      $region18: #{_lambda_.1} parent=11 // pred_check_branch
        %295 = sbr.rel (%p293) target = $region20
      $region19: #{_lambda_.1} parent=11 // pred_region
        _
      $region20: #{_lambda_.1} parent=11 // pred_fallthru
        _
      // Predicated region
      $region21: #{_lambda_.1} parent=11 // pred_check
        %p296 = pneg %p161
      $region22: #{_lambda_.1} parent=11 // pred_check_branch
        %298 = sbr.rel (%p296) target = $region24
      $region23: #{_lambda_.1} parent=11 // pred_region
        _
      $region24: #{_lambda_.1} parent=11 // pred_fallthru
        _
      // Predicated region
      $region25: #{_lambda_.1} parent=11 // pred_check
        %p299 = pneg %p182
      $region26: #{_lambda_.1} parent=11 // pred_check_branch
        %301 = sbr.rel (%p299) target = $region28
      $region27: #{_lambda_.1} parent=11 // pred_region
        _
      $region28: #{_lambda_.1} parent=11 // pred_fallthru
        _
      // Predicated region
      $region29: #{_lambda_.1} parent=11 // pred_check
        %p302 = pneg %p203
      $region30: #{_lambda_.1} parent=11 // pred_check_branch
        %304 = sbr.rel (%p302) target = $region32
      $region31: #{_lambda_.1} parent=11 // pred_region
        _
      $region32: #{_lambda_.1} parent=11 // pred_fallthru
        _
      // Predicated region
      $region33: #{_lambda_.1} parent=11 // pred_check
        %p305 = pneg %p224
      $region34: #{_lambda_.1} parent=11 // pred_check_branch
        %307 = sbr.rel (%p305) target = $region36
      $region35: #{_lambda_.1} parent=11 // pred_region
        _
      $region36: #{_lambda_.1} parent=11 // pred_fallthru
        _
      // Predicated region
      $region37: #{_lambda_.1} parent=11 // pred_check
        %p308 = pneg %p245
      $region38: #{_lambda_.1} parent=11 // pred_check_branch
        %310 = sbr.rel (%p308) target = $region40
      $region39: #{_lambda_.1} parent=11 // pred_region
        _
      $region40: #{_lambda_.1} parent=11 // pred_fallthru
        _
    $region12: #{_lambda_.1} parent=5 // pred_fallthru
      _
    %p311 = scmp.lt.s32.totalorder %s15, 8
    // Predicated region
    $region41: #{_lambda_.1} parent=5 // pred_check
      %p312 = pneg %p311
    $region42: #{_lambda_.1} parent=5 // pred_check_branch
      %314 = sbr.rel (%p312) target = $region44
    $region43: #{_lambda_.1} parent=5 // pred_region
      // Predicated region
      $region45: #{_lambda_.1} parent=43 // pred_check
        %p315 = pneg %p60
      $region46: #{_lambda_.1} parent=43 // pred_check_branch
        %317 = sbr.rel (%p315) target = $region48
      $region47: #{_lambda_.1} parent=43 // pred_region
        %s318 = smul.u32 %s23, 2
        %s319 = sadd.s32 %s318, %s24
        %s320 = smul.u32 4, %s319
        %p321 = scmp.lt.s32.totalorder %s22, 1
        %s322 = scalar_select %p321, %s22, 1
        %p323 = scmp.lt.s32.totalorder %s320, 15
        %s324 = scalar_select %p323, %s320, 15
        %s325 = smul.addr %s324, 2
        %s326 = smul.addr %s322, 32
        %s327 = sadd.s32 %s325, %s326
        %s328 = smul.addr %s327, 8
        %s329 = scalar_lea.vmem %s0, %s328
        %s330 = smul.u32 %s23, 2
        %s331 = sadd.s32 %s330, %s24
        %s332 = smul.u32 4, %s331
      $region48: #{_lambda_.1} parent=43 // pred_fallthru
        _
      // Predicated region
      $region49: #{_lambda_.1} parent=43 // pred_check
        %p333 = pneg %p92
      $region50: #{_lambda_.1} parent=43 // pred_check_branch
        %335 = sbr.rel (%p333) target = $region52
      $region51: #{_lambda_.1} parent=43 // pred_region
        %s336 = smul.u32 %s23, 2
        %s337 = sadd.s32 %s336, %s24
        %s338 = smul.u32 4, %s337
        %p339 = scmp.lt.s32.totalorder %s22, 1
        %s340 = scalar_select %p339, %s22, 1
        %p341 = scmp.lt.s32.totalorder %s338, 15
        %s342 = scalar_select %p341, %s338, 15
        %s343 = smul.addr %s340, 16
        %s344 = sadd.s32 %s342, %s343
        %s345 = smul.addr %s344, 4
        %s346 = scalar_lea.vmem %s1, %s345
        %s347 = smul.u32 %s23, 2
        %s348 = sadd.s32 %s347, %s24
        %s349 = smul.u32 4, %s348
      $region52: #{_lambda_.1} parent=43 // pred_fallthru
        _
    $region44: #{_lambda_.1} parent=5 // pred_fallthru
      _
    %p350 = scmp.le.s32.totalorder 1, %s15
    %p351 = scmp.lt.s32.totalorder %s15, 9
    %p352 = pnand %p350, %p351
    %p353 = pneg %p352
    // Predicated region
    $region53: #{_lambda_.1} parent=5 // pred_check
      _
    $region54: #{_lambda_.1} parent=5 // pred_check_branch
      %355 = sbr.rel (%p352) target = $region56
    $region55: #{_lambda_.1} parent=5 // pred_region
      %s356 = ssub.s32 %s15, 1
      %s357 = smul.u32 %s26, 2
      %s358 = sadd.s32 %s357, %s27
      %s359 = smul.u32 4, %s358
      %p360 = scmp.lt.s32.totalorder %s25, 1
      %s361 = scalar_select %p360, %s25, 1
      %p362 = scmp.lt.s32.totalorder %s359, 15
      %s363 = scalar_select %p362, %s359, 15
      %s364 = smul.addr %s363, 2
      %s365 = smul.addr %s361, 32
      %s366 = sadd.s32 %s364, %s365
      %s367 = smul.addr %s366, 8
      %s368 = scalar_lea.vmem %s0, %s367
      %p369 = pneg %p66
      %p370 = pneg %p63
      %s371 = smul.u32 %s26, 2
      %s372 = sadd.s32 %s371, %s27
      %s373 = smul.u32 4, %s372
      %p374 = scmp.lt.s32.totalorder %s25, 1
      %s375 = scalar_select %p374, %s25, 1
      %p376 = scmp.lt.s32.totalorder %s373, 15
      %s377 = scalar_select %p376, %s373, 15
      %s378 = smul.addr %s375, 16
      %s379 = sadd.s32 %s377, %s378
      %s380 = smul.addr %s379, 4
      %s381 = scalar_lea.vmem %s1, %s380
      %p382 = pneg %p98
      %p383 = pneg %p95
      %p384 = pneg %p119
      %p385 = pneg %p116
      %p386 = pneg %p140
      %p387 = pneg %p137
      %p388 = pneg %p161
      %p389 = pneg %p158
      %p390 = pneg %p182
      %p391 = pneg %p179
      %p392 = pneg %p203
      %p393 = pneg %p200
      %p394 = pneg %p224
      %p395 = pneg %p221
      %p396 = pneg %p245
      %p397 = pneg %p242
      %p398 = pneg %p275
      %p399 = pneg %p272
      %s400 = smul.u32 %s25, 2
      %s401 = sadd.s32 %s400, %s26
      %p402 = scmp.lt.s32.totalorder %s401, 3
      %s403 = scalar_select %p402, %s401, 3
      %s404 = smul.addr %s403, 8
      %s405 = scalar_lea.vmem %s9, %s404
      %s406 = smul.u32 %s26, 2
      %s407 = sadd.s32 %s406, %s27
      %s408 = smul.u32 4, %s407
      %p409 = scmp.lt.s32.totalorder %s25, 1
      %s410 = scalar_select %p409, %s25, 1
      %p411 = scmp.lt.s32.totalorder %s408, 15
      %s412 = scalar_select %p411, %s408, 15
      %s413 = smul.addr %s412, 2
      %s414 = smul.addr %s410, 32
      %s415 = sadd.s32 %s413, %s414
      %s416 = smul.addr %s415, 8
      %s417 = scalar_lea.vmem %s0, %s416
      %s418 = smul.u32 %s26, 2
      %s419 = sadd.s32 %s418, %s27
      %s420 = smul.u32 4, %s419
      %s421 = smul.u32 %s26, 2
      %s422 = sadd.s32 %s421, %s27
      %s423 = smul.u32 4, %s422
      %p424 = scmp.lt.s32.totalorder %s25, 1
      %s425 = scalar_select %p424, %s25, 1
      %p426 = scmp.lt.s32.totalorder %s423, 15
      %s427 = scalar_select %p426, %s423, 15
      %s428 = smul.addr %s425, 16
      %s429 = sadd.s32 %s427, %s428
      %s430 = smul.addr %s429, 4
      %s431 = scalar_lea.vmem %s1, %s430
      %s432 = smul.u32 %s26, 2
      %s433 = sadd.s32 %s432, %s27
      %s434 = smul.u32 4, %s433
      %s435 = smul.u32 %s25, 2
      %s436 = sadd.s32 %s435, %s26
      %p437 = scmp.lt.s32.totalorder %s436, 3
      %s438 = scalar_select %p437, %s436, 3
      %s439 = smul.addr %s438, 8
      %s440 = scalar_lea.vmem %s9, %s439
      %s441 = smul.u32 %s25, 2
      %s442 = sadd.s32 %s441, %s26
      %p444 = scmp.eq.s32.totalorder %s27, 0
      // Predicated region
      $region57: #{_lambda_.1} parent=55 // pred_check
        %p445 = pneg %p444
      $region58: #{_lambda_.1} parent=55 // pred_check_branch
        %447 = sbr.rel (%p445) target = $region60
      $region59: #{_lambda_.1} parent=55 // pred_region
        %448 = vst [vmem:[%s440] sm:$0xff] -3e+38
      $region60: #{_lambda_.1} parent=55 // pred_fallthru
        _
      %v449 = vld [vmem:[%s417] sm:$0xff]
      %v450 = vld [vmem:[%s417 + $0x8] sm:$0xff]
      %v451 = vld [vmem:[%s417 + $0x10] sm:$0xff]
      %v452 = vld [vmem:[%s417 + $0x18] sm:$0xff]
      %v453 = vld [vmem:[%s417 + $0x20] sm:$0xff]
      %v454 = vld [vmem:[%s417 + $0x28] sm:$0xff]
      %v455 = vld [vmem:[%s417 + $0x30] sm:$0xff]
      %v456 = vld [vmem:[%s417 + $0x38] sm:$0xff]
      %v457 = vpack.c.bf16 %v451, %v449
      %v458 = vpack.c.bf16 %v452, %v450
      %v459 = vpack.c.bf16 %v455, %v453
      %v460 = vpack.c.bf16 %v456, %v454
      %v461 = vld [vmem:[%s431] sm:$0xf]
      %v462 = vld [vmem:[%s431 + $0x4] sm:$0xf]
      %v463 = vld [vmem:[%s431 + $0x8] sm:$0xf]
      %v464 = vld [vmem:[%s431 + $0xc] sm:$0xf]
      %v465 = vld [vmem:[%s2] sm:$0xff]
      %v466 = vld [vmem:[%s2 + $0x8] sm:$0xff]
      %v467 = vld [vmem:[%s2 + $0x10] sm:$0xff]
      %v468 = vld [vmem:[%s2 + $0x18] sm:$0xff]
      %v469 = vld [vmem:[%s2 + $0x20] sm:$0xff]
      %v470 = vld [vmem:[%s2 + $0x28] sm:$0xff]
      %v471 = vld [vmem:[%s2 + $0x30] sm:$0xff]
      %v472 = vld [vmem:[%s2 + $0x38] sm:$0xff]
      %v473 = vld [vmem:[%s2 + $0x40] sm:$0xff]
      %v474 = vld [vmem:[%s2 + $0x48] sm:$0xff]
      %v475 = vld [vmem:[%s2 + $0x50] sm:$0xff]
      %v476 = vld [vmem:[%s2 + $0x58] sm:$0xff]
      %v477 = vld [vmem:[%s2 + $0x60] sm:$0xff]
      %v478 = vld [vmem:[%s2 + $0x68] sm:$0xff]
      %v479 = vld [vmem:[%s2 + $0x70] sm:$0xff]
      %v480 = vld [vmem:[%s2 + $0x78] sm:$0xff]
      %v481 = vld [vmem:[%s2 + $0x80] sm:$0xff]
      %v482 = vld [vmem:[%s2 + $0x88] sm:$0xff]
      %v483 = vld [vmem:[%s2 + $0x90] sm:$0xff]
      %v484 = vld [vmem:[%s2 + $0x98] sm:$0xff]
      %v485 = vld [vmem:[%s2 + $0xa0] sm:$0xff]
      %v486 = vld [vmem:[%s2 + $0xa8] sm:$0xff]
      %v487 = vld [vmem:[%s2 + $0xb0] sm:$0xff]
      %v488 = vld [vmem:[%s2 + $0xb8] sm:$0xff]
      %v489 = vld [vmem:[%s2 + $0xc0] sm:$0xff]
      %v490 = vld [vmem:[%s2 + $0xc8] sm:$0xff]
      %v491 = vld [vmem:[%s2 + $0xd0] sm:$0xff]
      %v492 = vld [vmem:[%s2 + $0xd8] sm:$0xff]
      %v493 = vld [vmem:[%s2 + $0xe0] sm:$0xff]
      %v494 = vld [vmem:[%s2 + $0xe8] sm:$0xff]
      %v495 = vld [vmem:[%s2 + $0xf0] sm:$0xff]
      %v496 = vld [vmem:[%s2 + $0xf8] sm:$0xff]
      %v497 = vld [vmem:[%s3] sm:$0xff]
      %v498 = vld [vmem:[%s3 + $0x8] sm:$0xff]
      %v499 = vld [vmem:[%s3 + $0x10] sm:$0xff]
      %v500 = vld [vmem:[%s3 + $0x18] sm:$0xff]
      %v501 = vld [vmem:[%s3 + $0x20] sm:$0xff]
      %v502 = vld [vmem:[%s3 + $0x28] sm:$0xff]
      %v503 = vld [vmem:[%s3 + $0x30] sm:$0xff]
      %v504 = vld [vmem:[%s3 + $0x38] sm:$0xff]
      %v505 = vld [vmem:[%s3 + $0x40] sm:$0xff]
      %v506 = vld [vmem:[%s3 + $0x48] sm:$0xff]
      %v507 = vld [vmem:[%s3 + $0x50] sm:$0xff]
      %v508 = vld [vmem:[%s3 + $0x58] sm:$0xff]
      %v509 = vld [vmem:[%s3 + $0x60] sm:$0xff]
      %v510 = vld [vmem:[%s3 + $0x68] sm:$0xff]
      %v511 = vld [vmem:[%s3 + $0x70] sm:$0xff]
      %v512 = vld [vmem:[%s3 + $0x78] sm:$0xff]
      %v517 = vunpack.c.l.b16 %v461
      %v518 = vunpack.c.l.b16 %v462
      %v519 = vunpack.c.l.b16 %v463
      %v520 = vunpack.c.l.b16 %v464
      %v521 = vpack.c.b16 %v518, %v517
      %v522 = vpack.c.b16 %v520, %v519
      %v541 = vunpack.c.l.b16 %v497
      %v542 = vunpack.c.h.b16 %v497
      %v543 = vunpack.c.l.b16 %v498
      %v544 = vunpack.c.h.b16 %v498
      %v545 = vunpack.c.l.b16 %v499
      %v546 = vunpack.c.h.b16 %v499
      %v547 = vunpack.c.l.b16 %v500
      %v548 = vunpack.c.h.b16 %v500
      %v549 = vunpack.c.l.b16 %v501
      %v550 = vunpack.c.h.b16 %v501
      %v551 = vunpack.c.l.b16 %v502
      %v552 = vunpack.c.h.b16 %v502
      %v553 = vunpack.c.l.b16 %v503
      %v554 = vunpack.c.h.b16 %v503
      %v555 = vunpack.c.l.b16 %v504
      %v556 = vunpack.c.h.b16 %v504
      %v557 = vunpack.c.l.b16 %v505
      %v558 = vunpack.c.h.b16 %v505
      %v559 = vunpack.c.l.b16 %v506
      %v560 = vunpack.c.h.b16 %v506
      %v561 = vunpack.c.l.b16 %v507
      %v562 = vunpack.c.h.b16 %v507
      %v563 = vunpack.c.l.b16 %v508
      %v564 = vunpack.c.h.b16 %v508
      %v565 = vunpack.c.l.b16 %v509
      %v566 = vunpack.c.h.b16 %v509
      %v567 = vunpack.c.l.b16 %v510
      %v568 = vunpack.c.h.b16 %v510
      %v569 = vunpack.c.l.b16 %v511
      %v570 = vunpack.c.h.b16 %v511
      %v571 = vunpack.c.l.b16 %v512
      %v572 = vunpack.c.h.b16 %v512
      %v573 = vpack.c.b16 %v543, %v541
      %v574 = vpack.c.b16 %v544, %v542
      %v575 = vpack.c.b16 %v547, %v545
      %v576 = vpack.c.b16 %v548, %v546
      %v577 = vpack.c.b16 %v551, %v549
      %v578 = vpack.c.b16 %v552, %v550
      %v579 = vpack.c.b16 %v555, %v553
      %v580 = vpack.c.b16 %v556, %v554
      %v581 = vpack.c.b16 %v559, %v557
      %v582 = vpack.c.b16 %v560, %v558
      %v583 = vpack.c.b16 %v563, %v561
      %v584 = vpack.c.b16 %v564, %v562
      %v585 = vpack.c.b16 %v567, %v565
      %v586 = vpack.c.b16 %v568, %v566
      %v587 = vpack.c.b16 %v571, %v569
      %v588 = vpack.c.b16 %v572, %v570
      %605 = vmatprep.subr.bf16.mxu0 %v574
      %606 = vmatpush1.bf16.msra.mxu0 %v573
      %607 = vmatprep.subr.bf16.mxu0 %v576
      %608 = vmatpush1.bf16.msra.mxu0 %v575
      %609 = vmatprep.subr.bf16.mxu0 %v578
      %610 = vmatpush1.bf16.msra.mxu0 %v577
      %611 = vmatprep.subr.bf16.mxu0 %v580
      %612 = vmatpush1.bf16.msra.mxu0 %v579
      %613 = vmatprep.subr.bf16.mxu0 %v582
      %614 = vmatpush1.bf16.msra.mxu0 %v581
      %615 = vmatprep.subr.bf16.mxu0 %v584
      %616 = vmatpush1.bf16.msra.mxu0 %v583
      %617 = vmatprep.subr.bf16.mxu0 %v586
      %618 = vmatpush1.bf16.msra.mxu0 %v585
      %619 = vmatprep.subr.bf16.mxu0 %v588
      %620 = vmatpush1.bf16.msra.mxu0 %v587
      %621 = vmatprep.subr.bf16.mxu0 0
      %622 = vmatpush1.bf16.msra.mxu0 0
      %623 = vmatprep.subr.bf16.mxu0 0
      %624 = vmatpush1.bf16.msra.mxu0 0
      %625 = vmatprep.subr.bf16.mxu0 0
      %626 = vmatpush1.bf16.msra.mxu0 0
      %627 = vmatprep.subr.bf16.mxu0 0
      %628 = vmatpush1.bf16.msra.mxu0 0
      %629 = vmatprep.subr.bf16.mxu0 0
      %630 = vmatpush1.bf16.msra.mxu0 0
      %631 = vmatprep.subr.bf16.mxu0 0
      %632 = vmatpush1.bf16.msra.mxu0 0
      %633 = vmatprep.subr.bf16.mxu0 0
      %634 = vmatpush1.bf16.msra.mxu0 0
      %635 = vmatprep.subr.bf16.mxu0 0
      %636 = vmatpush1.bf16.msra.mxu0 0
      %637 = vmatprep.mubr.bf16.mxu0 0
      %638 = vmatmul.mubr.bf16.gmra.mrb[0].mxu0 %v521
      %v639 = vpop.f32.mrb[0].mxu0
      %v640 = vadd.f32 0.0, %v639
      %v641 = vpop.f32.mrb[0].mxu0
      %v642 = vadd.f32 0.0, %v641
      %v643 = vpop.f32.mrb[0].mxu0
      %v644 = vadd.f32 0.0, %v643
      %v645 = vpop.f32.mrb[0].mxu0
      %v646 = vadd.f32 0.0, %v645
      %647 = vmatprep.mubr.bf16.mxu0 0
      %648 = vmatmul.mubr.bf16.gmra.mrb[0].mxu0 %v522
      %v649 = vpop.f32.mrb[0].mxu0
      %v650 = vadd.f32 0.0, %v649
      %v651 = vpop.f32.mrb[0].mxu0
      %v652 = vadd.f32 0.0, %v651
      %v653 = vpop.f32.mrb[0].mxu0
      %v654 = vadd.f32 0.0, %v653
      %v655 = vpop.f32.mrb[0].mxu0
      %v656 = vadd.f32 0.0, %v655
      %657 = vdwg.mxu0
      %v690 = vunpack.c.l.b16 %v465
      %v691 = vunpack.c.h.b16 %v465
      %v692 = vunpack.c.l.b16 %v466
      %v693 = vunpack.c.h.b16 %v466
      %v694 = vunpack.c.l.b16 %v467
      %v695 = vunpack.c.h.b16 %v467
      %v696 = vunpack.c.l.b16 %v468
      %v697 = vunpack.c.h.b16 %v468
      %v698 = vunpack.c.l.b16 %v469
      %v699 = vunpack.c.h.b16 %v469
      %v700 = vunpack.c.l.b16 %v470
      %v701 = vunpack.c.h.b16 %v470
      %v702 = vunpack.c.l.b16 %v471
      %v703 = vunpack.c.h.b16 %v471
      %v704 = vunpack.c.l.b16 %v472
      %v705 = vunpack.c.h.b16 %v472
      %v706 = vunpack.c.l.b16 %v473
      %v707 = vunpack.c.h.b16 %v473
      %v708 = vunpack.c.l.b16 %v474
      %v709 = vunpack.c.h.b16 %v474
      %v710 = vunpack.c.l.b16 %v475
      %v711 = vunpack.c.h.b16 %v475
      %v712 = vunpack.c.l.b16 %v476
      %v713 = vunpack.c.h.b16 %v476
      %v714 = vunpack.c.l.b16 %v477
      %v715 = vunpack.c.h.b16 %v477
      %v716 = vunpack.c.l.b16 %v478
      %v717 = vunpack.c.h.b16 %v478
      %v718 = vunpack.c.l.b16 %v479
      %v719 = vunpack.c.h.b16 %v479
      %v720 = vunpack.c.l.b16 %v480
      %v721 = vunpack.c.h.b16 %v480
      %v722 = vunpack.c.l.b16 %v481
      %v723 = vunpack.c.h.b16 %v481
      %v724 = vunpack.c.l.b16 %v482
      %v725 = vunpack.c.h.b16 %v482
      %v726 = vunpack.c.l.b16 %v483
      %v727 = vunpack.c.h.b16 %v483
      %v728 = vunpack.c.l.b16 %v484
      %v729 = vunpack.c.h.b16 %v484
      %v730 = vunpack.c.l.b16 %v485
      %v731 = vunpack.c.h.b16 %v485
      %v732 = vunpack.c.l.b16 %v486
      %v733 = vunpack.c.h.b16 %v486
      %v734 = vunpack.c.l.b16 %v487
      %v735 = vunpack.c.h.b16 %v487
      %v736 = vunpack.c.l.b16 %v488
      %v737 = vunpack.c.h.b16 %v488
      %v738 = vunpack.c.l.b16 %v489
      %v739 = vunpack.c.h.b16 %v489
      %v740 = vunpack.c.l.b16 %v490
      %v741 = vunpack.c.h.b16 %v490
      %v742 = vunpack.c.l.b16 %v491
      %v743 = vunpack.c.h.b16 %v491
      %v744 = vunpack.c.l.b16 %v492
      %v745 = vunpack.c.h.b16 %v492
      %v746 = vunpack.c.l.b16 %v493
      %v747 = vunpack.c.h.b16 %v493
      %v748 = vunpack.c.l.b16 %v494
      %v749 = vunpack.c.h.b16 %v494
      %v750 = vunpack.c.l.b16 %v495
      %v751 = vunpack.c.h.b16 %v495
      %v752 = vunpack.c.l.b16 %v496
      %v753 = vunpack.c.h.b16 %v496
      %v754 = vpack.c.b16 %v692, %v690
      %v755 = vpack.c.b16 %v693, %v691
      %v756 = vpack.c.b16 %v696, %v694
      %v757 = vpack.c.b16 %v697, %v695
      %v758 = vpack.c.b16 %v700, %v698
      %v759 = vpack.c.b16 %v701, %v699
      %v760 = vpack.c.b16 %v704, %v702
      %v761 = vpack.c.b16 %v705, %v703
      %v762 = vpack.c.b16 %v708, %v706
      %v763 = vpack.c.b16 %v709, %v707
      %v764 = vpack.c.b16 %v712, %v710
      %v765 = vpack.c.b16 %v713, %v711
      %v766 = vpack.c.b16 %v716, %v714
      %v767 = vpack.c.b16 %v717, %v715
      %v768 = vpack.c.b16 %v720, %v718
      %v769 = vpack.c.b16 %v721, %v719
      %v770 = vpack.c.b16 %v724, %v722
      %v771 = vpack.c.b16 %v725, %v723
      %v772 = vpack.c.b16 %v728, %v726
      %v773 = vpack.c.b16 %v729, %v727
      %v774 = vpack.c.b16 %v732, %v730
      %v775 = vpack.c.b16 %v733, %v731
      %v776 = vpack.c.b16 %v736, %v734
      %v777 = vpack.c.b16 %v737, %v735
      %v778 = vpack.c.b16 %v740, %v738
      %v779 = vpack.c.b16 %v741, %v739
      %v780 = vpack.c.b16 %v744, %v742
      %v781 = vpack.c.b16 %v745, %v743
      %v782 = vpack.c.b16 %v748, %v746
      %v783 = vpack.c.b16 %v749, %v747
      %v784 = vpack.c.b16 %v752, %v750
      %v785 = vpack.c.b16 %v753, %v751
      %818 = vmatprep.subr.bf16.mxu0 %v755
      %819 = vmatpush1.bf16.msra.mxu0 %v754
      %820 = vmatprep.subr.bf16.mxu0 %v757
      %821 = vmatpush1.bf16.msra.mxu0 %v756
      %822 = vmatprep.subr.bf16.mxu0 %v759
      %823 = vmatpush1.bf16.msra.mxu0 %v758
      %824 = vmatprep.subr.bf16.mxu0 %v761
      %825 = vmatpush1.bf16.msra.mxu0 %v760
      %826 = vmatprep.subr.bf16.mxu0 %v763
      %827 = vmatpush1.bf16.msra.mxu0 %v762
      %828 = vmatprep.subr.bf16.mxu0 %v765
      %829 = vmatpush1.bf16.msra.mxu0 %v764
      %830 = vmatprep.subr.bf16.mxu0 %v767
      %831 = vmatpush1.bf16.msra.mxu0 %v766
      %832 = vmatprep.subr.bf16.mxu0 %v769
      %833 = vmatpush1.bf16.msra.mxu0 %v768
      %834 = vmatprep.subr.bf16.mxu0 %v771
      %835 = vmatpush1.bf16.msra.mxu0 %v770
      %836 = vmatprep.subr.bf16.mxu0 %v773
      %837 = vmatpush1.bf16.msra.mxu0 %v772
      %838 = vmatprep.subr.bf16.mxu0 %v775
      %839 = vmatpush1.bf16.msra.mxu0 %v774
      %840 = vmatprep.subr.bf16.mxu0 %v777
      %841 = vmatpush1.bf16.msra.mxu0 %v776
      %842 = vmatprep.subr.bf16.mxu0 %v779
      %843 = vmatpush1.bf16.msra.mxu0 %v778
      %844 = vmatprep.subr.bf16.mxu0 %v781
      %845 = vmatpush1.bf16.msra.mxu0 %v780
      %846 = vmatprep.subr.bf16.mxu0 %v783
      %847 = vmatpush1.bf16.msra.mxu0 %v782
      %848 = vmatprep.subr.bf16.mxu0 %v785
      %849 = vmatpush1.bf16.msra.mxu0 %v784
      %850 = vmatprep.mubr.bf16.mxu0 %v458
      %851 = vmatmul.mubr.bf16.gmra.mrb[0].mxu0 %v457
      %v852 = vpop.f32.mrb[0].mxu0
      %v853 = vadd.f32 %v640, %v852
      %v854 = vpop.f32.mrb[0].mxu0
      %v855 = vadd.f32 %v642, %v854
      %v856 = vpop.f32.mrb[0].mxu0
      %v857 = vadd.f32 %v644, %v856
      %v858 = vpop.f32.mrb[0].mxu0
      %v859 = vadd.f32 %v646, %v858
      %860 = vmatprep.mubr.bf16.mxu0 %v460
      %861 = vmatmul.mubr.bf16.gmra.mrb[0].mxu0 %v459
      %v862 = vpop.f32.mrb[0].mxu0
      %v863 = vadd.f32 %v650, %v862
      %v864 = vpop.f32.mrb[0].mxu0
      %v865 = vadd.f32 %v652, %v864
      %v866 = vpop.f32.mrb[0].mxu0
      %v867 = vadd.f32 %v654, %v866
      %v868 = vpop.f32.mrb[0].mxu0
      %v869 = vadd.f32 %v656, %v868
      %870 = vdwg.mxu0
      %v871 = vld [vmem:[%s4] sm:$0x3]
      %v873 = vlaneseq
      %v874 = vshrl.u32 %v873, 7
      %v875 = vsub.s32 0, %v874
      %v876 = vrot.slane %v871, %v875
      %v877 = vlaneseq
      %v878 = vshrl.u32 %v877, 7
      %v879 = vsub.s32 1, %v878
      %v880 = vrot.slane %v871, %v879
      %v883 = vadd.f32 %v853, %v876
      %v884 = vadd.f32 %v855, %v880
      %v885 = vadd.f32 %v857, %v876
      %v886 = vadd.f32 %v859, %v880
      %v887 = vadd.f32 %v863, %v876
      %v888 = vadd.f32 %v865, %v880
      %v889 = vadd.f32 %v867, %v876
      %v890 = vadd.f32 %v869, %v880
      %v891 = vmax.f32 %v883, 0.0
      %v892 = vmax.f32 %v884, 0.0
      %v893 = vmax.f32 %v885, 0.0
      %v894 = vmax.f32 %v886, 0.0
      %v895 = vmax.f32 %v887, 0.0
      %v896 = vmax.f32 %v888, 0.0
      %v897 = vmax.f32 %v889, 0.0
      %v898 = vmax.f32 %v890, 0.0
      %v899 = vpack.c.bf16 %v893, %v891
      %v900 = vpack.c.bf16 %v894, %v892
      %v901 = vpack.c.bf16 %v897, %v895
      %v902 = vpack.c.bf16 %v898, %v896
      %v903 = vld [vmem:[%s5] sm:$0xff]
      %v904 = vld [vmem:[%s5 + $0x8] sm:$0xff]
      %v905 = vld [vmem:[%s5 + $0x10] sm:$0xff]
      %v906 = vld [vmem:[%s5 + $0x18] sm:$0xff]
      %v907 = vld [vmem:[%s5 + $0x20] sm:$0xff]
      %v908 = vld [vmem:[%s5 + $0x28] sm:$0xff]
      %v909 = vld [vmem:[%s5 + $0x30] sm:$0xff]
      %v910 = vld [vmem:[%s5 + $0x38] sm:$0xff]
      %v911 = vld [vmem:[%s5 + $0x40] sm:$0xff]
      %v912 = vld [vmem:[%s5 + $0x48] sm:$0xff]
      %v913 = vld [vmem:[%s5 + $0x50] sm:$0xff]
      %v914 = vld [vmem:[%s5 + $0x58] sm:$0xff]
      %v915 = vld [vmem:[%s5 + $0x60] sm:$0xff]
      %v916 = vld [vmem:[%s5 + $0x68] sm:$0xff]
      %v917 = vld [vmem:[%s5 + $0x70] sm:$0xff]
      %v918 = vld [vmem:[%s5 + $0x78] sm:$0xff]
      %v919 = vld [vmem:[%s5 + $0x80] sm:$0xff]
      %v920 = vld [vmem:[%s5 + $0x88] sm:$0xff]
      %v921 = vld [vmem:[%s5 + $0x90] sm:$0xff]
      %v922 = vld [vmem:[%s5 + $0x98] sm:$0xff]
      %v923 = vld [vmem:[%s5 + $0xa0] sm:$0xff]
      %v924 = vld [vmem:[%s5 + $0xa8] sm:$0xff]
      %v925 = vld [vmem:[%s5 + $0xb0] sm:$0xff]
      %v926 = vld [vmem:[%s5 + $0xb8] sm:$0xff]
      %v927 = vld [vmem:[%s5 + $0xc0] sm:$0xff]
      %v928 = vld [vmem:[%s5 + $0xc8] sm:$0xff]
      %v929 = vld [vmem:[%s5 + $0xd0] sm:$0xff]
      %v930 = vld [vmem:[%s5 + $0xd8] sm:$0xff]
      %v931 = vld [vmem:[%s5 + $0xe0] sm:$0xff]
      %v932 = vld [vmem:[%s5 + $0xe8] sm:$0xff]
      %v933 = vld [vmem:[%s5 + $0xf0] sm:$0xff]
      %v934 = vld [vmem:[%s5 + $0xf8] sm:$0xff]
      %v935 = vld [vmem:[%s5 + $0x100] sm:$0xff]
      %v936 = vld [vmem:[%s5 + $0x108] sm:$0xff]
      %v937 = vld [vmem:[%s5 + $0x110] sm:$0xff]
      %v938 = vld [vmem:[%s5 + $0x118] sm:$0xff]
      %v939 = vld [vmem:[%s5 + $0x120] sm:$0xff]
      %v940 = vld [vmem:[%s5 + $0x128] sm:$0xff]
      %v941 = vld [vmem:[%s5 + $0x130] sm:$0xff]
      %v942 = vld [vmem:[%s5 + $0x138] sm:$0xff]
      %v943 = vld [vmem:[%s5 + $0x140] sm:$0xff]
      %v944 = vld [vmem:[%s5 + $0x148] sm:$0xff]
      %v945 = vld [vmem:[%s5 + $0x150] sm:$0xff]
      %v946 = vld [vmem:[%s5 + $0x158] sm:$0xff]
      %v947 = vld [vmem:[%s5 + $0x160] sm:$0xff]
      %v948 = vld [vmem:[%s5 + $0x168] sm:$0xff]
      %v949 = vld [vmem:[%s5 + $0x170] sm:$0xff]
      %v950 = vld [vmem:[%s5 + $0x178] sm:$0xff]
      %v951 = vld [vmem:[%s5 + $0x180] sm:$0xff]
      %v952 = vld [vmem:[%s5 + $0x188] sm:$0xff]
      %v953 = vld [vmem:[%s5 + $0x190] sm:$0xff]
      %v954 = vld [vmem:[%s5 + $0x198] sm:$0xff]
      %v955 = vld [vmem:[%s5 + $0x1a0] sm:$0xff]
      %v956 = vld [vmem:[%s5 + $0x1a8] sm:$0xff]
      %v957 = vld [vmem:[%s5 + $0x1b0] sm:$0xff]
      %v958 = vld [vmem:[%s5 + $0x1b8] sm:$0xff]
      %v959 = vld [vmem:[%s5 + $0x1c0] sm:$0xff]
      %v960 = vld [vmem:[%s5 + $0x1c8] sm:$0xff]
      %v961 = vld [vmem:[%s5 + $0x1d0] sm:$0xff]
      %v962 = vld [vmem:[%s5 + $0x1d8] sm:$0xff]
      %v963 = vld [vmem:[%s5 + $0x1e0] sm:$0xff]
      %v964 = vld [vmem:[%s5 + $0x1e8] sm:$0xff]
      %v965 = vld [vmem:[%s5 + $0x1f0] sm:$0xff]
      %v966 = vld [vmem:[%s5 + $0x1f8] sm:$0xff]
      %v967 = vld [vmem:[%s6] sm:$0xf]
      %v969 = vlaneseq
      %v970 = vshrl.u32 %v969, 7
      %v971 = vsub.s32 0, %v970
      %v972 = vrot.slane %v967, %v971
      %v973 = vlaneseq
      %v974 = vshrl.u32 %v973, 7
      %v975 = vsub.s32 1, %v974
      %v976 = vrot.slane %v967, %v975
      %v977 = vlaneseq
      %v978 = vshrl.u32 %v977, 7
      %v979 = vsub.s32 2, %v978
      %v980 = vrot.slane %v967, %v979
      %v981 = vlaneseq
      %v982 = vshrl.u32 %v981, 7
      %v983 = vsub.s32 3, %v982
      %v984 = vrot.slane %v967, %v983
      %v1053 = vunpack.c.l.b16 %v903
      %v1054 = vunpack.c.h.b16 %v903
      %v1055 = vunpack.c.l.b16 %v904
      %v1056 = vunpack.c.h.b16 %v904
      %v1057 = vunpack.c.l.b16 %v905
      %v1058 = vunpack.c.h.b16 %v905
      %v1059 = vunpack.c.l.b16 %v906
      %v1060 = vunpack.c.h.b16 %v906
      %v1061 = vunpack.c.l.b16 %v907
      %v1062 = vunpack.c.h.b16 %v907
      %v1063 = vunpack.c.l.b16 %v908
      %v1064 = vunpack.c.h.b16 %v908
      %v1065 = vunpack.c.l.b16 %v909
      %v1066 = vunpack.c.h.b16 %v909
      %v1067 = vunpack.c.l.b16 %v910
      %v1068 = vunpack.c.h.b16 %v910
      %v1069 = vunpack.c.l.b16 %v911
      %v1070 = vunpack.c.h.b16 %v911
      %v1071 = vunpack.c.l.b16 %v912
      %v1072 = vunpack.c.h.b16 %v912
      %v1073 = vunpack.c.l.b16 %v913
      %v1074 = vunpack.c.h.b16 %v913
      %v1075 = vunpack.c.l.b16 %v914
      %v1076 = vunpack.c.h.b16 %v914
      %v1077 = vunpack.c.l.b16 %v915
      %v1078 = vunpack.c.h.b16 %v915
      %v1079 = vunpack.c.l.b16 %v916
      %v1080 = vunpack.c.h.b16 %v916
      %v1081 = vunpack.c.l.b16 %v917
      %v1082 = vunpack.c.h.b16 %v917
      %v1083 = vunpack.c.l.b16 %v918
      %v1084 = vunpack.c.h.b16 %v918
      %v1085 = vunpack.c.l.b16 %v919
      %v1086 = vunpack.c.h.b16 %v919
      %v1087 = vunpack.c.l.b16 %v920
      %v1088 = vunpack.c.h.b16 %v920
      %v1089 = vunpack.c.l.b16 %v921
      %v1090 = vunpack.c.h.b16 %v921
      %v1091 = vunpack.c.l.b16 %v922
      %v1092 = vunpack.c.h.b16 %v922
      %v1093 = vunpack.c.l.b16 %v923
      %v1094 = vunpack.c.h.b16 %v923
      %v1095 = vunpack.c.l.b16 %v924
      %v1096 = vunpack.c.h.b16 %v924
      %v1097 = vunpack.c.l.b16 %v925
      %v1098 = vunpack.c.h.b16 %v925
      %v1099 = vunpack.c.l.b16 %v926
      %v1100 = vunpack.c.h.b16 %v926
      %v1101 = vunpack.c.l.b16 %v927
      %v1102 = vunpack.c.h.b16 %v927
      %v1103 = vunpack.c.l.b16 %v928
      %v1104 = vunpack.c.h.b16 %v928
      %v1105 = vunpack.c.l.b16 %v929
      %v1106 = vunpack.c.h.b16 %v929
      %v1107 = vunpack.c.l.b16 %v930
      %v1108 = vunpack.c.h.b16 %v930
      %v1109 = vunpack.c.l.b16 %v931
      %v1110 = vunpack.c.h.b16 %v931
      %v1111 = vunpack.c.l.b16 %v932
      %v1112 = vunpack.c.h.b16 %v932
      %v1113 = vunpack.c.l.b16 %v933
      %v1114 = vunpack.c.h.b16 %v933
      %v1115 = vunpack.c.l.b16 %v934
      %v1116 = vunpack.c.h.b16 %v934
      %v1117 = vunpack.c.l.b16 %v935
      %v1118 = vunpack.c.h.b16 %v935
      %v1119 = vunpack.c.l.b16 %v936
      %v1120 = vunpack.c.h.b16 %v936
      %v1121 = vunpack.c.l.b16 %v937
      %v1122 = vunpack.c.h.b16 %v937
      %v1123 = vunpack.c.l.b16 %v938
      %v1124 = vunpack.c.h.b16 %v938
      %v1125 = vunpack.c.l.b16 %v939
      %v1126 = vunpack.c.h.b16 %v939
      %v1127 = vunpack.c.l.b16 %v940
      %v1128 = vunpack.c.h.b16 %v940
      %v1129 = vunpack.c.l.b16 %v941
      %v1130 = vunpack.c.h.b16 %v941
      %v1131 = vunpack.c.l.b16 %v942
      %v1132 = vunpack.c.h.b16 %v942
      %v1133 = vunpack.c.l.b16 %v943
      %v1134 = vunpack.c.h.b16 %v943
      %v1135 = vunpack.c.l.b16 %v944
      %v1136 = vunpack.c.h.b16 %v944
      %v1137 = vunpack.c.l.b16 %v945
      %v1138 = vunpack.c.h.b16 %v945
      %v1139 = vunpack.c.l.b16 %v946
      %v1140 = vunpack.c.h.b16 %v946
      %v1141 = vunpack.c.l.b16 %v947
      %v1142 = vunpack.c.h.b16 %v947
      %v1143 = vunpack.c.l.b16 %v948
      %v1144 = vunpack.c.h.b16 %v948
      %v1145 = vunpack.c.l.b16 %v949
      %v1146 = vunpack.c.h.b16 %v949
      %v1147 = vunpack.c.l.b16 %v950
      %v1148 = vunpack.c.h.b16 %v950
      %v1149 = vunpack.c.l.b16 %v951
      %v1150 = vunpack.c.h.b16 %v951
      %v1151 = vunpack.c.l.b16 %v952
      %v1152 = vunpack.c.h.b16 %v952
      %v1153 = vunpack.c.l.b16 %v953
      %v1154 = vunpack.c.h.b16 %v953
      %v1155 = vunpack.c.l.b16 %v954
      %v1156 = vunpack.c.h.b16 %v954
      %v1157 = vunpack.c.l.b16 %v955
      %v1158 = vunpack.c.h.b16 %v955
      %v1159 = vunpack.c.l.b16 %v956
      %v1160 = vunpack.c.h.b16 %v956
      %v1161 = vunpack.c.l.b16 %v957
      %v1162 = vunpack.c.h.b16 %v957
      %v1163 = vunpack.c.l.b16 %v958
      %v1164 = vunpack.c.h.b16 %v958
      %v1165 = vunpack.c.l.b16 %v959
      %v1166 = vunpack.c.h.b16 %v959
      %v1167 = vunpack.c.l.b16 %v960
      %v1168 = vunpack.c.h.b16 %v960
      %v1169 = vunpack.c.l.b16 %v961
      %v1170 = vunpack.c.h.b16 %v961
      %v1171 = vunpack.c.l.b16 %v962
      %v1172 = vunpack.c.h.b16 %v962
      %v1173 = vunpack.c.l.b16 %v963
      %v1174 = vunpack.c.h.b16 %v963
      %v1175 = vunpack.c.l.b16 %v964
      %v1176 = vunpack.c.h.b16 %v964
      %v1177 = vunpack.c.l.b16 %v965
      %v1178 = vunpack.c.h.b16 %v965
      %v1179 = vunpack.c.l.b16 %v966
      %v1180 = vunpack.c.h.b16 %v966
      %v1181 = vpack.c.b16 %v1057, %v1053
      %v1182 = vpack.c.b16 %v1058, %v1054
      %v1183 = vpack.c.b16 %v1059, %v1055
      %v1184 = vpack.c.b16 %v1060, %v1056
      %v1185 = vpack.c.b16 %v1065, %v1061
      %v1186 = vpack.c.b16 %v1066, %v1062
      %v1187 = vpack.c.b16 %v1067, %v1063
      %v1188 = vpack.c.b16 %v1068, %v1064
      %v1189 = vpack.c.b16 %v1073, %v1069
      %v1190 = vpack.c.b16 %v1074, %v1070
      %v1191 = vpack.c.b16 %v1075, %v1071
      %v1192 = vpack.c.b16 %v1076, %v1072
      %v1193 = vpack.c.b16 %v1081, %v1077
      %v1194 = vpack.c.b16 %v1082, %v1078
      %v1195 = vpack.c.b16 %v1083, %v1079
      %v1196 = vpack.c.b16 %v1084, %v1080
      %v1197 = vpack.c.b16 %v1089, %v1085
      %v1198 = vpack.c.b16 %v1090, %v1086
      %v1199 = vpack.c.b16 %v1091, %v1087
      %v1200 = vpack.c.b16 %v1092, %v1088
      %v1201 = vpack.c.b16 %v1097, %v1093
      %v1202 = vpack.c.b16 %v1098, %v1094
      %v1203 = vpack.c.b16 %v1099, %v1095
      %v1204 = vpack.c.b16 %v1100, %v1096
      %v1205 = vpack.c.b16 %v1105, %v1101
      %v1206 = vpack.c.b16 %v1106, %v1102
      %v1207 = vpack.c.b16 %v1107, %v1103
      %v1208 = vpack.c.b16 %v1108, %v1104
      %v1209 = vpack.c.b16 %v1113, %v1109
      %v1210 = vpack.c.b16 %v1114, %v1110
      %v1211 = vpack.c.b16 %v1115, %v1111
      %v1212 = vpack.c.b16 %v1116, %v1112
      %v1213 = vpack.c.b16 %v1121, %v1117
      %v1214 = vpack.c.b16 %v1122, %v1118
      %v1215 = vpack.c.b16 %v1123, %v1119
      %v1216 = vpack.c.b16 %v1124, %v1120
      %v1217 = vpack.c.b16 %v1129, %v1125
      %v1218 = vpack.c.b16 %v1130, %v1126
      %v1219 = vpack.c.b16 %v1131, %v1127
      %v1220 = vpack.c.b16 %v1132, %v1128
      %v1221 = vpack.c.b16 %v1137, %v1133
      %v1222 = vpack.c.b16 %v1138, %v1134
      %v1223 = vpack.c.b16 %v1139, %v1135
      %v1224 = vpack.c.b16 %v1140, %v1136
      %v1225 = vpack.c.b16 %v1145, %v1141
      %v1226 = vpack.c.b16 %v1146, %v1142
      %v1227 = vpack.c.b16 %v1147, %v1143
      %v1228 = vpack.c.b16 %v1148, %v1144
      %v1229 = vpack.c.b16 %v1153, %v1149
      %v1230 = vpack.c.b16 %v1154, %v1150
      %v1231 = vpack.c.b16 %v1155, %v1151
      %v1232 = vpack.c.b16 %v1156, %v1152
      %v1233 = vpack.c.b16 %v1161, %v1157
      %v1234 = vpack.c.b16 %v1162, %v1158
      %v1235 = vpack.c.b16 %v1163, %v1159
      %v1236 = vpack.c.b16 %v1164, %v1160
      %v1237 = vpack.c.b16 %v1169, %v1165
      %v1238 = vpack.c.b16 %v1170, %v1166
      %v1239 = vpack.c.b16 %v1171, %v1167
      %v1240 = vpack.c.b16 %v1172, %v1168
      %v1241 = vpack.c.b16 %v1177, %v1173
      %v1242 = vpack.c.b16 %v1178, %v1174
      %v1243 = vpack.c.b16 %v1179, %v1175
      %v1244 = vpack.c.b16 %v1180, %v1176
      %1309 = vmatprep.subr.bf16.mxu0 %v1182
      %1310 = vmatpush1.bf16.msra.mxu0 %v1181
      %1311 = vmatprep.subr.bf16.mxu0 %v1186
      %1312 = vmatpush1.bf16.msra.mxu0 %v1185
      %1313 = vmatprep.subr.bf16.mxu0 %v1190
      %1314 = vmatpush1.bf16.msra.mxu0 %v1189
      %1315 = vmatprep.subr.bf16.mxu0 %v1194
      %1316 = vmatpush1.bf16.msra.mxu0 %v1193
      %1317 = vmatprep.subr.bf16.mxu0 %v1198
      %1318 = vmatpush1.bf16.msra.mxu0 %v1197
      %1319 = vmatprep.subr.bf16.mxu0 %v1202
      %1320 = vmatpush1.bf16.msra.mxu0 %v1201
      %1321 = vmatprep.subr.bf16.mxu0 %v1206
      %1322 = vmatpush1.bf16.msra.mxu0 %v1205
      %1323 = vmatprep.subr.bf16.mxu0 %v1210
      %1324 = vmatpush1.bf16.msra.mxu0 %v1209
      %1325 = vmatprep.subr.bf16.mxu0 %v1214
      %1326 = vmatpush1.bf16.msra.mxu0 %v1213
      %1327 = vmatprep.subr.bf16.mxu0 %v1218
      %1328 = vmatpush1.bf16.msra.mxu0 %v1217
      %1329 = vmatprep.subr.bf16.mxu0 %v1222
      %1330 = vmatpush1.bf16.msra.mxu0 %v1221
      %1331 = vmatprep.subr.bf16.mxu0 %v1226
      %1332 = vmatpush1.bf16.msra.mxu0 %v1225
      %1333 = vmatprep.subr.bf16.mxu0 %v1230
      %1334 = vmatpush1.bf16.msra.mxu0 %v1229
      %1335 = vmatprep.subr.bf16.mxu0 %v1234
      %1336 = vmatpush1.bf16.msra.mxu0 %v1233
      %1337 = vmatprep.subr.bf16.mxu0 %v1238
      %1338 = vmatpush1.bf16.msra.mxu0 %v1237
      %1339 = vmatprep.subr.bf16.mxu0 %v1242
      %1340 = vmatpush1.bf16.msra.mxu0 %v1241
      %1341 = vmatprep.mubr.bf16.mxu0 %v900
      %1342 = vmatmul.mubr.bf16.gmra.mrb[0].mxu0 %v899
      %v1343 = vpop.f32.mrb[0].mxu0
      %v1344 = vadd.f32 %v972, %v1343
      %v1345 = vpop.f32.mrb[0].mxu0
      %v1346 = vadd.f32 %v976, %v1345
      %v1347 = vpop.f32.mrb[0].mxu0
      %v1348 = vadd.f32 %v972, %v1347
      %v1349 = vpop.f32.mrb[0].mxu0
      %v1350 = vadd.f32 %v976, %v1349
      %1351 = vmatprep.mubr.bf16.mxu0 %v902
      %1352 = vmatmul.mubr.bf16.gmra.mrb[0].mxu0 %v901
      %v1353 = vpop.f32.mrb[0].mxu0
      %v1354 = vadd.f32 %v972, %v1353
      %v1355 = vpop.f32.mrb[0].mxu0
      %v1356 = vadd.f32 %v976, %v1355
      %v1357 = vpop.f32.mrb[0].mxu0
      %v1358 = vadd.f32 %v972, %v1357
      %v1359 = vpop.f32.mrb[0].mxu0
      %v1360 = vadd.f32 %v976, %v1359
      %1361 = vdwg.mxu0
      %1362 = vmatprep.subr.bf16.mxu0 %v1184
      %1363 = vmatpush1.bf16.msra.mxu0 %v1183
      %1364 = vmatprep.subr.bf16.mxu0 %v1188
      %1365 = vmatpush1.bf16.msra.mxu0 %v1187
      %1366 = vmatprep.subr.bf16.mxu0 %v1192
      %1367 = vmatpush1.bf16.msra.mxu0 %v1191
      %1368 = vmatprep.subr.bf16.mxu0 %v1196
      %1369 = vmatpush1.bf16.msra.mxu0 %v1195
      %1370 = vmatprep.subr.bf16.mxu0 %v1200
      %1371 = vmatpush1.bf16.msra.mxu0 %v1199
      %1372 = vmatprep.subr.bf16.mxu0 %v1204
      %1373 = vmatpush1.bf16.msra.mxu0 %v1203
      %1374 = vmatprep.subr.bf16.mxu0 %v1208
      %1375 = vmatpush1.bf16.msra.mxu0 %v1207
      %1376 = vmatprep.subr.bf16.mxu0 %v1212
      %1377 = vmatpush1.bf16.msra.mxu0 %v1211
      %1378 = vmatprep.subr.bf16.mxu0 %v1216
      %1379 = vmatpush1.bf16.msra.mxu0 %v1215
      %1380 = vmatprep.subr.bf16.mxu0 %v1220
      %1381 = vmatpush1.bf16.msra.mxu0 %v1219
      %1382 = vmatprep.subr.bf16.mxu0 %v1224
      %1383 = vmatpush1.bf16.msra.mxu0 %v1223
      %1384 = vmatprep.subr.bf16.mxu0 %v1228
      %1385 = vmatpush1.bf16.msra.mxu0 %v1227
      %1386 = vmatprep.subr.bf16.mxu0 %v1232
      %1387 = vmatpush1.bf16.msra.mxu0 %v1231
      %1388 = vmatprep.subr.bf16.mxu0 %v1236
      %1389 = vmatpush1.bf16.msra.mxu0 %v1235
      %1390 = vmatprep.subr.bf16.mxu0 %v1240
      %1391 = vmatpush1.bf16.msra.mxu0 %v1239
      %1392 = vmatprep.subr.bf16.mxu0 %v1244
      %1393 = vmatpush1.bf16.msra.mxu0 %v1243
      %1394 = vmatprep.mubr.bf16.mxu0 %v900
      %1395 = vmatmul.mubr.bf16.gmra.mrb[0].mxu0 %v899
      %v1396 = vpop.f32.mrb[0].mxu0
      %v1397 = vadd.f32 %v980, %v1396
      %v1398 = vpop.f32.mrb[0].mxu0
      %v1399 = vadd.f32 %v984, %v1398
      %v1400 = vpop.f32.mrb[0].mxu0
      %v1401 = vadd.f32 %v980, %v1400
      %v1402 = vpop.f32.mrb[0].mxu0
      %v1403 = vadd.f32 %v984, %v1402
      %1404 = vmatprep.mubr.bf16.mxu0 %v902
      %1405 = vmatmul.mubr.bf16.gmra.mrb[0].mxu0 %v901
      %v1406 = vpop.f32.mrb[0].mxu0
      %v1407 = vadd.f32 %v980, %v1406
      %v1408 = vpop.f32.mrb[0].mxu0
      %v1409 = vadd.f32 %v984, %v1408
      %v1410 = vpop.f32.mrb[0].mxu0
      %v1411 = vadd.f32 %v980, %v1410
      %v1412 = vpop.f32.mrb[0].mxu0
      %v1413 = vadd.f32 %v984, %v1412
      %1414 = vdwg.mxu0
      %v1415 = vmax.f32 %v1344, 0.0
      %v1416 = vmax.f32 %v1346, 0.0
      %v1417 = vmax.f32 %v1397, 0.0
      %v1418 = vmax.f32 %v1399, 0.0
      %v1419 = vmax.f32 %v1348, 0.0
      %v1420 = vmax.f32 %v1350, 0.0
      %v1421 = vmax.f32 %v1401, 0.0
      %v1422 = vmax.f32 %v1403, 0.0
      %v1423 = vmax.f32 %v1354, 0.0
      %v1424 = vmax.f32 %v1356, 0.0
      %v1425 = vmax.f32 %v1407, 0.0
      %v1426 = vmax.f32 %v1409, 0.0
      %v1427 = vmax.f32 %v1358, 0.0
      %v1428 = vmax.f32 %v1360, 0.0
      %v1429 = vmax.f32 %v1411, 0.0
      %v1430 = vmax.f32 %v1413, 0.0
      %v1431 = vpack.c.bf16 %v1419, %v1415
      %v1432 = vpack.c.bf16 %v1420, %v1416
      %v1433 = vpack.c.bf16 %v1421, %v1417
      %v1434 = vpack.c.bf16 %v1422, %v1418
      %v1435 = vpack.c.bf16 %v1427, %v1423
      %v1436 = vpack.c.bf16 %v1428, %v1424
      %v1437 = vpack.c.bf16 %v1429, %v1425
      %v1438 = vpack.c.bf16 %v1430, %v1426
      %v1439 = vld [vmem:[%s7] sm:$0xff]
      %v1440 = vld [vmem:[%s7 + $0x8] sm:$0xff]
      %v1441 = vld [vmem:[%s7 + $0x10] sm:$0xff]
      %v1442 = vld [vmem:[%s7 + $0x18] sm:$0xff]
      %v1443 = vld [vmem:[%s7 + $0x20] sm:$0xff]
      %v1444 = vld [vmem:[%s7 + $0x28] sm:$0xff]
      %v1445 = vld [vmem:[%s7 + $0x30] sm:$0xff]
      %v1446 = vld [vmem:[%s7 + $0x38] sm:$0xff]
      %v1447 = vld [vmem:[%s7 + $0x40] sm:$0xff]
      %v1448 = vld [vmem:[%s7 + $0x48] sm:$0xff]
      %v1449 = vld [vmem:[%s7 + $0x50] sm:$0xff]
      %v1450 = vld [vmem:[%s7 + $0x58] sm:$0xff]
      %v1451 = vld [vmem:[%s7 + $0x60] sm:$0xff]
      %v1452 = vld [vmem:[%s7 + $0x68] sm:$0xff]
      %v1453 = vld [vmem:[%s7 + $0x70] sm:$0xff]
      %v1454 = vld [vmem:[%s7 + $0x78] sm:$0xff]
      %v1455 = vld [vmem:[%s7 + $0x80] sm:$0xff]
      %v1456 = vld [vmem:[%s7 + $0x88] sm:$0xff]
      %v1457 = vld [vmem:[%s7 + $0x90] sm:$0xff]
      %v1458 = vld [vmem:[%s7 + $0x98] sm:$0xff]
      %v1459 = vld [vmem:[%s7 + $0xa0] sm:$0xff]
      %v1460 = vld [vmem:[%s7 + $0xa8] sm:$0xff]
      %v1461 = vld [vmem:[%s7 + $0xb0] sm:$0xff]
      %v1462 = vld [vmem:[%s7 + $0xb8] sm:$0xff]
      %v1463 = vld [vmem:[%s7 + $0xc0] sm:$0xff]
      %v1464 = vld [vmem:[%s7 + $0xc8] sm:$0xff]
      %v1465 = vld [vmem:[%s7 + $0xd0] sm:$0xff]
      %v1466 = vld [vmem:[%s7 + $0xd8] sm:$0xff]
      %v1467 = vld [vmem:[%s7 + $0xe0] sm:$0xff]
      %v1468 = vld [vmem:[%s7 + $0xe8] sm:$0xff]
      %v1469 = vld [vmem:[%s7 + $0xf0] sm:$0xff]
      %v1470 = vld [vmem:[%s7 + $0xf8] sm:$0xff]
      %v1471 = vld [vmem:[%s7 + $0x100] sm:$0xff]
      %v1472 = vld [vmem:[%s7 + $0x108] sm:$0xff]
      %v1473 = vld [vmem:[%s7 + $0x110] sm:$0xff]
      %v1474 = vld [vmem:[%s7 + $0x118] sm:$0xff]
      %v1475 = vld [vmem:[%s7 + $0x120] sm:$0xff]
      %v1476 = vld [vmem:[%s7 + $0x128] sm:$0xff]
      %v1477 = vld [vmem:[%s7 + $0x130] sm:$0xff]
      %v1478 = vld [vmem:[%s7 + $0x138] sm:$0xff]
      %v1479 = vld [vmem:[%s7 + $0x140] sm:$0xff]
      %v1480 = vld [vmem:[%s7 + $0x148] sm:$0xff]
      %v1481 = vld [vmem:[%s7 + $0x150] sm:$0xff]
      %v1482 = vld [vmem:[%s7 + $0x158] sm:$0xff]
      %v1483 = vld [vmem:[%s7 + $0x160] sm:$0xff]
      %v1484 = vld [vmem:[%s7 + $0x168] sm:$0xff]
      %v1485 = vld [vmem:[%s7 + $0x170] sm:$0xff]
      %v1486 = vld [vmem:[%s7 + $0x178] sm:$0xff]
      %v1487 = vld [vmem:[%s7 + $0x180] sm:$0xff]
      %v1488 = vld [vmem:[%s7 + $0x188] sm:$0xff]
      %v1489 = vld [vmem:[%s7 + $0x190] sm:$0xff]
      %v1490 = vld [vmem:[%s7 + $0x198] sm:$0xff]
      %v1491 = vld [vmem:[%s7 + $0x1a0] sm:$0xff]
      %v1492 = vld [vmem:[%s7 + $0x1a8] sm:$0xff]
      %v1493 = vld [vmem:[%s7 + $0x1b0] sm:$0xff]
      %v1494 = vld [vmem:[%s7 + $0x1b8] sm:$0xff]
      %v1495 = vld [vmem:[%s7 + $0x1c0] sm:$0xff]
      %v1496 = vld [vmem:[%s7 + $0x1c8] sm:$0xff]
      %v1497 = vld [vmem:[%s7 + $0x1d0] sm:$0xff]
      %v1498 = vld [vmem:[%s7 + $0x1d8] sm:$0xff]
      %v1499 = vld [vmem:[%s7 + $0x1e0] sm:$0xff]
      %v1500 = vld [vmem:[%s7 + $0x1e8] sm:$0xff]
      %v1501 = vld [vmem:[%s7 + $0x1f0] sm:$0xff]
      %v1502 = vld [vmem:[%s7 + $0x1f8] sm:$0xff]
      %v1503 = vld [vmem:[%s7 + $0x200] sm:$0xff]
      %v1504 = vld [vmem:[%s7 + $0x208] sm:$0xff]
      %v1505 = vld [vmem:[%s7 + $0x210] sm:$0xff]
      %v1506 = vld [vmem:[%s7 + $0x218] sm:$0xff]
      %v1507 = vld [vmem:[%s7 + $0x220] sm:$0xff]
      %v1508 = vld [vmem:[%s7 + $0x228] sm:$0xff]
      %v1509 = vld [vmem:[%s7 + $0x230] sm:$0xff]
      %v1510 = vld [vmem:[%s7 + $0x238] sm:$0xff]
      %v1511 = vld [vmem:[%s7 + $0x240] sm:$0xff]
      %v1512 = vld [vmem:[%s7 + $0x248] sm:$0xff]
      %v1513 = vld [vmem:[%s7 + $0x250] sm:$0xff]
      %v1514 = vld [vmem:[%s7 + $0x258] sm:$0xff]
      %v1515 = vld [vmem:[%s7 + $0x260] sm:$0xff]
      %v1516 = vld [vmem:[%s7 + $0x268] sm:$0xff]
      %v1517 = vld [vmem:[%s7 + $0x270] sm:$0xff]
      %v1518 = vld [vmem:[%s7 + $0x278] sm:$0xff]
      %v1519 = vld [vmem:[%s7 + $0x280] sm:$0xff]
      %v1520 = vld [vmem:[%s7 + $0x288] sm:$0xff]
      %v1521 = vld [vmem:[%s7 + $0x290] sm:$0xff]
      %v1522 = vld [vmem:[%s7 + $0x298] sm:$0xff]
      %v1523 = vld [vmem:[%s7 + $0x2a0] sm:$0xff]
      %v1524 = vld [vmem:[%s7 + $0x2a8] sm:$0xff]
      %v1525 = vld [vmem:[%s7 + $0x2b0] sm:$0xff]
      %v1526 = vld [vmem:[%s7 + $0x2b8] sm:$0xff]
      %v1527 = vld [vmem:[%s7 + $0x2c0] sm:$0xff]
      %v1528 = vld [vmem:[%s7 + $0x2c8] sm:$0xff]
      %v1529 = vld [vmem:[%s7 + $0x2d0] sm:$0xff]
      %v1530 = vld [vmem:[%s7 + $0x2d8] sm:$0xff]
      %v1531 = vld [vmem:[%s7 + $0x2e0] sm:$0xff]
      %v1532 = vld [vmem:[%s7 + $0x2e8] sm:$0xff]
      %v1533 = vld [vmem:[%s7 + $0x2f0] sm:$0xff]
      %v1534 = vld [vmem:[%s7 + $0x2f8] sm:$0xff]
      %v1535 = vld [vmem:[%s7 + $0x300] sm:$0xff]
      %v1536 = vld [vmem:[%s7 + $0x308] sm:$0xff]
      %v1537 = vld [vmem:[%s7 + $0x310] sm:$0xff]
      %v1538 = vld [vmem:[%s7 + $0x318] sm:$0xff]
      %v1539 = vld [vmem:[%s7 + $0x320] sm:$0xff]
      %v1540 = vld [vmem:[%s7 + $0x328] sm:$0xff]
      %v1541 = vld [vmem:[%s7 + $0x330] sm:$0xff]
      %v1542 = vld [vmem:[%s7 + $0x338] sm:$0xff]
      %v1543 = vld [vmem:[%s7 + $0x340] sm:$0xff]
      %v1544 = vld [vmem:[%s7 + $0x348] sm:$0xff]
      %v1545 = vld [vmem:[%s7 + $0x350] sm:$0xff]
      %v1546 = vld [vmem:[%s7 + $0x358] sm:$0xff]
      %v1547 = vld [vmem:[%s7 + $0x360] sm:$0xff]
      %v1548 = vld [vmem:[%s7 + $0x368] sm:$0xff]
      %v1549 = vld [vmem:[%s7 + $0x370] sm:$0xff]
      %v1550 = vld [vmem:[%s7 + $0x378] sm:$0xff]
      %v1551 = vld [vmem:[%s7 + $0x380] sm:$0xff]
      %v1552 = vld [vmem:[%s7 + $0x388] sm:$0xff]
      %v1553 = vld [vmem:[%s7 + $0x390] sm:$0xff]
      %v1554 = vld [vmem:[%s7 + $0x398] sm:$0xff]
      %v1555 = vld [vmem:[%s7 + $0x3a0] sm:$0xff]
      %v1556 = vld [vmem:[%s7 + $0x3a8] sm:$0xff]
      %v1557 = vld [vmem:[%s7 + $0x3b0] sm:$0xff]
      %v1558 = vld [vmem:[%s7 + $0x3b8] sm:$0xff]
      %v1559 = vld [vmem:[%s7 + $0x3c0] sm:$0xff]
      %v1560 = vld [vmem:[%s7 + $0x3c8] sm:$0xff]
      %v1561 = vld [vmem:[%s7 + $0x3d0] sm:$0xff]
      %v1562 = vld [vmem:[%s7 + $0x3d8] sm:$0xff]
      %v1563 = vld [vmem:[%s7 + $0x3e0] sm:$0xff]
      %v1564 = vld [vmem:[%s7 + $0x3e8] sm:$0xff]
      %v1565 = vld [vmem:[%s7 + $0x3f0] sm:$0xff]
      %v1566 = vld [vmem:[%s7 + $0x3f8] sm:$0xff]
      %v1567 = vld [vmem:[%s7 + $0x400] sm:$0xff]
      %v1568 = vld [vmem:[%s7 + $0x408] sm:$0xff]
      %v1569 = vld [vmem:[%s7 + $0x410] sm:$0xff]
      %v1570 = vld [vmem:[%s7 + $0x418] sm:$0xff]
      %v1571 = vld [vmem:[%s7 + $0x420] sm:$0xff]
      %v1572 = vld [vmem:[%s7 + $0x428] sm:$0xff]
      %v1573 = vld [vmem:[%s7 + $0x430] sm:$0xff]
      %v1574 = vld [vmem:[%s7 + $0x438] sm:$0xff]
      %v1575 = vld [vmem:[%s7 + $0x440] sm:$0xff]
      %v1576 = vld [vmem:[%s7 + $0x448] sm:$0xff]
      %v1577 = vld [vmem:[%s7 + $0x450] sm:$0xff]
      %v1578 = vld [vmem:[%s7 + $0x458] sm:$0xff]
      %v1579 = vld [vmem:[%s7 + $0x460] sm:$0xff]
      %v1580 = vld [vmem:[%s7 + $0x468] sm:$0xff]
      %v1581 = vld [vmem:[%s7 + $0x470] sm:$0xff]
      %v1582 = vld [vmem:[%s7 + $0x478] sm:$0xff]
      %v1583 = vld [vmem:[%s7 + $0x480] sm:$0xff]
      %v1584 = vld [vmem:[%s7 + $0x488] sm:$0xff]
      %v1585 = vld [vmem:[%s7 + $0x490] sm:$0xff]
      %v1586 = vld [vmem:[%s7 + $0x498] sm:$0xff]
      %v1587 = vld [vmem:[%s7 + $0x4a0] sm:$0xff]
      %v1588 = vld [vmem:[%s7 + $0x4a8] sm:$0xff]
      %v1589 = vld [vmem:[%s7 + $0x4b0] sm:$0xff]
      %v1590 = vld [vmem:[%s7 + $0x4b8] sm:$0xff]
      %v1591 = vld [vmem:[%s7 + $0x4c0] sm:$0xff]
      %v1592 = vld [vmem:[%s7 + $0x4c8] sm:$0xff]
      %v1593 = vld [vmem:[%s7 + $0x4d0] sm:$0xff]
      %v1594 = vld [vmem:[%s7 + $0x4d8] sm:$0xff]
      %v1595 = vld [vmem:[%s7 + $0x4e0] sm:$0xff]
      %v1596 = vld [vmem:[%s7 + $0x4e8] sm:$0xff]
      %v1597 = vld [vmem:[%s7 + $0x4f0] sm:$0xff]
      %v1598 = vld [vmem:[%s7 + $0x4f8] sm:$0xff]
      %v1599 = vld [vmem:[%s7 + $0x500] sm:$0xff]
      %v1600 = vld [vmem:[%s7 + $0x508] sm:$0xff]
      %v1601 = vld [vmem:[%s7 + $0x510] sm:$0xff]
      %v1602 = vld [vmem:[%s7 + $0x518] sm:$0xff]
      %v1603 = vld [vmem:[%s7 + $0x520] sm:$0xff]
      %v1604 = vld [vmem:[%s7 + $0x528] sm:$0xff]
      %v1605 = vld [vmem:[%s7 + $0x530] sm:$0xff]
      %v1606 = vld [vmem:[%s7 + $0x538] sm:$0xff]
      %v1607 = vld [vmem:[%s7 + $0x540] sm:$0xff]
      %v1608 = vld [vmem:[%s7 + $0x548] sm:$0xff]
      %v1609 = vld [vmem:[%s7 + $0x550] sm:$0xff]
      %v1610 = vld [vmem:[%s7 + $0x558] sm:$0xff]
      %v1611 = vld [vmem:[%s7 + $0x560] sm:$0xff]
      %v1612 = vld [vmem:[%s7 + $0x568] sm:$0xff]
      %v1613 = vld [vmem:[%s7 + $0x570] sm:$0xff]
      %v1614 = vld [vmem:[%s7 + $0x578] sm:$0xff]
      %v1615 = vld [vmem:[%s7 + $0x580] sm:$0xff]
      %v1616 = vld [vmem:[%s7 + $0x588] sm:$0xff]
      %v1617 = vld [vmem:[%s7 + $0x590] sm:$0xff]
      %v1618 = vld [vmem:[%s7 + $0x598] sm:$0xff]
      %v1619 = vld [vmem:[%s7 + $0x5a0] sm:$0xff]
      %v1620 = vld [vmem:[%s7 + $0x5a8] sm:$0xff]
      %v1621 = vld [vmem:[%s7 + $0x5b0] sm:$0xff]
      %v1622 = vld [vmem:[%s7 + $0x5b8] sm:$0xff]
      %v1623 = vld [vmem:[%s7 + $0x5c0] sm:$0xff]
      %v1624 = vld [vmem:[%s7 + $0x5c8] sm:$0xff]
      %v1625 = vld [vmem:[%s7 + $0x5d0] sm:$0xff]
      %v1626 = vld [vmem:[%s7 + $0x5d8] sm:$0xff]
      %v1627 = vld [vmem:[%s7 + $0x5e0] sm:$0xff]
      %v1628 = vld [vmem:[%s7 + $0x5e8] sm:$0xff]
      %v1629 = vld [vmem:[%s7 + $0x5f0] sm:$0xff]
      %v1630 = vld [vmem:[%s7 + $0x5f8] sm:$0xff]
      %v1631 = vld [vmem:[%s7 + $0x600] sm:$0xff]
      %v1632 = vld [vmem:[%s7 + $0x608] sm:$0xff]
      %v1633 = vld [vmem:[%s7 + $0x610] sm:$0xff]
      %v1634 = vld [vmem:[%s7 + $0x618] sm:$0xff]
      %v1635 = vld [vmem:[%s7 + $0x620] sm:$0xff]
      %v1636 = vld [vmem:[%s7 + $0x628] sm:$0xff]
      %v1637 = vld [vmem:[%s7 + $0x630] sm:$0xff]
      %v1638 = vld [vmem:[%s7 + $0x638] sm:$0xff]
      %v1639 = vld [vmem:[%s7 + $0x640] sm:$0xff]
      %v1640 = vld [vmem:[%s7 + $0x648] sm:$0xff]
      %v1641 = vld [vmem:[%s7 + $0x650] sm:$0xff]
      %v1642 = vld [vmem:[%s7 + $0x658] sm:$0xff]
      %v1643 = vld [vmem:[%s7 + $0x660] sm:$0xff]
      %v1644 = vld [vmem:[%s7 + $0x668] sm:$0xff]
      %v1645 = vld [vmem:[%s7 + $0x670] sm:$0xff]
      %v1646 = vld [vmem:[%s7 + $0x678] sm:$0xff]
      %v1647 = vld [vmem:[%s7 + $0x680] sm:$0xff]
      %v1648 = vld [vmem:[%s7 + $0x688] sm:$0xff]
      %v1649 = vld [vmem:[%s7 + $0x690] sm:$0xff]
      %v1650 = vld [vmem:[%s7 + $0x698] sm:$0xff]
      %v1651 = vld [vmem:[%s7 + $0x6a0] sm:$0xff]
      %v1652 = vld [vmem:[%s7 + $0x6a8] sm:$0xff]
      %v1653 = vld [vmem:[%s7 + $0x6b0] sm:$0xff]
      %v1654 = vld [vmem:[%s7 + $0x6b8] sm:$0xff]
      %v1655 = vld [vmem:[%s7 + $0x6c0] sm:$0xff]
      %v1656 = vld [vmem:[%s7 + $0x6c8] sm:$0xff]
      %v1657 = vld [vmem:[%s7 + $0x6d0] sm:$0xff]
      %v1658 = vld [vmem:[%s7 + $0x6d8] sm:$0xff]
      %v1659 = vld [vmem:[%s7 + $0x6e0] sm:$0xff]
      %v1660 = vld [vmem:[%s7 + $0x6e8] sm:$0xff]
      %v1661 = vld [vmem:[%s7 + $0x6f0] sm:$0xff]
      %v1662 = vld [vmem:[%s7 + $0x6f8] sm:$0xff]
      %v1663 = vld [vmem:[%s7 + $0x700] sm:$0xff]
      %v1664 = vld [vmem:[%s7 + $0x708] sm:$0xff]
      %v1665 = vld [vmem:[%s7 + $0x710] sm:$0xff]
      %v1666 = vld [vmem:[%s7 + $0x718] sm:$0xff]
      %v1667 = vld [vmem:[%s7 + $0x720] sm:$0xff]
      %v1668 = vld [vmem:[%s7 + $0x728] sm:$0xff]
      %v1669 = vld [vmem:[%s7 + $0x730] sm:$0xff]
      %v1670 = vld [vmem:[%s7 + $0x738] sm:$0xff]
      %v1671 = vld [vmem:[%s7 + $0x740] sm:$0xff]
      %v1672 = vld [vmem:[%s7 + $0x748] sm:$0xff]
      %v1673 = vld [vmem:[%s7 + $0x750] sm:$0xff]
      %v1674 = vld [vmem:[%s7 + $0x758] sm:$0xff]
      %v1675 = vld [vmem:[%s7 + $0x760] sm:$0xff]
      %v1676 = vld [vmem:[%s7 + $0x768] sm:$0xff]
      %v1677 = vld [vmem:[%s7 + $0x770] sm:$0xff]
      %v1678 = vld [vmem:[%s7 + $0x778] sm:$0xff]
      %v1679 = vld [vmem:[%s7 + $0x780] sm:$0xff]
      %v1680 = vld [vmem:[%s7 + $0x788] sm:$0xff]
      %v1681 = vld [vmem:[%s7 + $0x790] sm:$0xff]
      %v1682 = vld [vmem:[%s7 + $0x798] sm:$0xff]
      %v1683 = vld [vmem:[%s7 + $0x7a0] sm:$0xff]
      %v1684 = vld [vmem:[%s7 + $0x7a8] sm:$0xff]
      %v1685 = vld [vmem:[%s7 + $0x7b0] sm:$0xff]
      %v1686 = vld [vmem:[%s7 + $0x7b8] sm:$0xff]
      %v1687 = vld [vmem:[%s7 + $0x7c0] sm:$0xff]
      %v1688 = vld [vmem:[%s7 + $0x7c8] sm:$0xff]
      %v1689 = vld [vmem:[%s7 + $0x7d0] sm:$0xff]
      %v1690 = vld [vmem:[%s7 + $0x7d8] sm:$0xff]
      %v1691 = vld [vmem:[%s7 + $0x7e0] sm:$0xff]
      %v1692 = vld [vmem:[%s7 + $0x7e8] sm:$0xff]
      %v1693 = vld [vmem:[%s7 + $0x7f0] sm:$0xff]
      %v1694 = vld [vmem:[%s7 + $0x7f8] sm:$0xff]
      %v1695 = vld [vmem:[%s8] sm:$0xff]
      %v1697 = vlaneseq
      %v1698 = vshrl.u32 %v1697, 7
      %v1699 = vsub.s32 0, %v1698
      %v1700 = vrot.slane %v1695, %v1699
      %v1701 = vlaneseq
      %v1702 = vshrl.u32 %v1701, 7
      %v1703 = vsub.s32 1, %v1702
      %v1704 = vrot.slane %v1695, %v1703
      %v1705 = vlaneseq
      %v1706 = vshrl.u32 %v1705, 7
      %v1707 = vsub.s32 2, %v1706
      %v1708 = vrot.slane %v1695, %v1707
      %v1709 = vlaneseq
      %v1710 = vshrl.u32 %v1709, 7
      %v1711 = vsub.s32 3, %v1710
      %v1712 = vrot.slane %v1695, %v1711
      %v1713 = vlaneseq
      %v1714 = vshrl.u32 %v1713, 7
      %v1715 = vsub.s32 4, %v1714
      %v1716 = vrot.slane %v1695, %v1715
      %v1717 = vlaneseq
      %v1718 = vshrl.u32 %v1717, 7
      %v1719 = vsub.s32 5, %v1718
      %v1720 = vrot.slane %v1695, %v1719
      %v1721 = vlaneseq
      %v1722 = vshrl.u32 %v1721, 7
      %v1723 = vsub.s32 6, %v1722
      %v1724 = vrot.slane %v1695, %v1723
      %v1725 = vlaneseq
      %v1726 = vshrl.u32 %v1725, 7
      %v1727 = vsub.s32 7, %v1726
      %v1728 = vrot.slane %v1695, %v1727
      %v1993 = vunpack.c.l.b16 %v1439
      %v1994 = vunpack.c.h.b16 %v1439
      %v1995 = vunpack.c.l.b16 %v1440
      %v1996 = vunpack.c.h.b16 %v1440
      %v1997 = vunpack.c.l.b16 %v1441
      %v1998 = vunpack.c.h.b16 %v1441
      %v1999 = vunpack.c.l.b16 %v1442
      %v2000 = vunpack.c.h.b16 %v1442
      %v2001 = vunpack.c.l.b16 %v1443
      %v2002 = vunpack.c.h.b16 %v1443
      %v2003 = vunpack.c.l.b16 %v1444
      %v2004 = vunpack.c.h.b16 %v1444
      %v2005 = vunpack.c.l.b16 %v1445
      %v2006 = vunpack.c.h.b16 %v1445
      %v2007 = vunpack.c.l.b16 %v1446
      %v2008 = vunpack.c.h.b16 %v1446
      %v2009 = vunpack.c.l.b16 %v1447
      %v2010 = vunpack.c.h.b16 %v1447
      %v2011 = vunpack.c.l.b16 %v1448
      %v2012 = vunpack.c.h.b16 %v1448
      %v2013 = vunpack.c.l.b16 %v1449
      %v2014 = vunpack.c.h.b16 %v1449
      %v2015 = vunpack.c.l.b16 %v1450
      %v2016 = vunpack.c.h.b16 %v1450
      %v2017 = vunpack.c.l.b16 %v1451
      %v2018 = vunpack.c.h.b16 %v1451
      %v2019 = vunpack.c.l.b16 %v1452
      %v2020 = vunpack.c.h.b16 %v1452
      %v2021 = vunpack.c.l.b16 %v1453
      %v2022 = vunpack.c.h.b16 %v1453
      %v2023 = vunpack.c.l.b16 %v1454
      %v2024 = vunpack.c.h.b16 %v1454
      %v2025 = vunpack.c.l.b16 %v1455
      %v2026 = vunpack.c.h.b16 %v1455
      %v2027 = vunpack.c.l.b16 %v1456
      %v2028 = vunpack.c.h.b16 %v1456
      %v2029 = vunpack.c.l.b16 %v1457
      %v2030 = vunpack.c.h.b16 %v1457
      %v2031 = vunpack.c.l.b16 %v1458
      %v2032 = vunpack.c.h.b16 %v1458
      %v2033 = vunpack.c.l.b16 %v1459
      %v2034 = vunpack.c.h.b16 %v1459
      %v2035 = vunpack.c.l.b16 %v1460
      %v2036 = vunpack.c.h.b16 %v1460
      %v2037 = vunpack.c.l.b16 %v1461
      %v2038 = vunpack.c.h.b16 %v1461
      %v2039 = vunpack.c.l.b16 %v1462
      %v2040 = vunpack.c.h.b16 %v1462
      %v2041 = vunpack.c.l.b16 %v1463
      %v2042 = vunpack.c.h.b16 %v1463
      %v2043 = vunpack.c.l.b16 %v1464
      %v2044 = vunpack.c.h.b16 %v1464
      %v2045 = vunpack.c.l.b16 %v1465
      %v2046 = vunpack.c.h.b16 %v1465
      %v2047 = vunpack.c.l.b16 %v1466
      %v2048 = vunpack.c.h.b16 %v1466
      %v2049 = vunpack.c.l.b16 %v1467
      %v2050 = vunpack.c.h.b16 %v1467
      %v2051 = vunpack.c.l.b16 %v1468
      %v2052 = vunpack.c.h.b16 %v1468
      %v2053 = vunpack.c.l.b16 %v1469
      %v2054 = vunpack.c.h.b16 %v1469
      %v2055 = vunpack.c.l.b16 %v1470
      %v2056 = vunpack.c.h.b16 %v1470
      %v2057 = vunpack.c.l.b16 %v1471
      %v2058 = vunpack.c.h.b16 %v1471
      %v2059 = vunpack.c.l.b16 %v1472
      %v2060 = vunpack.c.h.b16 %v1472
      %v2061 = vunpack.c.l.b16 %v1473
      %v2062 = vunpack.c.h.b16 %v1473
      %v2063 = vunpack.c.l.b16 %v1474
      %v2064 = vunpack.c.h.b16 %v1474
      %v2065 = vunpack.c.l.b16 %v1475
      %v2066 = vunpack.c.h.b16 %v1475
      %v2067 = vunpack.c.l.b16 %v1476
      %v2068 = vunpack.c.h.b16 %v1476
      %v2069 = vunpack.c.l.b16 %v1477
      %v2070 = vunpack.c.h.b16 %v1477
      %v2071 = vunpack.c.l.b16 %v1478
      %v2072 = vunpack.c.h.b16 %v1478
      %v2073 = vunpack.c.l.b16 %v1479
      %v2074 = vunpack.c.h.b16 %v1479
      %v2075 = vunpack.c.l.b16 %v1480
      %v2076 = vunpack.c.h.b16 %v1480
      %v2077 = vunpack.c.l.b16 %v1481
      %v2078 = vunpack.c.h.b16 %v1481
      %v2079 = vunpack.c.l.b16 %v1482
      %v2080 = vunpack.c.h.b16 %v1482
      %v2081 = vunpack.c.l.b16 %v1483
      %v2082 = vunpack.c.h.b16 %v1483
      %v2083 = vunpack.c.l.b16 %v1484
      %v2084 = vunpack.c.h.b16 %v1484
      %v2085 = vunpack.c.l.b16 %v1485
      %v2086 = vunpack.c.h.b16 %v1485
      %v2087 = vunpack.c.l.b16 %v1486
      %v2088 = vunpack.c.h.b16 %v1486
      %v2089 = vunpack.c.l.b16 %v1487
      %v2090 = vunpack.c.h.b16 %v1487
      %v2091 = vunpack.c.l.b16 %v1488
      %v2092 = vunpack.c.h.b16 %v1488
      %v2093 = vunpack.c.l.b16 %v1489
      %v2094 = vunpack.c.h.b16 %v1489
      %v2095 = vunpack.c.l.b16 %v1490
      %v2096 = vunpack.c.h.b16 %v1490
      %v2097 = vunpack.c.l.b16 %v1491
      %v2098 = vunpack.c.h.b16 %v1491
      %v2099 = vunpack.c.l.b16 %v1492
      %v2100 = vunpack.c.h.b16 %v1492
      %v2101 = vunpack.c.l.b16 %v1493
      %v2102 = vunpack.c.h.b16 %v1493
      %v2103 = vunpack.c.l.b16 %v1494
      %v2104 = vunpack.c.h.b16 %v1494
      %v2105 = vunpack.c.l.b16 %v1495
      %v2106 = vunpack.c.h.b16 %v1495
      %v2107 = vunpack.c.l.b16 %v1496
      %v2108 = vunpack.c.h.b16 %v1496
      %v2109 = vunpack.c.l.b16 %v1497
      %v2110 = vunpack.c.h.b16 %v1497
      %v2111 = vunpack.c.l.b16 %v1498
      %v2112 = vunpack.c.h.b16 %v1498
      %v2113 = vunpack.c.l.b16 %v1499
      %v2114 = vunpack.c.h.b16 %v1499
      %v2115 = vunpack.c.l.b16 %v1500
      %v2116 = vunpack.c.h.b16 %v1500
      %v2117 = vunpack.c.l.b16 %v1501
      %v2118 = vunpack.c.h.b16 %v1501
      %v2119 = vunpack.c.l.b16 %v1502
      %v2120 = vunpack.c.h.b16 %v1502
      %v2121 = vunpack.c.l.b16 %v1503
      %v2122 = vunpack.c.h.b16 %v1503
      %v2123 = vunpack.c.l.b16 %v1504
      %v2124 = vunpack.c.h.b16 %v1504
      %v2125 = vunpack.c.l.b16 %v1505
      %v2126 = vunpack.c.h.b16 %v1505
      %v2127 = vunpack.c.l.b16 %v1506
      %v2128 = vunpack.c.h.b16 %v1506
      %v2129 = vunpack.c.l.b16 %v1507
      %v2130 = vunpack.c.h.b16 %v1507
      %v2131 = vunpack.c.l.b16 %v1508
      %v2132 = vunpack.c.h.b16 %v1508
      %v2133 = vunpack.c.l.b16 %v1509
      %v2134 = vunpack.c.h.b16 %v1509
      %v2135 = vunpack.c.l.b16 %v1510
      %v2136 = vunpack.c.h.b16 %v1510
      %v2137 = vunpack.c.l.b16 %v1511
      %v2138 = vunpack.c.h.b16 %v1511
      %v2139 = vunpack.c.l.b16 %v1512
      %v2140 = vunpack.c.h.b16 %v1512
      %v2141 = vunpack.c.l.b16 %v1513
      %v2142 = vunpack.c.h.b16 %v1513
      %v2143 = vunpack.c.l.b16 %v1514
      %v2144 = vunpack.c.h.b16 %v1514
      %v2145 = vunpack.c.l.b16 %v1515
      %v2146 = vunpack.c.h.b16 %v1515
      %v2147 = vunpack.c.l.b16 %v1516
      %v2148 = vunpack.c.h.b16 %v1516
      %v2149 = vunpack.c.l.b16 %v1517
      %v2150 = vunpack.c.h.b16 %v1517
      %v2151 = vunpack.c.l.b16 %v1518
      %v2152 = vunpack.c.h.b16 %v1518
      %v2153 = vunpack.c.l.b16 %v1519
      %v2154 = vunpack.c.h.b16 %v1519
      %v2155 = vunpack.c.l.b16 %v1520
      %v2156 = vunpack.c.h.b16 %v1520
      %v2157 = vunpack.c.l.b16 %v1521
      %v2158 = vunpack.c.h.b16 %v1521
      %v2159 = vunpack.c.l.b16 %v1522
      %v2160 = vunpack.c.h.b16 %v1522
      %v2161 = vunpack.c.l.b16 %v1523
      %v2162 = vunpack.c.h.b16 %v1523
      %v2163 = vunpack.c.l.b16 %v1524
      %v2164 = vunpack.c.h.b16 %v1524
      %v2165 = vunpack.c.l.b16 %v1525
      %v2166 = vunpack.c.h.b16 %v1525
      %v2167 = vunpack.c.l.b16 %v1526
      %v2168 = vunpack.c.h.b16 %v1526
      %v2169 = vunpack.c.l.b16 %v1527
      %v2170 = vunpack.c.h.b16 %v1527
      %v2171 = vunpack.c.l.b16 %v1528
      %v2172 = vunpack.c.h.b16 %v1528
      %v2173 = vunpack.c.l.b16 %v1529
      %v2174 = vunpack.c.h.b16 %v1529
      %v2175 = vunpack.c.l.b16 %v1530
      %v2176 = vunpack.c.h.b16 %v1530
      %v2177 = vunpack.c.l.b16 %v1531
      %v2178 = vunpack.c.h.b16 %v1531
      %v2179 = vunpack.c.l.b16 %v1532
      %v2180 = vunpack.c.h.b16 %v1532
      %v2181 = vunpack.c.l.b16 %v1533
      %v2182 = vunpack.c.h.b16 %v1533
      %v2183 = vunpack.c.l.b16 %v1534
      %v2184 = vunpack.c.h.b16 %v1534
      %v2185 = vunpack.c.l.b16 %v1535
      %v2186 = vunpack.c.h.b16 %v1535
      %v2187 = vunpack.c.l.b16 %v1536
      %v2188 = vunpack.c.h.b16 %v1536
      %v2189 = vunpack.c.l.b16 %v1537
      %v2190 = vunpack.c.h.b16 %v1537
      %v2191 = vunpack.c.l.b16 %v1538
      %v2192 = vunpack.c.h.b16 %v1538
      %v2193 = vunpack.c.l.b16 %v1539
      %v2194 = vunpack.c.h.b16 %v1539
      %v2195 = vunpack.c.l.b16 %v1540
      %v2196 = vunpack.c.h.b16 %v1540
      %v2197 = vunpack.c.l.b16 %v1541
      %v2198 = vunpack.c.h.b16 %v1541
      %v2199 = vunpack.c.l.b16 %v1542
      %v2200 = vunpack.c.h.b16 %v1542
      %v2201 = vunpack.c.l.b16 %v1543
      %v2202 = vunpack.c.h.b16 %v1543
      %v2203 = vunpack.c.l.b16 %v1544
      %v2204 = vunpack.c.h.b16 %v1544
      %v2205 = vunpack.c.l.b16 %v1545
      %v2206 = vunpack.c.h.b16 %v1545
      %v2207 = vunpack.c.l.b16 %v1546
      %v2208 = vunpack.c.h.b16 %v1546
      %v2209 = vunpack.c.l.b16 %v1547
      %v2210 = vunpack.c.h.b16 %v1547
      %v2211 = vunpack.c.l.b16 %v1548
      %v2212 = vunpack.c.h.b16 %v1548
      %v2213 = vunpack.c.l.b16 %v1549
      %v2214 = vunpack.c.h.b16 %v1549
      %v2215 = vunpack.c.l.b16 %v1550
      %v2216 = vunpack.c.h.b16 %v1550
      %v2217 = vunpack.c.l.b16 %v1551
      %v2218 = vunpack.c.h.b16 %v1551
      %v2219 = vunpack.c.l.b16 %v1552
      %v2220 = vunpack.c.h.b16 %v1552
      %v2221 = vunpack.c.l.b16 %v1553
      %v2222 = vunpack.c.h.b16 %v1553
      %v2223 = vunpack.c.l.b16 %v1554
      %v2224 = vunpack.c.h.b16 %v1554
      %v2225 = vunpack.c.l.b16 %v1555
      %v2226 = vunpack.c.h.b16 %v1555
      %v2227 = vunpack.c.l.b16 %v1556
      %v2228 = vunpack.c.h.b16 %v1556
      %v2229 = vunpack.c.l.b16 %v1557
      %v2230 = vunpack.c.h.b16 %v1557
      %v2231 = vunpack.c.l.b16 %v1558
      %v2232 = vunpack.c.h.b16 %v1558
      %v2233 = vunpack.c.l.b16 %v1559
      %v2234 = vunpack.c.h.b16 %v1559
      %v2235 = vunpack.c.l.b16 %v1560
      %v2236 = vunpack.c.h.b16 %v1560
      %v2237 = vunpack.c.l.b16 %v1561
      %v2238 = vunpack.c.h.b16 %v1561
      %v2239 = vunpack.c.l.b16 %v1562
      %v2240 = vunpack.c.h.b16 %v1562
      %v2241 = vunpack.c.l.b16 %v1563
      %v2242 = vunpack.c.h.b16 %v1563
      %v2243 = vunpack.c.l.b16 %v1564
      %v2244 = vunpack.c.h.b16 %v1564
      %v2245 = vunpack.c.l.b16 %v1565
      %v2246 = vunpack.c.h.b16 %v1565
      %v2247 = vunpack.c.l.b16 %v1566
      %v2248 = vunpack.c.h.b16 %v1566
      %v2249 = vunpack.c.l.b16 %v1567
      %v2250 = vunpack.c.h.b16 %v1567
      %v2251 = vunpack.c.l.b16 %v1568
      %v2252 = vunpack.c.h.b16 %v1568
      %v2253 = vunpack.c.l.b16 %v1569
      %v2254 = vunpack.c.h.b16 %v1569
      %v2255 = vunpack.c.l.b16 %v1570
      %v2256 = vunpack.c.h.b16 %v1570
      %v2257 = vunpack.c.l.b16 %v1571
      %v2258 = vunpack.c.h.b16 %v1571
      %v2259 = vunpack.c.l.b16 %v1572
      %v2260 = vunpack.c.h.b16 %v1572
      %v2261 = vunpack.c.l.b16 %v1573
      %v2262 = vunpack.c.h.b16 %v1573
      %v2263 = vunpack.c.l.b16 %v1574
      %v2264 = vunpack.c.h.b16 %v1574
      %v2265 = vunpack.c.l.b16 %v1575
      %v2266 = vunpack.c.h.b16 %v1575
      %v2267 = vunpack.c.l.b16 %v1576
      %v2268 = vunpack.c.h.b16 %v1576
      %v2269 = vunpack.c.l.b16 %v1577
      %v2270 = vunpack.c.h.b16 %v1577
      %v2271 = vunpack.c.l.b16 %v1578
      %v2272 = vunpack.c.h.b16 %v1578
      %v2273 = vunpack.c.l.b16 %v1579
      %v2274 = vunpack.c.h.b16 %v1579
      %v2275 = vunpack.c.l.b16 %v1580
      %v2276 = vunpack.c.h.b16 %v1580
      %v2277 = vunpack.c.l.b16 %v1581
      %v2278 = vunpack.c.h.b16 %v1581
      %v2279 = vunpack.c.l.b16 %v1582
      %v2280 = vunpack.c.h.b16 %v1582
      %v2281 = vunpack.c.l.b16 %v1583
      %v2282 = vunpack.c.h.b16 %v1583
      %v2283 = vunpack.c.l.b16 %v1584
      %v2284 = vunpack.c.h.b16 %v1584
      %v2285 = vunpack.c.l.b16 %v1585
      %v2286 = vunpack.c.h.b16 %v1585
      %v2287 = vunpack.c.l.b16 %v1586
      %v2288 = vunpack.c.h.b16 %v1586
      %v2289 = vunpack.c.l.b16 %v1587
      %v2290 = vunpack.c.h.b16 %v1587
      %v2291 = vunpack.c.l.b16 %v1588
      %v2292 = vunpack.c.h.b16 %v1588
      %v2293 = vunpack.c.l.b16 %v1589
      %v2294 = vunpack.c.h.b16 %v1589
      %v2295 = vunpack.c.l.b16 %v1590
      %v2296 = vunpack.c.h.b16 %v1590
      %v2297 = vunpack.c.l.b16 %v1591
      %v2298 = vunpack.c.h.b16 %v1591
      %v2299 = vunpack.c.l.b16 %v1592
      %v2300 = vunpack.c.h.b16 %v1592
      %v2301 = vunpack.c.l.b16 %v1593
      %v2302 = vunpack.c.h.b16 %v1593
      %v2303 = vunpack.c.l.b16 %v1594
      %v2304 = vunpack.c.h.b16 %v1594
      %v2305 = vunpack.c.l.b16 %v1595
      %v2306 = vunpack.c.h.b16 %v1595
      %v2307 = vunpack.c.l.b16 %v1596
      %v2308 = vunpack.c.h.b16 %v1596
      %v2309 = vunpack.c.l.b16 %v1597
      %v2310 = vunpack.c.h.b16 %v1597
      %v2311 = vunpack.c.l.b16 %v1598
      %v2312 = vunpack.c.h.b16 %v1598
      %v2313 = vunpack.c.l.b16 %v1599
      %v2314 = vunpack.c.h.b16 %v1599
      %v2315 = vunpack.c.l.b16 %v1600
      %v2316 = vunpack.c.h.b16 %v1600
      %v2317 = vunpack.c.l.b16 %v1601
      %v2318 = vunpack.c.h.b16 %v1601
      %v2319 = vunpack.c.l.b16 %v1602
      %v2320 = vunpack.c.h.b16 %v1602
      %v2321 = vunpack.c.l.b16 %v1603
      %v2322 = vunpack.c.h.b16 %v1603
      %v2323 = vunpack.c.l.b16 %v1604
      %v2324 = vunpack.c.h.b16 %v1604
      %v2325 = vunpack.c.l.b16 %v1605
      %v2326 = vunpack.c.h.b16 %v1605
      %v2327 = vunpack.c.l.b16 %v1606
      %v2328 = vunpack.c.h.b16 %v1606
      %v2329 = vunpack.c.l.b16 %v1607
      %v2330 = vunpack.c.h.b16 %v1607
      %v2331 = vunpack.c.l.b16 %v1608
      %v2332 = vunpack.c.h.b16 %v1608
      %v2333 = vunpack.c.l.b16 %v1609
      %v2334 = vunpack.c.h.b16 %v1609
      %v2335 = vunpack.c.l.b16 %v1610
      %v2336 = vunpack.c.h.b16 %v1610
      %v2337 = vunpack.c.l.b16 %v1611
      %v2338 = vunpack.c.h.b16 %v1611
      %v2339 = vunpack.c.l.b16 %v1612
      %v2340 = vunpack.c.h.b16 %v1612
      %v2341 = vunpack.c.l.b16 %v1613
      %v2342 = vunpack.c.h.b16 %v1613
      %v2343 = vunpack.c.l.b16 %v1614
      %v2344 = vunpack.c.h.b16 %v1614
      %v2345 = vunpack.c.l.b16 %v1615
      %v2346 = vunpack.c.h.b16 %v1615
      %v2347 = vunpack.c.l.b16 %v1616
      %v2348 = vunpack.c.h.b16 %v1616
      %v2349 = vunpack.c.l.b16 %v1617
      %v2350 = vunpack.c.h.b16 %v1617
      %v2351 = vunpack.c.l.b16 %v1618
      %v2352 = vunpack.c.h.b16 %v1618
      %v2353 = vunpack.c.l.b16 %v1619
      %v2354 = vunpack.c.h.b16 %v1619
      %v2355 = vunpack.c.l.b16 %v1620
      %v2356 = vunpack.c.h.b16 %v1620
      %v2357 = vunpack.c.l.b16 %v1621
      %v2358 = vunpack.c.h.b16 %v1621
      %v2359 = vunpack.c.l.b16 %v1622
      %v2360 = vunpack.c.h.b16 %v1622
      %v2361 = vunpack.c.l.b16 %v1623
      %v2362 = vunpack.c.h.b16 %v1623
      %v2363 = vunpack.c.l.b16 %v1624
      %v2364 = vunpack.c.h.b16 %v1624
      %v2365 = vunpack.c.l.b16 %v1625
      %v2366 = vunpack.c.h.b16 %v1625
      %v2367 = vunpack.c.l.b16 %v1626
      %v2368 = vunpack.c.h.b16 %v1626
      %v2369 = vunpack.c.l.b16 %v1627
      %v2370 = vunpack.c.h.b16 %v1627
      %v2371 = vunpack.c.l.b16 %v1628
      %v2372 = vunpack.c.h.b16 %v1628
      %v2373 = vunpack.c.l.b16 %v1629
      %v2374 = vunpack.c.h.b16 %v1629
      %v2375 = vunpack.c.l.b16 %v1630
      %v2376 = vunpack.c.h.b16 %v1630
      %v2377 = vunpack.c.l.b16 %v1631
      %v2378 = vunpack.c.h.b16 %v1631
      %v2379 = vunpack.c.l.b16 %v1632
      %v2380 = vunpack.c.h.b16 %v1632
      %v2381 = vunpack.c.l.b16 %v1633
      %v2382 = vunpack.c.h.b16 %v1633
      %v2383 = vunpack.c.l.b16 %v1634
      %v2384 = vunpack.c.h.b16 %v1634
      %v2385 = vunpack.c.l.b16 %v1635
      %v2386 = vunpack.c.h.b16 %v1635
      %v2387 = vunpack.c.l.b16 %v1636
      %v2388 = vunpack.c.h.b16 %v1636
      %v2389 = vunpack.c.l.b16 %v1637
      %v2390 = vunpack.c.h.b16 %v1637
      %v2391 = vunpack.c.l.b16 %v1638
      %v2392 = vunpack.c.h.b16 %v1638
      %v2393 = vunpack.c.l.b16 %v1639
      %v2394 = vunpack.c.h.b16 %v1639
      %v2395 = vunpack.c.l.b16 %v1640
      %v2396 = vunpack.c.h.b16 %v1640
      %v2397 = vunpack.c.l.b16 %v1641
      %v2398 = vunpack.c.h.b16 %v1641
      %v2399 = vunpack.c.l.b16 %v1642
      %v2400 = vunpack.c.h.b16 %v1642
      %v2401 = vunpack.c.l.b16 %v1643
      %v2402 = vunpack.c.h.b16 %v1643
      %v2403 = vunpack.c.l.b16 %v1644
      %v2404 = vunpack.c.h.b16 %v1644
      %v2405 = vunpack.c.l.b16 %v1645
      %v2406 = vunpack.c.h.b16 %v1645
      %v2407 = vunpack.c.l.b16 %v1646
      %v2408 = vunpack.c.h.b16 %v1646
      %v2409 = vunpack.c.l.b16 %v1647
      %v2410 = vunpack.c.h.b16 %v1647
      %v2411 = vunpack.c.l.b16 %v1648
      %v2412 = vunpack.c.h.b16 %v1648
      %v2413 = vunpack.c.l.b16 %v1649
      %v2414 = vunpack.c.h.b16 %v1649
      %v2415 = vunpack.c.l.b16 %v1650
      %v2416 = vunpack.c.h.b16 %v1650
      %v2417 = vunpack.c.l.b16 %v1651
      %v2418 = vunpack.c.h.b16 %v1651
      %v2419 = vunpack.c.l.b16 %v1652
      %v2420 = vunpack.c.h.b16 %v1652
      %v2421 = vunpack.c.l.b16 %v1653
      %v2422 = vunpack.c.h.b16 %v1653
      %v2423 = vunpack.c.l.b16 %v1654
      %v2424 = vunpack.c.h.b16 %v1654
      %v2425 = vunpack.c.l.b16 %v1655
      %v2426 = vunpack.c.h.b16 %v1655
      %v2427 = vunpack.c.l.b16 %v1656
      %v2428 = vunpack.c.h.b16 %v1656
      %v2429 = vunpack.c.l.b16 %v1657
      %v2430 = vunpack.c.h.b16 %v1657
      %v2431 = vunpack.c.l.b16 %v1658
      %v2432 = vunpack.c.h.b16 %v1658
      %v2433 = vunpack.c.l.b16 %v1659
      %v2434 = vunpack.c.h.b16 %v1659
      %v2435 = vunpack.c.l.b16 %v1660
      %v2436 = vunpack.c.h.b16 %v1660
      %v2437 = vunpack.c.l.b16 %v1661
      %v2438 = vunpack.c.h.b16 %v1661
      %v2439 = vunpack.c.l.b16 %v1662
      %v2440 = vunpack.c.h.b16 %v1662
      %v2441 = vunpack.c.l.b16 %v1663
      %v2442 = vunpack.c.h.b16 %v1663
      %v2443 = vunpack.c.l.b16 %v1664
      %v2444 = vunpack.c.h.b16 %v1664
      %v2445 = vunpack.c.l.b16 %v1665
      %v2446 = vunpack.c.h.b16 %v1665
      %v2447 = vunpack.c.l.b16 %v1666
      %v2448 = vunpack.c.h.b16 %v1666
      %v2449 = vunpack.c.l.b16 %v1667
      %v2450 = vunpack.c.h.b16 %v1667
      %v2451 = vunpack.c.l.b16 %v1668
      %v2452 = vunpack.c.h.b16 %v1668
      %v2453 = vunpack.c.l.b16 %v1669
      %v2454 = vunpack.c.h.b16 %v1669
      %v2455 = vunpack.c.l.b16 %v1670
      %v2456 = vunpack.c.h.b16 %v1670
      %v2457 = vunpack.c.l.b16 %v1671
      %v2458 = vunpack.c.h.b16 %v1671
      %v2459 = vunpack.c.l.b16 %v1672
      %v2460 = vunpack.c.h.b16 %v1672
      %v2461 = vunpack.c.l.b16 %v1673
      %v2462 = vunpack.c.h.b16 %v1673
      %v2463 = vunpack.c.l.b16 %v1674
      %v2464 = vunpack.c.h.b16 %v1674
      %v2465 = vunpack.c.l.b16 %v1675
      %v2466 = vunpack.c.h.b16 %v1675
      %v2467 = vunpack.c.l.b16 %v1676
      %v2468 = vunpack.c.h.b16 %v1676
      %v2469 = vunpack.c.l.b16 %v1677
      %v2470 = vunpack.c.h.b16 %v1677
      %v2471 = vunpack.c.l.b16 %v1678
      %v2472 = vunpack.c.h.b16 %v1678
      %v2473 = vunpack.c.l.b16 %v1679
      %v2474 = vunpack.c.h.b16 %v1679
      %v2475 = vunpack.c.l.b16 %v1680
      %v2476 = vunpack.c.h.b16 %v1680
      %v2477 = vunpack.c.l.b16 %v1681
      %v2478 = vunpack.c.h.b16 %v1681
      %v2479 = vunpack.c.l.b16 %v1682
      %v2480 = vunpack.c.h.b16 %v1682
      %v2481 = vunpack.c.l.b16 %v1683
      %v2482 = vunpack.c.h.b16 %v1683
      %v2483 = vunpack.c.l.b16 %v1684
      %v2484 = vunpack.c.h.b16 %v1684
      %v2485 = vunpack.c.l.b16 %v1685
      %v2486 = vunpack.c.h.b16 %v1685
      %v2487 = vunpack.c.l.b16 %v1686
      %v2488 = vunpack.c.h.b16 %v1686
      %v2489 = vunpack.c.l.b16 %v1687
      %v2490 = vunpack.c.h.b16 %v1687
      %v2491 = vunpack.c.l.b16 %v1688
      %v2492 = vunpack.c.h.b16 %v1688
      %v2493 = vunpack.c.l.b16 %v1689
      %v2494 = vunpack.c.h.b16 %v1689
      %v2495 = vunpack.c.l.b16 %v1690
      %v2496 = vunpack.c.h.b16 %v1690
      %v2497 = vunpack.c.l.b16 %v1691
      %v2498 = vunpack.c.h.b16 %v1691
      %v2499 = vunpack.c.l.b16 %v1692
      %v2500 = vunpack.c.h.b16 %v1692
      %v2501 = vunpack.c.l.b16 %v1693
      %v2502 = vunpack.c.h.b16 %v1693
      %v2503 = vunpack.c.l.b16 %v1694
      %v2504 = vunpack.c.h.b16 %v1694
      %v2505 = vpack.c.b16 %v2001, %v1993
      %v2506 = vpack.c.b16 %v2002, %v1994
      %v2507 = vpack.c.b16 %v2003, %v1995
      %v2508 = vpack.c.b16 %v2004, %v1996
      %v2509 = vpack.c.b16 %v2005, %v1997
      %v2510 = vpack.c.b16 %v2006, %v1998
      %v2511 = vpack.c.b16 %v2007, %v1999
      %v2512 = vpack.c.b16 %v2008, %v2000
      %v2513 = vpack.c.b16 %v2017, %v2009
      %v2514 = vpack.c.b16 %v2018, %v2010
      %v2515 = vpack.c.b16 %v2019, %v2011
      %v2516 = vpack.c.b16 %v2020, %v2012
      %v2517 = vpack.c.b16 %v2021, %v2013
      %v2518 = vpack.c.b16 %v2022, %v2014
      %v2519 = vpack.c.b16 %v2023, %v2015
      %v2520 = vpack.c.b16 %v2024, %v2016
      %v2521 = vpack.c.b16 %v2033, %v2025
      %v2522 = vpack.c.b16 %v2034, %v2026
      %v2523 = vpack.c.b16 %v2035, %v2027
      %v2524 = vpack.c.b16 %v2036, %v2028
      %v2525 = vpack.c.b16 %v2037, %v2029
      %v2526 = vpack.c.b16 %v2038, %v2030
      %v2527 = vpack.c.b16 %v2039, %v2031
      %v2528 = vpack.c.b16 %v2040, %v2032
      %v2529 = vpack.c.b16 %v2049, %v2041
      %v2530 = vpack.c.b16 %v2050, %v2042
      %v2531 = vpack.c.b16 %v2051, %v2043
      %v2532 = vpack.c.b16 %v2052, %v2044
      %v2533 = vpack.c.b16 %v2053, %v2045
      %v2534 = vpack.c.b16 %v2054, %v2046
      %v2535 = vpack.c.b16 %v2055, %v2047
      %v2536 = vpack.c.b16 %v2056, %v2048
      %v2537 = vpack.c.b16 %v2065, %v2057
      %v2538 = vpack.c.b16 %v2066, %v2058
      %v2539 = vpack.c.b16 %v2067, %v2059
      %v2540 = vpack.c.b16 %v2068, %v2060
      %v2541 = vpack.c.b16 %v2069, %v2061
      %v2542 = vpack.c.b16 %v2070, %v2062
      %v2543 = vpack.c.b16 %v2071, %v2063
      %v2544 = vpack.c.b16 %v2072, %v2064
      %v2545 = vpack.c.b16 %v2081, %v2073
      %v2546 = vpack.c.b16 %v2082, %v2074
      %v2547 = vpack.c.b16 %v2083, %v2075
      %v2548 = vpack.c.b16 %v2084, %v2076
      %v2549 = vpack.c.b16 %v2085, %v2077
      %v2550 = vpack.c.b16 %v2086, %v2078
      %v2551 = vpack.c.b16 %v2087, %v2079
      %v2552 = vpack.c.b16 %v2088, %v2080
      %v2553 = vpack.c.b16 %v2097, %v2089
      %v2554 = vpack.c.b16 %v2098, %v2090
      %v2555 = vpack.c.b16 %v2099, %v2091
      %v2556 = vpack.c.b16 %v2100, %v2092
      %v2557 = vpack.c.b16 %v2101, %v2093
      %v2558 = vpack.c.b16 %v2102, %v2094
      %v2559 = vpack.c.b16 %v2103, %v2095
      %v2560 = vpack.c.b16 %v2104, %v2096
      %v2561 = vpack.c.b16 %v2113, %v2105
      %v2562 = vpack.c.b16 %v2114, %v2106
      %v2563 = vpack.c.b16 %v2115, %v2107
      %v2564 = vpack.c.b16 %v2116, %v2108
      %v2565 = vpack.c.b16 %v2117, %v2109
      %v2566 = vpack.c.b16 %v2118, %v2110
      %v2567 = vpack.c.b16 %v2119, %v2111
      %v2568 = vpack.c.b16 %v2120, %v2112
      %v2569 = vpack.c.b16 %v2129, %v2121
      %v2570 = vpack.c.b16 %v2130, %v2122
      %v2571 = vpack.c.b16 %v2131, %v2123
      %v2572 = vpack.c.b16 %v2132, %v2124
      %v2573 = vpack.c.b16 %v2133, %v2125
      %v2574 = vpack.c.b16 %v2134, %v2126
      %v2575 = vpack.c.b16 %v2135, %v2127
      %v2576 = vpack.c.b16 %v2136, %v2128
      %v2577 = vpack.c.b16 %v2145, %v2137
      %v2578 = vpack.c.b16 %v2146, %v2138
      %v2579 = vpack.c.b16 %v2147, %v2139
      %v2580 = vpack.c.b16 %v2148, %v2140
      %v2581 = vpack.c.b16 %v2149, %v2141
      %v2582 = vpack.c.b16 %v2150, %v2142
      %v2583 = vpack.c.b16 %v2151, %v2143
      %v2584 = vpack.c.b16 %v2152, %v2144
      %v2585 = vpack.c.b16 %v2161, %v2153
      %v2586 = vpack.c.b16 %v2162, %v2154
      %v2587 = vpack.c.b16 %v2163, %v2155
      %v2588 = vpack.c.b16 %v2164, %v2156
      %v2589 = vpack.c.b16 %v2165, %v2157
      %v2590 = vpack.c.b16 %v2166, %v2158
      %v2591 = vpack.c.b16 %v2167, %v2159
      %v2592 = vpack.c.b16 %v2168, %v2160
      %v2593 = vpack.c.b16 %v2177, %v2169
      %v2594 = vpack.c.b16 %v2178, %v2170
      %v2595 = vpack.c.b16 %v2179, %v2171
      %v2596 = vpack.c.b16 %v2180, %v2172
      %v2597 = vpack.c.b16 %v2181, %v2173
      %v2598 = vpack.c.b16 %v2182, %v2174
      %v2599 = vpack.c.b16 %v2183, %v2175
      %v2600 = vpack.c.b16 %v2184, %v2176
      %v2601 = vpack.c.b16 %v2193, %v2185
      %v2602 = vpack.c.b16 %v2194, %v2186
      %v2603 = vpack.c.b16 %v2195, %v2187
      %v2604 = vpack.c.b16 %v2196, %v2188
      %v2605 = vpack.c.b16 %v2197, %v2189
      %v2606 = vpack.c.b16 %v2198, %v2190
      %v2607 = vpack.c.b16 %v2199, %v2191
      %v2608 = vpack.c.b16 %v2200, %v2192
      %v2609 = vpack.c.b16 %v2209, %v2201
      %v2610 = vpack.c.b16 %v2210, %v2202
      %v2611 = vpack.c.b16 %v2211, %v2203
      %v2612 = vpack.c.b16 %v2212, %v2204
      %v2613 = vpack.c.b16 %v2213, %v2205
      %v2614 = vpack.c.b16 %v2214, %v2206
      %v2615 = vpack.c.b16 %v2215, %v2207
      %v2616 = vpack.c.b16 %v2216, %v2208
      %v2617 = vpack.c.b16 %v2225, %v2217
      %v2618 = vpack.c.b16 %v2226, %v2218
      %v2619 = vpack.c.b16 %v2227, %v2219
      %v2620 = vpack.c.b16 %v2228, %v2220
      %v2621 = vpack.c.b16 %v2229, %v2221
      %v2622 = vpack.c.b16 %v2230, %v2222
      %v2623 = vpack.c.b16 %v2231, %v2223
      %v2624 = vpack.c.b16 %v2232, %v2224
      %v2625 = vpack.c.b16 %v2241, %v2233
      %v2626 = vpack.c.b16 %v2242, %v2234
      %v2627 = vpack.c.b16 %v2243, %v2235
      %v2628 = vpack.c.b16 %v2244, %v2236
      %v2629 = vpack.c.b16 %v2245, %v2237
      %v2630 = vpack.c.b16 %v2246, %v2238
      %v2631 = vpack.c.b16 %v2247, %v2239
      %v2632 = vpack.c.b16 %v2248, %v2240
      %v2633 = vpack.c.b16 %v2257, %v2249
      %v2634 = vpack.c.b16 %v2258, %v2250
      %v2635 = vpack.c.b16 %v2259, %v2251
      %v2636 = vpack.c.b16 %v2260, %v2252
      %v2637 = vpack.c.b16 %v2261, %v2253
      %v2638 = vpack.c.b16 %v2262, %v2254
      %v2639 = vpack.c.b16 %v2263, %v2255
      %v2640 = vpack.c.b16 %v2264, %v2256
      %v2641 = vpack.c.b16 %v2273, %v2265
      %v2642 = vpack.c.b16 %v2274, %v2266
      %v2643 = vpack.c.b16 %v2275, %v2267
      %v2644 = vpack.c.b16 %v2276, %v2268
      %v2645 = vpack.c.b16 %v2277, %v2269
      %v2646 = vpack.c.b16 %v2278, %v2270
      %v2647 = vpack.c.b16 %v2279, %v2271
      %v2648 = vpack.c.b16 %v2280, %v2272
      %v2649 = vpack.c.b16 %v2289, %v2281
      %v2650 = vpack.c.b16 %v2290, %v2282
      %v2651 = vpack.c.b16 %v2291, %v2283
      %v2652 = vpack.c.b16 %v2292, %v2284
      %v2653 = vpack.c.b16 %v2293, %v2285
      %v2654 = vpack.c.b16 %v2294, %v2286
      %v2655 = vpack.c.b16 %v2295, %v2287
      %v2656 = vpack.c.b16 %v2296, %v2288
      %v2657 = vpack.c.b16 %v2305, %v2297
      %v2658 = vpack.c.b16 %v2306, %v2298
      %v2659 = vpack.c.b16 %v2307, %v2299
      %v2660 = vpack.c.b16 %v2308, %v2300
      %v2661 = vpack.c.b16 %v2309, %v2301
      %v2662 = vpack.c.b16 %v2310, %v2302
      %v2663 = vpack.c.b16 %v2311, %v2303
      %v2664 = vpack.c.b16 %v2312, %v2304
      %v2665 = vpack.c.b16 %v2321, %v2313
      %v2666 = vpack.c.b16 %v2322, %v2314
      %v2667 = vpack.c.b16 %v2323, %v2315
      %v2668 = vpack.c.b16 %v2324, %v2316
      %v2669 = vpack.c.b16 %v2325, %v2317
      %v2670 = vpack.c.b16 %v2326, %v2318
      %v2671 = vpack.c.b16 %v2327, %v2319
      %v2672 = vpack.c.b16 %v2328, %v2320
      %v2673 = vpack.c.b16 %v2337, %v2329
      %v2674 = vpack.c.b16 %v2338, %v2330
      %v2675 = vpack.c.b16 %v2339, %v2331
      %v2676 = vpack.c.b16 %v2340, %v2332
      %v2677 = vpack.c.b16 %v2341, %v2333
      %v2678 = vpack.c.b16 %v2342, %v2334
      %v2679 = vpack.c.b16 %v2343, %v2335
      %v2680 = vpack.c.b16 %v2344, %v2336
      %v2681 = vpack.c.b16 %v2353, %v2345
      %v2682 = vpack.c.b16 %v2354, %v2346
      %v2683 = vpack.c.b16 %v2355, %v2347
      %v2684 = vpack.c.b16 %v2356, %v2348
      %v2685 = vpack.c.b16 %v2357, %v2349
      %v2686 = vpack.c.b16 %v2358, %v2350
      %v2687 = vpack.c.b16 %v2359, %v2351
      %v2688 = vpack.c.b16 %v2360, %v2352
      %v2689 = vpack.c.b16 %v2369, %v2361
      %v2690 = vpack.c.b16 %v2370, %v2362
      %v2691 = vpack.c.b16 %v2371, %v2363
      %v2692 = vpack.c.b16 %v2372, %v2364
      %v2693 = vpack.c.b16 %v2373, %v2365
      %v2694 = vpack.c.b16 %v2374, %v2366
      %v2695 = vpack.c.b16 %v2375, %v2367
      %v2696 = vpack.c.b16 %v2376, %v2368
      %v2697 = vpack.c.b16 %v2385, %v2377
      %v2698 = vpack.c.b16 %v2386, %v2378
      %v2699 = vpack.c.b16 %v2387, %v2379
      %v2700 = vpack.c.b16 %v2388, %v2380
      %v2701 = vpack.c.b16 %v2389, %v2381
      %v2702 = vpack.c.b16 %v2390, %v2382
      %v2703 = vpack.c.b16 %v2391, %v2383
      %v2704 = vpack.c.b16 %v2392, %v2384
      %v2705 = vpack.c.b16 %v2401, %v2393
      %v2706 = vpack.c.b16 %v2402, %v2394
      %v2707 = vpack.c.b16 %v2403, %v2395
      %v2708 = vpack.c.b16 %v2404, %v2396
      %v2709 = vpack.c.b16 %v2405, %v2397
      %v2710 = vpack.c.b16 %v2406, %v2398
      %v2711 = vpack.c.b16 %v2407, %v2399
      %v2712 = vpack.c.b16 %v2408, %v2400
      %v2713 = vpack.c.b16 %v2417, %v2409
      %v2714 = vpack.c.b16 %v2418, %v2410
      %v2715 = vpack.c.b16 %v2419, %v2411
      %v2716 = vpack.c.b16 %v2420, %v2412
      %v2717 = vpack.c.b16 %v2421, %v2413
      %v2718 = vpack.c.b16 %v2422, %v2414
      %v2719 = vpack.c.b16 %v2423, %v2415
      %v2720 = vpack.c.b16 %v2424, %v2416
      %v2721 = vpack.c.b16 %v2433, %v2425
      %v2722 = vpack.c.b16 %v2434, %v2426
      %v2723 = vpack.c.b16 %v2435, %v2427
      %v2724 = vpack.c.b16 %v2436, %v2428
      %v2725 = vpack.c.b16 %v2437, %v2429
      %v2726 = vpack.c.b16 %v2438, %v2430
      %v2727 = vpack.c.b16 %v2439, %v2431
      %v2728 = vpack.c.b16 %v2440, %v2432
      %v2729 = vpack.c.b16 %v2449, %v2441
      %v2730 = vpack.c.b16 %v2450, %v2442
      %v2731 = vpack.c.b16 %v2451, %v2443
      %v2732 = vpack.c.b16 %v2452, %v2444
      %v2733 = vpack.c.b16 %v2453, %v2445
      %v2734 = vpack.c.b16 %v2454, %v2446
      %v2735 = vpack.c.b16 %v2455, %v2447
      %v2736 = vpack.c.b16 %v2456, %v2448
      %v2737 = vpack.c.b16 %v2465, %v2457
      %v2738 = vpack.c.b16 %v2466, %v2458
      %v2739 = vpack.c.b16 %v2467, %v2459
      %v2740 = vpack.c.b16 %v2468, %v2460
      %v2741 = vpack.c.b16 %v2469, %v2461
      %v2742 = vpack.c.b16 %v2470, %v2462
      %v2743 = vpack.c.b16 %v2471, %v2463
      %v2744 = vpack.c.b16 %v2472, %v2464
      %v2745 = vpack.c.b16 %v2481, %v2473
      %v2746 = vpack.c.b16 %v2482, %v2474
      %v2747 = vpack.c.b16 %v2483, %v2475
      %v2748 = vpack.c.b16 %v2484, %v2476
      %v2749 = vpack.c.b16 %v2485, %v2477
      %v2750 = vpack.c.b16 %v2486, %v2478
      %v2751 = vpack.c.b16 %v2487, %v2479
      %v2752 = vpack.c.b16 %v2488, %v2480
      %v2753 = vpack.c.b16 %v2497, %v2489
      %v2754 = vpack.c.b16 %v2498, %v2490
      %v2755 = vpack.c.b16 %v2499, %v2491
      %v2756 = vpack.c.b16 %v2500, %v2492
      %v2757 = vpack.c.b16 %v2501, %v2493
      %v2758 = vpack.c.b16 %v2502, %v2494
      %v2759 = vpack.c.b16 %v2503, %v2495
      %v2760 = vpack.c.b16 %v2504, %v2496
      %3017 = vmatprep.subr.bf16.mxu0 %v2506
      %3018 = vmatpush1.bf16.msra.mxu0 %v2505
      %3019 = vmatprep.subr.bf16.mxu0 %v2514
      %3020 = vmatpush1.bf16.msra.mxu0 %v2513
      %3021 = vmatprep.subr.bf16.mxu0 %v2522
      %3022 = vmatpush1.bf16.msra.mxu0 %v2521
      %3023 = vmatprep.subr.bf16.mxu0 %v2530
      %3024 = vmatpush1.bf16.msra.mxu0 %v2529
      %3025 = vmatprep.subr.bf16.mxu0 %v2538
      %3026 = vmatpush1.bf16.msra.mxu0 %v2537
      %3027 = vmatprep.subr.bf16.mxu0 %v2546
      %3028 = vmatpush1.bf16.msra.mxu0 %v2545
      %3029 = vmatprep.subr.bf16.mxu0 %v2554
      %3030 = vmatpush1.bf16.msra.mxu0 %v2553
      %3031 = vmatprep.subr.bf16.mxu0 %v2562
      %3032 = vmatpush1.bf16.msra.mxu0 %v2561
      %3033 = vmatprep.subr.bf16.mxu0 %v2570
      %3034 = vmatpush1.bf16.msra.mxu0 %v2569
      %3035 = vmatprep.subr.bf16.mxu0 %v2578
      %3036 = vmatpush1.bf16.msra.mxu0 %v2577
      %3037 = vmatprep.subr.bf16.mxu0 %v2586
      %3038 = vmatpush1.bf16.msra.mxu0 %v2585
      %3039 = vmatprep.subr.bf16.mxu0 %v2594
      %3040 = vmatpush1.bf16.msra.mxu0 %v2593
      %3041 = vmatprep.subr.bf16.mxu0 %v2602
      %3042 = vmatpush1.bf16.msra.mxu0 %v2601
      %3043 = vmatprep.subr.bf16.mxu0 %v2610
      %3044 = vmatpush1.bf16.msra.mxu0 %v2609
      %3045 = vmatprep.subr.bf16.mxu0 %v2618
      %3046 = vmatpush1.bf16.msra.mxu0 %v2617
      %3047 = vmatprep.subr.bf16.mxu0 %v2626
      %3048 = vmatpush1.bf16.msra.mxu0 %v2625
      %3049 = vmatprep.mubr.bf16.mxu0 %v1432
      %3050 = vmatmul.mubr.bf16.gmra.mrb[0].mxu0 %v1431
      %v3051 = vpop.f32.mrb[0].mxu0
      %v3052 = vadd.f32 %v1700, %v3051
      %v3053 = vpop.f32.mrb[0].mxu0
      %v3054 = vadd.f32 %v1704, %v3053
      %v3055 = vpop.f32.mrb[0].mxu0
      %v3056 = vadd.f32 %v1700, %v3055
      %v3057 = vpop.f32.mrb[0].mxu0
      %v3058 = vadd.f32 %v1704, %v3057
      %3059 = vmatprep.mubr.bf16.mxu0 %v1436
      %3060 = vmatmul.mubr.bf16.gmra.mrb[0].mxu0 %v1435
      %v3061 = vpop.f32.mrb[0].mxu0
      %v3062 = vadd.f32 %v1700, %v3061
      %v3063 = vpop.f32.mrb[0].mxu0
      %v3064 = vadd.f32 %v1704, %v3063
      %v3065 = vpop.f32.mrb[0].mxu0
      %v3066 = vadd.f32 %v1700, %v3065
      %v3067 = vpop.f32.mrb[0].mxu0
      %v3068 = vadd.f32 %v1704, %v3067
      %3069 = vdwg.mxu0
      %3070 = vmatprep.subr.bf16.mxu0 %v2634
      %3071 = vmatpush1.bf16.msra.mxu0 %v2633
      %3072 = vmatprep.subr.bf16.mxu0 %v2642
      %3073 = vmatpush1.bf16.msra.mxu0 %v2641
      %3074 = vmatprep.subr.bf16.mxu0 %v2650
      %3075 = vmatpush1.bf16.msra.mxu0 %v2649
      %3076 = vmatprep.subr.bf16.mxu0 %v2658
      %3077 = vmatpush1.bf16.msra.mxu0 %v2657
      %3078 = vmatprep.subr.bf16.mxu0 %v2666
      %3079 = vmatpush1.bf16.msra.mxu0 %v2665
      %3080 = vmatprep.subr.bf16.mxu0 %v2674
      %3081 = vmatpush1.bf16.msra.mxu0 %v2673
      %3082 = vmatprep.subr.bf16.mxu0 %v2682
      %3083 = vmatpush1.bf16.msra.mxu0 %v2681
      %3084 = vmatprep.subr.bf16.mxu0 %v2690
      %3085 = vmatpush1.bf16.msra.mxu0 %v2689
      %3086 = vmatprep.subr.bf16.mxu0 %v2698
      %3087 = vmatpush1.bf16.msra.mxu0 %v2697
      %3088 = vmatprep.subr.bf16.mxu0 %v2706
      %3089 = vmatpush1.bf16.msra.mxu0 %v2705
      %3090 = vmatprep.subr.bf16.mxu0 %v2714
      %3091 = vmatpush1.bf16.msra.mxu0 %v2713
      %3092 = vmatprep.subr.bf16.mxu0 %v2722
      %3093 = vmatpush1.bf16.msra.mxu0 %v2721
      %3094 = vmatprep.subr.bf16.mxu0 %v2730
      %3095 = vmatpush1.bf16.msra.mxu0 %v2729
      %3096 = vmatprep.subr.bf16.mxu0 %v2738
      %3097 = vmatpush1.bf16.msra.mxu0 %v2737
      %3098 = vmatprep.subr.bf16.mxu0 %v2746
      %3099 = vmatpush1.bf16.msra.mxu0 %v2745
      %3100 = vmatprep.subr.bf16.mxu0 %v2754
      %3101 = vmatpush1.bf16.msra.mxu0 %v2753
      %3102 = vmatprep.mubr.bf16.mxu0 %v1434
      %3103 = vmatmul.mubr.bf16.gmra.mrb[0].mxu0 %v1433
      %v3104 = vpop.f32.mrb[0].mxu0
      %v3105 = vadd.f32 %v3052, %v3104
      %v3106 = vpop.f32.mrb[0].mxu0
      %v3107 = vadd.f32 %v3054, %v3106
      %v3108 = vpop.f32.mrb[0].mxu0
      %v3109 = vadd.f32 %v3056, %v3108
      %v3110 = vpop.f32.mrb[0].mxu0
      %v3111 = vadd.f32 %v3058, %v3110
      %3112 = vmatprep.mubr.bf16.mxu0 %v1438
      %3113 = vmatmul.mubr.bf16.gmra.mrb[0].mxu0 %v1437
      %v3114 = vpop.f32.mrb[0].mxu0
      %v3115 = vadd.f32 %v3062, %v3114
      %v3116 = vpop.f32.mrb[0].mxu0
      %v3117 = vadd.f32 %v3064, %v3116
      %v3118 = vpop.f32.mrb[0].mxu0
      %v3119 = vadd.f32 %v3066, %v3118
      %v3120 = vpop.f32.mrb[0].mxu0
      %v3121 = vadd.f32 %v3068, %v3120
      %3122 = vdwg.mxu0
      %3123 = vmatprep.subr.bf16.mxu0 %v2508
      %3124 = vmatpush1.bf16.msra.mxu0 %v2507
      %3125 = vmatprep.subr.bf16.mxu0 %v2516
      %3126 = vmatpush1.bf16.msra.mxu0 %v2515
      %3127 = vmatprep.subr.bf16.mxu0 %v2524
      %3128 = vmatpush1.bf16.msra.mxu0 %v2523
      %3129 = vmatprep.subr.bf16.mxu0 %v2532
      %3130 = vmatpush1.bf16.msra.mxu0 %v2531
      %3131 = vmatprep.subr.bf16.mxu0 %v2540
      %3132 = vmatpush1.bf16.msra.mxu0 %v2539
      %3133 = vmatprep.subr.bf16.mxu0 %v2548
      %3134 = vmatpush1.bf16.msra.mxu0 %v2547
      %3135 = vmatprep.subr.bf16.mxu0 %v2556
      %3136 = vmatpush1.bf16.msra.mxu0 %v2555
      %3137 = vmatprep.subr.bf16.mxu0 %v2564
      %3138 = vmatpush1.bf16.msra.mxu0 %v2563
      %3139 = vmatprep.subr.bf16.mxu0 %v2572
      %3140 = vmatpush1.bf16.msra.mxu0 %v2571
      %3141 = vmatprep.subr.bf16.mxu0 %v2580
      %3142 = vmatpush1.bf16.msra.mxu0 %v2579
      %3143 = vmatprep.subr.bf16.mxu0 %v2588
      %3144 = vmatpush1.bf16.msra.mxu0 %v2587
      %3145 = vmatprep.subr.bf16.mxu0 %v2596
      %3146 = vmatpush1.bf16.msra.mxu0 %v2595
      %3147 = vmatprep.subr.bf16.mxu0 %v2604
      %3148 = vmatpush1.bf16.msra.mxu0 %v2603
      %3149 = vmatprep.subr.bf16.mxu0 %v2612
      %3150 = vmatpush1.bf16.msra.mxu0 %v2611
      %3151 = vmatprep.subr.bf16.mxu0 %v2620
      %3152 = vmatpush1.bf16.msra.mxu0 %v2619
      %3153 = vmatprep.subr.bf16.mxu0 %v2628
      %3154 = vmatpush1.bf16.msra.mxu0 %v2627
      %3155 = vmatprep.mubr.bf16.mxu0 %v1432
      %3156 = vmatmul.mubr.bf16.gmra.mrb[0].mxu0 %v1431
      %v3157 = vpop.f32.mrb[0].mxu0
      %v3158 = vadd.f32 %v1708, %v3157
      %v3159 = vpop.f32.mrb[0].mxu0
      %v3160 = vadd.f32 %v1712, %v3159
      %v3161 = vpop.f32.mrb[0].mxu0
      %v3162 = vadd.f32 %v1708, %v3161
      %v3163 = vpop.f32.mrb[0].mxu0
      %v3164 = vadd.f32 %v1712, %v3163
      %3165 = vmatprep.mubr.bf16.mxu0 %v1436
      %3166 = vmatmul.mubr.bf16.gmra.mrb[0].mxu0 %v1435
      %v3167 = vpop.f32.mrb[0].mxu0
      %v3168 = vadd.f32 %v1708, %v3167
      %v3169 = vpop.f32.mrb[0].mxu0
      %v3170 = vadd.f32 %v1712, %v3169
      %v3171 = vpop.f32.mrb[0].mxu0
      %v3172 = vadd.f32 %v1708, %v3171
      %v3173 = vpop.f32.mrb[0].mxu0
      %v3174 = vadd.f32 %v1712, %v3173
      %3175 = vdwg.mxu0
      %3176 = vmatprep.subr.bf16.mxu0 %v2636
      %3177 = vmatpush1.bf16.msra.mxu0 %v2635
      %3178 = vmatprep.subr.bf16.mxu0 %v2644
      %3179 = vmatpush1.bf16.msra.mxu0 %v2643
      %3180 = vmatprep.subr.bf16.mxu0 %v2652
      %3181 = vmatpush1.bf16.msra.mxu0 %v2651
      %3182 = vmatprep.subr.bf16.mxu0 %v2660
      %3183 = vmatpush1.bf16.msra.mxu0 %v2659
      %3184 = vmatprep.subr.bf16.mxu0 %v2668
      %3185 = vmatpush1.bf16.msra.mxu0 %v2667
      %3186 = vmatprep.subr.bf16.mxu0 %v2676
      %3187 = vmatpush1.bf16.msra.mxu0 %v2675
      %3188 = vmatprep.subr.bf16.mxu0 %v2684
      %3189 = vmatpush1.bf16.msra.mxu0 %v2683
      %3190 = vmatprep.subr.bf16.mxu0 %v2692
      %3191 = vmatpush1.bf16.msra.mxu0 %v2691
      %3192 = vmatprep.subr.bf16.mxu0 %v2700
      %3193 = vmatpush1.bf16.msra.mxu0 %v2699
      %3194 = vmatprep.subr.bf16.mxu0 %v2708
      %3195 = vmatpush1.bf16.msra.mxu0 %v2707
      %3196 = vmatprep.subr.bf16.mxu0 %v2716
      %3197 = vmatpush1.bf16.msra.mxu0 %v2715
      %3198 = vmatprep.subr.bf16.mxu0 %v2724
      %3199 = vmatpush1.bf16.msra.mxu0 %v2723
      %3200 = vmatprep.subr.bf16.mxu0 %v2732
      %3201 = vmatpush1.bf16.msra.mxu0 %v2731
      %3202 = vmatprep.subr.bf16.mxu0 %v2740
      %3203 = vmatpush1.bf16.msra.mxu0 %v2739
      %3204 = vmatprep.subr.bf16.mxu0 %v2748
      %3205 = vmatpush1.bf16.msra.mxu0 %v2747
      %3206 = vmatprep.subr.bf16.mxu0 %v2756
      %3207 = vmatpush1.bf16.msra.mxu0 %v2755
      %3208 = vmatprep.mubr.bf16.mxu0 %v1434
      %3209 = vmatmul.mubr.bf16.gmra.mrb[0].mxu0 %v1433
      %v3210 = vpop.f32.mrb[0].mxu0
      %v3211 = vadd.f32 %v3158, %v3210
      %v3212 = vpop.f32.mrb[0].mxu0
      %v3213 = vadd.f32 %v3160, %v3212
      %v3214 = vpop.f32.mrb[0].mxu0
      %v3215 = vadd.f32 %v3162, %v3214
      %v3216 = vpop.f32.mrb[0].mxu0
      %v3217 = vadd.f32 %v3164, %v3216
      %3218 = vmatprep.mubr.bf16.mxu0 %v1438
      %3219 = vmatmul.mubr.bf16.gmra.mrb[0].mxu0 %v1437
      %v3220 = vpop.f32.mrb[0].mxu0
      %v3221 = vadd.f32 %v3168, %v3220
      %v3222 = vpop.f32.mrb[0].mxu0
      %v3223 = vadd.f32 %v3170, %v3222
      %v3224 = vpop.f32.mrb[0].mxu0
      %v3225 = vadd.f32 %v3172, %v3224
      %v3226 = vpop.f32.mrb[0].mxu0
      %v3227 = vadd.f32 %v3174, %v3226
      %3228 = vdwg.mxu0
      %3229 = vmatprep.subr.bf16.mxu0 %v2510
      %3230 = vmatpush1.bf16.msra.mxu0 %v2509
      %3231 = vmatprep.subr.bf16.mxu0 %v2518
      %3232 = vmatpush1.bf16.msra.mxu0 %v2517
      %3233 = vmatprep.subr.bf16.mxu0 %v2526
      %3234 = vmatpush1.bf16.msra.mxu0 %v2525
      %3235 = vmatprep.subr.bf16.mxu0 %v2534
      %3236 = vmatpush1.bf16.msra.mxu0 %v2533
      %3237 = vmatprep.subr.bf16.mxu0 %v2542
      %3238 = vmatpush1.bf16.msra.mxu0 %v2541
      %3239 = vmatprep.subr.bf16.mxu0 %v2550
      %3240 = vmatpush1.bf16.msra.mxu0 %v2549
      %3241 = vmatprep.subr.bf16.mxu0 %v2558
      %3242 = vmatpush1.bf16.msra.mxu0 %v2557
      %3243 = vmatprep.subr.bf16.mxu0 %v2566
      %3244 = vmatpush1.bf16.msra.mxu0 %v2565
      %3245 = vmatprep.subr.bf16.mxu0 %v2574
      %3246 = vmatpush1.bf16.msra.mxu0 %v2573
      %3247 = vmatprep.subr.bf16.mxu0 %v2582
      %3248 = vmatpush1.bf16.msra.mxu0 %v2581
      %3249 = vmatprep.subr.bf16.mxu0 %v2590
      %3250 = vmatpush1.bf16.msra.mxu0 %v2589
      %3251 = vmatprep.subr.bf16.mxu0 %v2598
      %3252 = vmatpush1.bf16.msra.mxu0 %v2597
      %3253 = vmatprep.subr.bf16.mxu0 %v2606
      %3254 = vmatpush1.bf16.msra.mxu0 %v2605
      %3255 = vmatprep.subr.bf16.mxu0 %v2614
      %3256 = vmatpush1.bf16.msra.mxu0 %v2613
      %3257 = vmatprep.subr.bf16.mxu0 %v2622
      %3258 = vmatpush1.bf16.msra.mxu0 %v2621
      %3259 = vmatprep.subr.bf16.mxu0 %v2630
      %3260 = vmatpush1.bf16.msra.mxu0 %v2629
      %3261 = vmatprep.mubr.bf16.mxu0 %v1432
      %3262 = vmatmul.mubr.bf16.gmra.mrb[0].mxu0 %v1431
      %v3263 = vpop.f32.mrb[0].mxu0
      %v3264 = vadd.f32 %v1716, %v3263
      %v3265 = vpop.f32.mrb[0].mxu0
      %v3266 = vadd.f32 %v1720, %v3265
      %v3267 = vpop.f32.mrb[0].mxu0
      %v3268 = vadd.f32 %v1716, %v3267
      %v3269 = vpop.f32.mrb[0].mxu0
      %v3270 = vadd.f32 %v1720, %v3269
      %3271 = vmatprep.mubr.bf16.mxu0 %v1436
      %3272 = vmatmul.mubr.bf16.gmra.mrb[0].mxu0 %v1435
      %v3273 = vpop.f32.mrb[0].mxu0
      %v3274 = vadd.f32 %v1716, %v3273
      %v3275 = vpop.f32.mrb[0].mxu0
      %v3276 = vadd.f32 %v1720, %v3275
      %v3277 = vpop.f32.mrb[0].mxu0
      %v3278 = vadd.f32 %v1716, %v3277
      %v3279 = vpop.f32.mrb[0].mxu0
      %v3280 = vadd.f32 %v1720, %v3279
      %3281 = vdwg.mxu0
      %3282 = vmatprep.subr.bf16.mxu0 %v2638
      %3283 = vmatpush1.bf16.msra.mxu0 %v2637
      %3284 = vmatprep.subr.bf16.mxu0 %v2646
      %3285 = vmatpush1.bf16.msra.mxu0 %v2645
      %3286 = vmatprep.subr.bf16.mxu0 %v2654
      %3287 = vmatpush1.bf16.msra.mxu0 %v2653
      %3288 = vmatprep.subr.bf16.mxu0 %v2662
      %3289 = vmatpush1.bf16.msra.mxu0 %v2661
      %3290 = vmatprep.subr.bf16.mxu0 %v2670
      %3291 = vmatpush1.bf16.msra.mxu0 %v2669
      %3292 = vmatprep.subr.bf16.mxu0 %v2678
      %3293 = vmatpush1.bf16.msra.mxu0 %v2677
      %3294 = vmatprep.subr.bf16.mxu0 %v2686
      %3295 = vmatpush1.bf16.msra.mxu0 %v2685
      %3296 = vmatprep.subr.bf16.mxu0 %v2694
      %3297 = vmatpush1.bf16.msra.mxu0 %v2693
      %3298 = vmatprep.subr.bf16.mxu0 %v2702
      %3299 = vmatpush1.bf16.msra.mxu0 %v2701
      %3300 = vmatprep.subr.bf16.mxu0 %v2710
      %3301 = vmatpush1.bf16.msra.mxu0 %v2709
      %3302 = vmatprep.subr.bf16.mxu0 %v2718
      %3303 = vmatpush1.bf16.msra.mxu0 %v2717
      %3304 = vmatprep.subr.bf16.mxu0 %v2726
      %3305 = vmatpush1.bf16.msra.mxu0 %v2725
      %3306 = vmatprep.subr.bf16.mxu0 %v2734
      %3307 = vmatpush1.bf16.msra.mxu0 %v2733
      %3308 = vmatprep.subr.bf16.mxu0 %v2742
      %3309 = vmatpush1.bf16.msra.mxu0 %v2741
      %3310 = vmatprep.subr.bf16.mxu0 %v2750
      %3311 = vmatpush1.bf16.msra.mxu0 %v2749
      %3312 = vmatprep.subr.bf16.mxu0 %v2758
      %3313 = vmatpush1.bf16.msra.mxu0 %v2757
      %3314 = vmatprep.mubr.bf16.mxu0 %v1434
      %3315 = vmatmul.mubr.bf16.gmra.mrb[0].mxu0 %v1433
      %v3316 = vpop.f32.mrb[0].mxu0
      %v3317 = vadd.f32 %v3264, %v3316
      %v3318 = vpop.f32.mrb[0].mxu0
      %v3319 = vadd.f32 %v3266, %v3318
      %v3320 = vpop.f32.mrb[0].mxu0
      %v3321 = vadd.f32 %v3268, %v3320
      %v3322 = vpop.f32.mrb[0].mxu0
      %v3323 = vadd.f32 %v3270, %v3322
      %3324 = vmatprep.mubr.bf16.mxu0 %v1438
      %3325 = vmatmul.mubr.bf16.gmra.mrb[0].mxu0 %v1437
      %v3326 = vpop.f32.mrb[0].mxu0
      %v3327 = vadd.f32 %v3274, %v3326
      %v3328 = vpop.f32.mrb[0].mxu0
      %v3329 = vadd.f32 %v3276, %v3328
      %v3330 = vpop.f32.mrb[0].mxu0
      %v3331 = vadd.f32 %v3278, %v3330
      %v3332 = vpop.f32.mrb[0].mxu0
      %v3333 = vadd.f32 %v3280, %v3332
      %3334 = vdwg.mxu0
      %3335 = vmatprep.subr.bf16.mxu0 %v2512
      %3336 = vmatpush1.bf16.msra.mxu0 %v2511
      %3337 = vmatprep.subr.bf16.mxu0 %v2520
      %3338 = vmatpush1.bf16.msra.mxu0 %v2519
      %3339 = vmatprep.subr.bf16.mxu0 %v2528
      %3340 = vmatpush1.bf16.msra.mxu0 %v2527
      %3341 = vmatprep.subr.bf16.mxu0 %v2536
      %3342 = vmatpush1.bf16.msra.mxu0 %v2535
      %3343 = vmatprep.subr.bf16.mxu0 %v2544
      %3344 = vmatpush1.bf16.msra.mxu0 %v2543
      %3345 = vmatprep.subr.bf16.mxu0 %v2552
      %3346 = vmatpush1.bf16.msra.mxu0 %v2551
      %3347 = vmatprep.subr.bf16.mxu0 %v2560
      %3348 = vmatpush1.bf16.msra.mxu0 %v2559
      %3349 = vmatprep.subr.bf16.mxu0 %v2568
      %3350 = vmatpush1.bf16.msra.mxu0 %v2567
      %3351 = vmatprep.subr.bf16.mxu0 %v2576
      %3352 = vmatpush1.bf16.msra.mxu0 %v2575
      %3353 = vmatprep.subr.bf16.mxu0 %v2584
      %3354 = vmatpush1.bf16.msra.mxu0 %v2583
      %3355 = vmatprep.subr.bf16.mxu0 %v2592
      %3356 = vmatpush1.bf16.msra.mxu0 %v2591
      %3357 = vmatprep.subr.bf16.mxu0 %v2600
      %3358 = vmatpush1.bf16.msra.mxu0 %v2599
      %3359 = vmatprep.subr.bf16.mxu0 %v2608
      %3360 = vmatpush1.bf16.msra.mxu0 %v2607
      %3361 = vmatprep.subr.bf16.mxu0 %v2616
      %3362 = vmatpush1.bf16.msra.mxu0 %v2615
      %3363 = vmatprep.subr.bf16.mxu0 %v2624
      %3364 = vmatpush1.bf16.msra.mxu0 %v2623
      %3365 = vmatprep.subr.bf16.mxu0 %v2632
      %3366 = vmatpush1.bf16.msra.mxu0 %v2631
      %3367 = vmatprep.mubr.bf16.mxu0 %v1432
      %3368 = vmatmul.mubr.bf16.gmra.mrb[0].mxu0 %v1431
      %v3369 = vpop.f32.mrb[0].mxu0
      %v3370 = vadd.f32 %v1724, %v3369
      %v3371 = vpop.f32.mrb[0].mxu0
      %v3372 = vadd.f32 %v1728, %v3371
      %v3373 = vpop.f32.mrb[0].mxu0
      %v3374 = vadd.f32 %v1724, %v3373
      %v3375 = vpop.f32.mrb[0].mxu0
      %v3376 = vadd.f32 %v1728, %v3375
      %3377 = vmatprep.mubr.bf16.mxu0 %v1436
      %3378 = vmatmul.mubr.bf16.gmra.mrb[0].mxu0 %v1435
      %v3379 = vpop.f32.mrb[0].mxu0
      %v3380 = vadd.f32 %v1724, %v3379
      %v3381 = vpop.f32.mrb[0].mxu0
      %v3382 = vadd.f32 %v1728, %v3381
      %v3383 = vpop.f32.mrb[0].mxu0
      %v3384 = vadd.f32 %v1724, %v3383
      %v3385 = vpop.f32.mrb[0].mxu0
      %v3386 = vadd.f32 %v1728, %v3385
      %3387 = vdwg.mxu0
      %3388 = vmatprep.subr.bf16.mxu0 %v2640
      %3389 = vmatpush1.bf16.msra.mxu0 %v2639
      %3390 = vmatprep.subr.bf16.mxu0 %v2648
      %3391 = vmatpush1.bf16.msra.mxu0 %v2647
      %3392 = vmatprep.subr.bf16.mxu0 %v2656
      %3393 = vmatpush1.bf16.msra.mxu0 %v2655
      %3394 = vmatprep.subr.bf16.mxu0 %v2664
      %3395 = vmatpush1.bf16.msra.mxu0 %v2663
      %3396 = vmatprep.subr.bf16.mxu0 %v2672
      %3397 = vmatpush1.bf16.msra.mxu0 %v2671
      %3398 = vmatprep.subr.bf16.mxu0 %v2680
      %3399 = vmatpush1.bf16.msra.mxu0 %v2679
      %3400 = vmatprep.subr.bf16.mxu0 %v2688
      %3401 = vmatpush1.bf16.msra.mxu0 %v2687
      %3402 = vmatprep.subr.bf16.mxu0 %v2696
      %3403 = vmatpush1.bf16.msra.mxu0 %v2695
      %3404 = vmatprep.subr.bf16.mxu0 %v2704
      %3405 = vmatpush1.bf16.msra.mxu0 %v2703
      %3406 = vmatprep.subr.bf16.mxu0 %v2712
      %3407 = vmatpush1.bf16.msra.mxu0 %v2711
      %3408 = vmatprep.subr.bf16.mxu0 %v2720
      %3409 = vmatpush1.bf16.msra.mxu0 %v2719
      %3410 = vmatprep.subr.bf16.mxu0 %v2728
      %3411 = vmatpush1.bf16.msra.mxu0 %v2727
      %3412 = vmatprep.subr.bf16.mxu0 %v2736
      %3413 = vmatpush1.bf16.msra.mxu0 %v2735
      %3414 = vmatprep.subr.bf16.mxu0 %v2744
      %3415 = vmatpush1.bf16.msra.mxu0 %v2743
      %3416 = vmatprep.subr.bf16.mxu0 %v2752
      %3417 = vmatpush1.bf16.msra.mxu0 %v2751
      %3418 = vmatprep.subr.bf16.mxu0 %v2760
      %3419 = vmatpush1.bf16.msra.mxu0 %v2759
      %3420 = vmatprep.mubr.bf16.mxu0 %v1434
      %3421 = vmatmul.mubr.bf16.gmra.mrb[0].mxu0 %v1433
      %v3422 = vpop.f32.mrb[0].mxu0
      %v3423 = vadd.f32 %v3370, %v3422
      %v3424 = vpop.f32.mrb[0].mxu0
      %v3425 = vadd.f32 %v3372, %v3424
      %v3426 = vpop.f32.mrb[0].mxu0
      %v3427 = vadd.f32 %v3374, %v3426
      %v3428 = vpop.f32.mrb[0].mxu0
      %v3429 = vadd.f32 %v3376, %v3428
      %3430 = vmatprep.mubr.bf16.mxu0 %v1438
      %3431 = vmatmul.mubr.bf16.gmra.mrb[0].mxu0 %v1437
      %v3432 = vpop.f32.mrb[0].mxu0
      %v3433 = vadd.f32 %v3380, %v3432
      %v3434 = vpop.f32.mrb[0].mxu0
      %v3435 = vadd.f32 %v3382, %v3434
      %v3436 = vpop.f32.mrb[0].mxu0
      %v3437 = vadd.f32 %v3384, %v3436
      %v3438 = vpop.f32.mrb[0].mxu0
      %v3439 = vadd.f32 %v3386, %v3438
      %3440 = vdwg.mxu0
      %s3441 = smul.u32 %s26, 2
      %s3442 = sadd.s32 %s3441, %s27
      %s3443 = smul.u32 %s3442, 32
      %v3444 = vlaneseq
      %v3445 = vshrl.u32 %v3444, 7
      %v3446 = vadd.s32 %v3445, 8
      %v3447 = vadd.s32 %v3445, 16
      %v3448 = vadd.s32 %v3445, 24
      %v3449 = vstv %s3443
      %v3450 = vadd.s32 %v3449, %v3445
      %v3451 = vadd.s32 %v3449, %v3446
      %v3452 = vadd.s32 %v3449, %v3447
      %v3453 = vadd.s32 %v3449, %v3448
      %vm3454 = vcmp.lt.s32.totalorder %v3450, 72
      %vm3455 = vcmp.lt.s32.totalorder %v3451, 72
      %vm3456 = vcmp.lt.s32.totalorder %v3452, 72
      %vm3457 = vcmp.lt.s32.totalorder %v3453, 72
      %v3458 = vsel %vm3454, 1, 0
      %v3459 = vsel %vm3455, 1, 0
      %v3460 = vsel %vm3456, 1, 0
      %v3461 = vsel %vm3457, 1, 0
      %vm3462 = vcmp.eq.s32.totalorder %v3458, 1
      %vm3463 = vcmp.eq.s32.totalorder %v3459, 1
      %vm3464 = vcmp.eq.s32.totalorder %v3460, 1
      %vm3465 = vcmp.eq.s32.totalorder %v3461, 1
      %v3466 = vsel %vm3462, %v3105, -3e+38
      %v3467 = vsel %vm3462, %v3107, -3e+38
      %v3468 = vsel %vm3462, %v3211, -3e+38
      %v3469 = vsel %vm3462, %v3213, -3e+38
      %v3470 = vsel %vm3462, %v3317, -3e+38
      %v3471 = vsel %vm3462, %v3319, -3e+38
      %v3472 = vsel %vm3462, %v3423, -3e+38
      %v3473 = vsel %vm3462, %v3425, -3e+38
      %v3474 = vsel %vm3463, %v3109, -3e+38
      %v3475 = vsel %vm3463, %v3111, -3e+38
      %v3476 = vsel %vm3463, %v3215, -3e+38
      %v3477 = vsel %vm3463, %v3217, -3e+38
      %v3478 = vsel %vm3463, %v3321, -3e+38
      %v3479 = vsel %vm3463, %v3323, -3e+38
      %v3480 = vsel %vm3463, %v3427, -3e+38
      %v3481 = vsel %vm3463, %v3429, -3e+38
      %v3482 = vsel %vm3464, %v3115, -3e+38
      %v3483 = vsel %vm3464, %v3117, -3e+38
      %v3484 = vsel %vm3464, %v3221, -3e+38
      %v3485 = vsel %vm3464, %v3223, -3e+38
      %v3486 = vsel %vm3464, %v3327, -3e+38
      %v3487 = vsel %vm3464, %v3329, -3e+38
      %v3488 = vsel %vm3464, %v3433, -3e+38
      %v3489 = vsel %vm3464, %v3435, -3e+38
      %v3490 = vsel %vm3465, %v3119, -3e+38
      %v3491 = vsel %vm3465, %v3121, -3e+38
      %v3492 = vsel %vm3465, %v3225, -3e+38
      %v3493 = vsel %vm3465, %v3227, -3e+38
      %v3494 = vsel %vm3465, %v3331, -3e+38
      %v3495 = vsel %vm3465, %v3333, -3e+38
      %v3496 = vsel %vm3465, %v3437, -3e+38
      %v3497 = vsel %vm3465, %v3439, -3e+38
      %v3498 = vmax.f32 %v3466, %v3474
      %v3499 = vmax.f32 %v3498, %v3482
      %v3500 = vmax.f32 %v3499, %v3490
      %v3501 = vrot.slane %v3500, 4
      %v3502 = vmax.f32 %v3500, %v3501
      %v3503 = vrot.slane %v3502, 2
      %v3504 = vmax.f32 %v3502, %v3503
      %v3505 = vrot.slane %v3504, 1
      %v3506 = vmax.f32 %v3504, %v3505
      %v3507 = vmax.f32 %v3467, %v3475
      %v3508 = vmax.f32 %v3507, %v3483
      %v3509 = vmax.f32 %v3508, %v3491
      %v3510 = vrot.slane %v3509, 4
      %v3511 = vmax.f32 %v3509, %v3510
      %v3512 = vrot.slane %v3511, 2
      %v3513 = vmax.f32 %v3511, %v3512
      %v3514 = vrot.slane %v3513, 1
      %v3515 = vmax.f32 %v3513, %v3514
      %v3516 = vmax.f32 %v3468, %v3476
      %v3517 = vmax.f32 %v3516, %v3484
      %v3518 = vmax.f32 %v3517, %v3492
      %v3519 = vrot.slane %v3518, 4
      %v3520 = vmax.f32 %v3518, %v3519
      %v3521 = vrot.slane %v3520, 2
      %v3522 = vmax.f32 %v3520, %v3521
      %v3523 = vrot.slane %v3522, 1
      %v3524 = vmax.f32 %v3522, %v3523
      %v3525 = vmax.f32 %v3469, %v3477
      %v3526 = vmax.f32 %v3525, %v3485
      %v3527 = vmax.f32 %v3526, %v3493
      %v3528 = vrot.slane %v3527, 4
      %v3529 = vmax.f32 %v3527, %v3528
      %v3530 = vrot.slane %v3529, 2
      %v3531 = vmax.f32 %v3529, %v3530
      %v3532 = vrot.slane %v3531, 1
      %v3533 = vmax.f32 %v3531, %v3532
      %v3534 = vmax.f32 %v3470, %v3478
      %v3535 = vmax.f32 %v3534, %v3486
      %v3536 = vmax.f32 %v3535, %v3494
      %v3537 = vrot.slane %v3536, 4
      %v3538 = vmax.f32 %v3536, %v3537
      %v3539 = vrot.slane %v3538, 2
      %v3540 = vmax.f32 %v3538, %v3539
      %v3541 = vrot.slane %v3540, 1
      %v3542 = vmax.f32 %v3540, %v3541
      %v3543 = vmax.f32 %v3471, %v3479
      %v3544 = vmax.f32 %v3543, %v3487
      %v3545 = vmax.f32 %v3544, %v3495
      %v3546 = vrot.slane %v3545, 4
      %v3547 = vmax.f32 %v3545, %v3546
      %v3548 = vrot.slane %v3547, 2
      %v3549 = vmax.f32 %v3547, %v3548
      %v3550 = vrot.slane %v3549, 1
      %v3551 = vmax.f32 %v3549, %v3550
      %v3552 = vmax.f32 %v3472, %v3480
      %v3553 = vmax.f32 %v3552, %v3488
      %v3554 = vmax.f32 %v3553, %v3496
      %v3555 = vrot.slane %v3554, 4
      %v3556 = vmax.f32 %v3554, %v3555
      %v3557 = vrot.slane %v3556, 2
      %v3558 = vmax.f32 %v3556, %v3557
      %v3559 = vrot.slane %v3558, 1
      %v3560 = vmax.f32 %v3558, %v3559
      %v3561 = vmax.f32 %v3473, %v3481
      %v3562 = vmax.f32 %v3561, %v3489
      %v3563 = vmax.f32 %v3562, %v3497
      %v3564 = vrot.slane %v3563, 4
      %v3565 = vmax.f32 %v3563, %v3564
      %v3566 = vrot.slane %v3565, 2
      %v3567 = vmax.f32 %v3565, %v3566
      %v3568 = vrot.slane %v3567, 1
      %v3569 = vmax.f32 %v3567, %v3568
      %v3570 = vld [vmem:[%s440] sm:$0xff]
      %v3579 = vcombine.low %v3506, %v3515
      %v3580 = vcombine.low %v3524, %v3533
      %v3581 = vcombine.low %v3542, %v3551
      %v3582 = vcombine.low %v3560, %v3569
      %v3584 = vunpack.c.l.s4 1966171168
      %v3585 = vunpack.c.0.s8 %v3584
      %v3586 = vlaneseq
      %v3587 = vshrl.u32 %v3586, 7
      %v3588 = vsub.s32 %v3585, %v3587
      %v3589 = vrot.slane %v3579, %v3588
      %v3591 = vunpack.c.l.s4 1966171168
      %v3592 = vunpack.c.0.s8 %v3591
      %v3593 = vlaneseq
      %v3594 = vshrl.u32 %v3593, 7
      %v3595 = vsub.s32 %v3592, %v3594
      %v3596 = vrot.slane %v3580, %v3595
      %v3598 = vunpack.c.l.s4 1966171168
      %v3599 = vunpack.c.0.s8 %v3598
      %v3600 = vlaneseq
      %v3601 = vshrl.u32 %v3600, 7
      %v3602 = vsub.s32 %v3599, %v3601
      %v3603 = vrot.slane %v3581, %v3602
      %v3605 = vunpack.c.l.s4 1966171168
      %v3606 = vunpack.c.0.s8 %v3605
      %v3607 = vlaneseq
      %v3608 = vshrl.u32 %v3607, 7
      %v3609 = vsub.s32 %v3606, %v3608
      %v3610 = vrot.slane %v3582, %v3609
      %v3611 = vcombine.low %v3589, %v3596
      %v3612 = vcombine.low %v3603, %v3610
      %v3614 = vunpack.c.l.s4 1966171168
      %v3615 = vunpack.c.0.s8 %v3614
      %v3616 = vlaneseq
      %v3617 = vshrl.u32 %v3616, 7
      %v3618 = vsub.s32 %v3615, %v3617
      %v3619 = vrot.slane %v3611, %v3618
      %v3621 = vunpack.c.l.s4 1966171168
      %v3622 = vunpack.c.0.s8 %v3621
      %v3623 = vlaneseq
      %v3624 = vshrl.u32 %v3623, 7
      %v3625 = vsub.s32 %v3622, %v3624
      %v3626 = vrot.slane %v3612, %v3625
      %v3627 = vcombine.low %v3619, %v3626
      %v3629 = vmax.f32 %v3570, %v3627
      %3630 = vst [vmem:[%s440] sm:$0xff] %v3629
      %s3631 = smul.u32 %s25, 2
      %s3632 = sadd.s32 %s3631, %s26
      %p3633 = scmp.lt.s32.totalorder %s3632, 3
      %s3634 = scalar_select %p3633, %s3632, 3
      %s3635 = smul.addr %s3634, 8
      %s3636 = scalar_lea.vmem %s9, %s3635
      // Predicated region
      $region61: #{_lambda_.1} parent=55 // pred_check
        %p3637 = pneg %p272
      $region62: #{_lambda_.1} parent=55 // pred_check_branch
        %3639 = sbr.rel (%p3637) target = $region64
      $region63: #{_lambda_.1} parent=55 // pred_region
        %s3640 = smul.u32 %s25, 2
        %s3641 = sadd.s32 %s3640, %s26
      $region64: #{_lambda_.1} parent=55 // pred_fallthru
        _
    $region56: #{_lambda_.1} parent=5 // pred_fallthru
      _
    %p3642 = scmp.le.s32.totalorder 2, %s15
    // Predicated region
    $region65: #{_lambda_.1} parent=5 // pred_check
      %p3643 = pneg %p3642
    $region66: #{_lambda_.1} parent=5 // pred_check_branch
      %3645 = sbr.rel (%p3643) target = $region68
    $region67: #{_lambda_.1} parent=5 // pred_region
      %s3646 = ssub.s32 %s15, 2
      // Predicated region
      $region69: #{_lambda_.1} parent=67 // pred_check
        %p3647 = pneg %p278
      $region70: #{_lambda_.1} parent=67 // pred_check_branch
        %3649 = sbr.rel (%p3647) target = $region72
      $region71: #{_lambda_.1} parent=67 // pred_region
        %s3650 = smul.u32 %s28, 2
        %s3651 = sadd.s32 %s3650, %s29
        %p3652 = scmp.lt.s32.totalorder %s3651, 3
        %s3653 = scalar_select %p3652, %s3651, 3
        %s3654 = smul.addr %s3653, 8
        %s3655 = scalar_lea.vmem %s9, %s3654
      $region72: #{_lambda_.1} parent=67 // pred_fallthru
        _
    $region68: #{_lambda_.1} parent=5 // pred_fallthru
      _
  $region6: #{_lambda_.1} parent=0 // loop_footer
    %s19 = sadd.s32 1, %s15
  $region7: #{_lambda_.1} parent=0 // loop_footer_branch
    %14 = sbr.rel target = $region3
  $region8: #{_lambda_.1} parent=0 // loop_exit
    _

</llo_original>
